<compile_context>
chip_gen: v5e
topology: v5e:2x2
jax: 0.10.0
libtpu: 0.0.40
codegen_flags: <defaults>
</compile_context>

<pallas_src>
import functools
import math

import jax
import jax.numpy as jnp
from jax.experimental import pallas as pl
from jax.experimental.pallas import tpu as pltpu


# ---------------------------------------------------------------------------
# helpers
# ---------------------------------------------------------------------------

def _mish(x):
    # x * tanh(softplus(x)), numerically stable softplus.
    sp = jnp.maximum(x, 0.0) + jnp.log(1.0 + jnp.exp(-jnp.abs(x)))
    return x * jnp.tanh(sp)


def _build_rel_matrix(rel_w, rel_h, size):
    """Input-independent relative-position matrix (parameter-only transform).

    M[d, x*S+y, u*S+w] = rel_w[w - y + S - 1, d] + rel_h[u - x + S - 1, d]
    so that for the scaled query q:  rel_logits[p, c] = sum_d q[p, d] * M[d, p, c]
    reproduces AttentionAugmentation2d.relative_logits (incl. rel_to_abs).
    """
    S = size
    idx = jnp.arange(S)
    rel_idx = idx[None, :] - idx[:, None] + S - 1            # [a, b] -> b - a + S - 1
    rw_abs = rel_w[rel_idx]                                  # (y, w, D)
    rh_abs = rel_h[rel_idx]                                  # (x, u, D)
    M = rw_abs[None, :, None, :, :] + rh_abs[:, None, :, None, :]   # (x, y, u, w, D)
    D = rel_w.shape[-1]
    M = M.reshape(S * S, S * S, D)
    return jnp.transpose(M, (2, 0, 1)).astype(jnp.float32)          # (D, L, L)


# ---------------------------------------------------------------------------
# kernel 1: fused conv trunk
# ---------------------------------------------------------------------------

def _trunk_kernel(x_ref, w_in_ref, b_in_ref, s1_ref, t1_ref,
                  w_dw_ref, b_dw_ref, w_aug_ref, b_aug_ref,
                  w_qkv_ref, b_qkv_ref,
                  xd_ref, a_ref, qkv_ref,
                  xpad_ref, *, H, W, K, pad_top, pad_left):
    Ce = xd_ref.shape[-1]
    Ca = a_ref.shape[-1]
    HW = H * W

    s1 = s1_ref[...]
    t1 = t1_ref[...]

    # ---- conv_in (1x1) + bn1 + mish -------------------------------------
    x = x_ref[0]                                               # (HW, Cin)
    h = jnp.dot(x, w_in_ref[...], preferred_element_type=jnp.float32) + b_in_ref[...]
    h = _mish(h * s1 + t1)                                     # (HW, Ce)

    # ---- depthwise KxK conv (halo in VMEM scratch) + bn1 + mish ----------
    xpad_ref[...] = jnp.zeros(xpad_ref.shape, xpad_ref.dtype)
    xpad_ref[pad_top:pad_top + H, pad_left:pad_left + W, :] = h.reshape(H, W, Ce)
    acc = jnp.zeros((H, W, Ce), jnp.float32)
    for kh in range(K):
        for kw in range(K):
            t = kh * K + kw
            acc = acc + xpad_ref[kh:kh + H, kw:kw + W, :] * w_dw_ref[t:t + 1, :]
    xd = _mish((acc.reshape(HW, Ce) + b_dw_ref[...]) * s1 + t1)  # (HW, Ce)
    xd_ref[0] = xd.astype(xd_ref.dtype)

    # ---- aug_conv_out: dense KxK conv on padded xd (tap-accumulated) -----
    xpad_ref[pad_top:pad_top + H, pad_left:pad_left + W, :] = xd.reshape(H, W, Ce)
    a_acc = jnp.broadcast_to(b_aug_ref[...], (HW, Ca)).astype(jnp.float32)
    for kh in range(K):
        for kw in range(K):
            t = kh * K + kw
            patch = xpad_ref[kh:kh + H, kw:kw + W, :].reshape(HW, Ce)
            a_acc = a_acc + jnp.dot(patch, w_aug_ref[t],
                                    preferred_element_type=jnp.float32)
    a_ref[0] = a_acc.astype(a_ref.dtype)

    # ---- qkv_conv (1x1) ---------------------------------------------------
    qkv = jnp.dot(xd, w_qkv_ref[...], preferred_element_type=jnp.float32) + b_qkv_ref[...]
    qkv_ref[0] = qkv.astype(qkv_ref.dtype)


def trunk_forward(x_flat, w_in, b_in, s1, t1, w_dw, b_dw, w_aug, b_aug,
                  w_qkv, b_qkv, *, H, W, K, pad_top, pad_left):
    N, HW, Cin = x_flat.shape
    Ce = w_in.shape[1]
    Ca = w_aug.shape[-1]
    Cq = w_qkv.shape[1]
    Hp, Wp = H + K - 1, W + K - 1

    kernel = functools.partial(_trunk_kernel, H=H, W=W, K=K,
                               pad_top=pad_top, pad_left=pad_left)
    return pl.pallas_call(
        kernel,
        out_shape=(
            jax.ShapeDtypeStruct((N, HW, Ce), jnp.float32),
            jax.ShapeDtypeStruct((N, HW, Ca), jnp.float32),
            jax.ShapeDtypeStruct((N, HW, Cq), jnp.float32),
        ),
        grid_spec=pltpu.PrefetchScalarGridSpec(
            num_scalar_prefetch=0,
            grid=(N,),
            in_specs=[
                pl.BlockSpec((1, HW, Cin), lambda n: (n, 0, 0)),
                pl.BlockSpec((Cin, Ce), lambda n: (0, 0)),
                pl.BlockSpec((1, Ce), lambda n: (0, 0)),
                pl.BlockSpec((1, Ce), lambda n: (0, 0)),
                pl.BlockSpec((1, Ce), lambda n: (0, 0)),
                pl.BlockSpec((K * K, Ce), lambda n: (0, 0)),
                pl.BlockSpec((1, Ce), lambda n: (0, 0)),
                pl.BlockSpec((K * K, Ce, Ca), lambda n: (0, 0, 0)),
                pl.BlockSpec((1, Ca), lambda n: (0, 0)),
                pl.BlockSpec((Ce, Cq), lambda n: (0, 0)),
                pl.BlockSpec((1, Cq), lambda n: (0, 0)),
            ],
            out_specs=(
                pl.BlockSpec((1, HW, Ce), lambda n: (n, 0, 0)),
                pl.BlockSpec((1, HW, Ca), lambda n: (n, 0, 0)),
                pl.BlockSpec((1, HW, Cq), lambda n: (n, 0, 0)),
            ),
            scratch_shapes=[pltpu.VMEM((Hp, Wp, Ce), jnp.float32)],
        ),
        compiler_params=pltpu.CompilerParams(dimension_semantics=("parallel",)),
    )(x_flat, w_in, b_in, s1, t1, w_dw, b_dw, w_aug, b_aug, w_qkv, b_qkv)


# ---------------------------------------------------------------------------
# kernel 2: attention augmentation (per batch, heads unrolled)
# ---------------------------------------------------------------------------

def _attn_kernel(qkv_ref, m_ref, out_ref, *, nh, dk, dv):
    L = qkv_ref.shape[1]
    dkh = dk // nh
    dvh = dv // nh
    scale = float(dkh) ** (-0.5)

    qkv = qkv_ref[0]                                   # (L, 2dk+dv)
    ms = [m_ref[d] for d in range(dkh)]                # dkh x (L, L)

    for h in range(nh):
        q = qkv[:, h * dkh:(h + 1) * dkh] * scale              # (L, dkh)
        k = qkv[:, dk + h * dkh:dk + (h + 1) * dkh]            # (L, dkh)
        v = qkv[:, 2 * dk + h * dvh:2 * dk + (h + 1) * dvh]    # (L, dvh)

        # logits[i, j] = k_i . q_j        (matches torch: K^T Q)
        logits = jax.lax.dot_general(
            k, q, (((1,), (1,)), ((), ())),
            preferred_element_type=jnp.float32)                # (L, L)

        # relative-position logits: rel[p, c] = sum_d q[p, d] * M[d, p, c]
        rel = jnp.zeros((L, L), jnp.float32)
        for d in range(dkh):
            rel = rel + q[:, d:d + 1] * ms[d]
        logits = logits + rel

        mx = jnp.max(logits, axis=-1, keepdims=True)
        e = jnp.exp(logits - mx)
        wgt = e / jnp.sum(e, axis=-1, keepdims=True)

        # attn[c, j] = sum_i v[i, c] * wgt[i, j]   (matches torch: V W)
        attn = jax.lax.dot_general(
            v, wgt, (((0,), (0,)), ((), ())),
            preferred_element_type=jnp.float32)                # (dvh, L)
        out_ref[0, h] = attn.astype(out_ref.dtype)


def attention_forward(qkv_flat, M, *, nh, dk, dv):
    N, L, Cq = qkv_flat.shape
    dkh = dk // nh
    dvh = dv // nh
    kernel = functools.partial(_attn_kernel, nh=nh, dk=dk, dv=dv)
    return pl.pallas_call(
        kernel,
        out_shape=jax.ShapeDtypeStruct((N, nh, dvh, L), jnp.float32),
        grid_spec=pltpu.PrefetchScalarGridSpec(
            num_scalar_prefetch=0,
            grid=(N,),
            in_specs=[
                pl.BlockSpec((1, L, Cq), lambda n: (n, 0, 0)),
                pl.BlockSpec((dkh, L, L), lambda n: (0, 0, 0)),
            ],
            out_specs=pl.BlockSpec((1, nh, dvh, L), lambda n: (n, 0, 0, 0)),
        ),
        compiler_params=pltpu.CompilerParams(dimension_semantics=("parallel",)),
    )(qkv_flat, M)


# ---------------------------------------------------------------------------
# kernel 3: epilogue (attention_out conv, concat+bn1+mish, residual, conv_out)
# ---------------------------------------------------------------------------

def _epilogue_kernel(xd_ref, a_ref, attn_ref, w_att_ref, b_att_ref,
                     s1_ref, t1_ref, w_out_ref, b_out_ref, s2_ref, t2_ref,
                     o_ref, *, Ca):
    s1 = s1_ref[...]
    t1 = t1_ref[...]

    # attention_out 1x1 conv
    att = jnp.dot(attn_ref[0], w_att_ref[...],
                  preferred_element_type=jnp.float32) + b_att_ref[...]

    xd = xd_ref[0]
    # cat([a, att]) -> bn1 -> mish -> residual, evaluated per channel group
    # (avoids an in-kernel lane concatenate; channel order matches torch.cat).
    y_a = _mish(a_ref[0] * s1[:, :Ca] + t1[:, :Ca])
    y_t = _mish(att * s1[:, Ca:] + t1[:, Ca:])
    xa = xd[:, :Ca] + y_a
    xt = xd[:, Ca:] + y_t

    # conv_out (1x1) split over the same channel groups, then bn2 + mish
    out = (jnp.dot(xa, w_out_ref[:Ca, :], preferred_element_type=jnp.float32)
           + jnp.dot(xt, w_out_ref[Ca:, :], preferred_element_type=jnp.float32)
           + b_out_ref[...])
    out = _mish(out * s2_ref[...] + t2_ref[...])
    o_ref[0] = out.astype(o_ref.dtype)


def epilogue_forward(xd, a, attn_flat, w_att, b_att, s1, t1,
                     w_out, b_out, s2, t2, *, Ca):
    N, HW, Ce = xd.shape
    dv = w_att.shape[0]
    Cout = w_out.shape[1]
    kernel = functools.partial(_epilogue_kernel, Ca=Ca)
    return pl.pallas_call(
        kernel,
        out_shape=jax.ShapeDtypeStruct((N, HW, Cout), jnp.float32),
        grid_spec=pltpu.PrefetchScalarGridSpec(
            num_scalar_prefetch=0,
            grid=(N,),
            in_specs=[
                pl.BlockSpec((1, HW, Ce), lambda n: (n, 0, 0)),
                pl.BlockSpec((1, HW, Ca), lambda n: (n, 0, 0)),
                pl.BlockSpec((1, HW, dv), lambda n: (n, 0, 0)),
                pl.BlockSpec((dv, dv), lambda n: (0, 0)),
                pl.BlockSpec((1, dv), lambda n: (0, 0)),
                pl.BlockSpec((1, Ce), lambda n: (0, 0)),
                pl.BlockSpec((1, Ce), lambda n: (0, 0)),
                pl.BlockSpec((Ce, Cout), lambda n: (0, 0)),
                pl.BlockSpec((1, Cout), lambda n: (0, 0)),
                pl.BlockSpec((1, Cout), lambda n: (0, 0)),
                pl.BlockSpec((1, Cout), lambda n: (0, 0)),
            ],
            out_specs=pl.BlockSpec((1, HW, Cout), lambda n: (n, 0, 0)),
        ),
        compiler_params=pltpu.CompilerParams(dimension_semantics=("parallel",)),
    )(xd, a, attn_flat, w_att, b_att, s1, t1, w_out, b_out, s2, t2)


# ---------------------------------------------------------------------------
# full forward (Pallas path)
# ---------------------------------------------------------------------------

@functools.partial(jax.jit, static_argnames=("K", "S", "nh", "dk", "dv"))
def aa_inverted_bottleneck_forward(x_nchw, p, *, K, S, nh, dk, dv):
    eps = 1e-5
    N, Cin, H, W = x_nchw.shape
    Ce = p['w_in'].shape[0]
    Ca = p['w_aug'].shape[0]
    Cout = p['w_out'].shape[0]
    HW = H * W

    pd = K // 2
    if K % 2 == 0:
        pad_top, pad_left = pd - 1, pd - 1
    else:
        pad_top, pad_left = pd, pd

    # kernel-layout parameters (torch OIHW -> matmul / NHWC layouts)
    w_in_k = jnp.transpose(p['w_in'][:, :, 0, 0])                      # (Cin, Ce)
    w_qkv_k = jnp.transpose(p['w_qkv'][:, :, 0, 0])                    # (Ce, Cq)
    w_att_k = jnp.transpose(p['w_att'][:, :, 0, 0])                    # (dv, dv)
    w_out_k = jnp.transpose(p['w_out'][:, :, 0, 0])                    # (Ce, Cout)
    w_dw_k = jnp.transpose(p['w_dw'][:, 0, :, :], (1, 2, 0)).reshape(K * K, Ce)
    w_aug_k = jnp.transpose(p['w_aug'], (2, 3, 1, 0)).reshape(K * K, Ce, Ca)

    g1, be1, m1, v1 = p['bn1']
    inv1 = g1 / jnp.sqrt(v1 + eps)
    s1 = inv1.reshape(1, Ce)
    t1 = (be1 - m1 * inv1).reshape(1, Ce)
    g2, be2, m2, v2 = p['bn2']
    inv2 = g2 / jnp.sqrt(v2 + eps)
    s2 = inv2.reshape(1, Cout)
    t2 = (be2 - m2 * inv2).reshape(1, Cout)

    b_in = p['b_in'].reshape(1, Ce)
    b_dw = p['b_dw'].reshape(1, Ce)
    b_aug = p['b_aug'].reshape(1, Ca)
    b_qkv = p['b_qkv'].reshape(1, 2 * dk + dv)
    b_att = p['b_att'].reshape(1, dv)
    b_out = p['b_out'].reshape(1, Cout)

    M = _build_rel_matrix(p['rel_w'], p['rel_h'], S)                   # (dkh, L, L)

    x_flat = jnp.transpose(x_nchw, (0, 2, 3, 1)).reshape(N, HW, Cin)

    xd, a, qkv = trunk_forward(x_flat, w_in_k, b_in, s1, t1,
                               w_dw_k, b_dw, w_aug_k, b_aug, w_qkv_k, b_qkv,
                               H=H, W=W, K=K, pad_top=pad_top, pad_left=pad_left)

    attn_heads = attention_forward(qkv, M, nh=nh, dk=dk, dv=dv)        # (N, nh, dvh, L)

    # torch-exact head combine (reshape / permute glue)
    dvh = dv // nh
    attn_r = attn_heads.reshape(N, nh, S, S, dvh)
    attn_nchw = jnp.transpose(attn_r, (0, 1, 4, 2, 3)).reshape(N, nh * dvh, S, S)
    attn_flat = jnp.transpose(attn_nchw, (0, 2, 3, 1)).reshape(N, HW, nh * dvh)

    out_flat = epilogue_forward(xd, a, attn_flat, w_att_k, b_att, s1, t1,
                                w_out_k, b_out, s2, t2, Ca=Ca)

    return jnp.transpose(out_flat.reshape(N, H, W, Cout), (0, 3, 1, 2))


# ---------------------------------------------------------------------------
# pure-JAX reference (direct translation of the torch module, eval-mode BN)
# ---------------------------------------------------------------------------

def _aa_reference(X, rel_w, rel_h, *, nh, dk, dv, S):
    hp = jax.lax.Precision.HIGHEST
    B = X.shape[0]
    q, k, v = X[:, :dk], X[:, dk:2 * dk], X[:, 2 * dk:2 * dk + dv]

    def split_heads(t):
        return t.reshape(B, nh, t.shape[1] // nh, S, S)

    q, k, v = split_heads(q), split_heads(k), split_heads(v)
    q = q * float(dk // nh) ** (-0.5)

    def flat(t):
        return t.reshape(B, nh, t.shape[2], S * S)

    fq, fk, fv = flat(q), flat(k), flat(v)
    logits = jnp.matmul(jnp.swapaxes(fk, 3, 2), fq, precision=hp)

    def rel_to_abs(t):
        Bt, Nh, L, _ = t.shape
        t = jnp.concatenate([t, jnp.zeros((Bt, Nh, L, 1), t.dtype)], axis=3)
        t = t.reshape(Bt, Nh, L * 2 * L)
        t = jnp.concatenate([t, jnp.zeros((Bt, Nh, L - 1), t.dtype)], axis=2)
        t = t.reshape(Bt, Nh, L + 1, 2 * L - 1)
        return t[:, :, :L, L - 1:]

    def rel_logits_1d(qq, weights, permute_mask):
        rel = jnp.einsum('bhxyd,md->bhxym', qq, weights, precision=hp)
        rel = rel.reshape(-1, nh * S, S, 2 * S - 1)
        rel = rel_to_abs(rel)
        rel = rel.reshape(-1, nh, S, S, S)
        rel = rel[:, :, :, None]
        rel = jnp.tile(rel, (1, 1, 1, S, 1, 1))
        rel = jnp.transpose(rel, permute_mask)
        return rel.reshape(-1, nh, S * S, S * S)

    qp = jnp.transpose(q, (0, 1, 3, 4, 2))
    rw = rel_logits_1d(qp, rel_w, (0, 1, 2, 4, 3, 5))
    rh = rel_logits_1d(jnp.transpose(qp, (0, 1, 3, 2, 4)), rel_h, (0, 1, 4, 2, 5, 3))
    logits = logits + rw + rh
    weights = jax.nn.softmax(logits, axis=-1)
    attn = jnp.matmul(fv, weights, precision=hp)
    attn = attn.reshape(B, nh, S, S, dk // nh)
    attn = jnp.transpose(attn, (0, 1, 4, 2, 3)).reshape(B, nh * (dk // nh), S, S)
    return attn


def reference_forward(x, p, *, K, S, nh, dk, dv, eps=1e-5):
    Ce = p['w_in'].shape[0]
    pd = K // 2
    if K % 2 == 0:
        pad_t, pad_b, pad_l, pad_r = pd - 1, pd, pd - 1, pd
    else:
        pad_t, pad_b, pad_l, pad_r = pd, pd, pd, pd

    def conv(z, w, b, groups=1):
        out = jax.lax.conv_general_dilated(
            z, w, (1, 1), 'VALID',
            dimension_numbers=('NCHW', 'OIHW', 'NCHW'),
            feature_group_count=groups,
            precision=jax.lax.Precision.HIGHEST)
        return out + b[None, :, None, None]

    def bn(z, stats):
        g, be, m, v = stats
        inv = g / jnp.sqrt(v + eps)
        return (z - m[None, :, None, None]) * inv[None, :, None, None] + be[None, :, None, None]

    def pad_sp(z):
        return jnp.pad(z, ((0, 0), (0, 0), (pad_t, pad_b), (pad_l, pad_r)))

    X = conv(x, p['w_in'], p['b_in'])
    X = _mish(bn(X, p['bn1']))
    X = pad_sp(X)
    X = conv(X, p['w_dw'], p['b_dw'], groups=Ce)
    X = _mish(bn(X, p['bn1']))
    a = conv(pad_sp(X), p['w_aug'], p['b_aug'])
    attn = conv(X, p['w_qkv'], p['b_qkv'])
    attn = _aa_reference(attn, p['rel_w'], p['rel_h'], nh=nh, dk=dk, dv=dv, S=S)
    attn = conv(attn, p['w_att'], p['b_att'])
    attn = jnp.concatenate([a, attn], axis=1)
    attn = _mish(bn(attn, p['bn1']))
    X = X + attn
    X = conv(X, p['w_out'], p['b_out'])
    X = _mish(bn(X, p['bn2']))
    return X


# ---------------------------------------------------------------------------
# main
# ---------------------------------------------------------------------------

if __name__ == "__main__":
    # Small shapes consistent with the module: batch=2, in_channels=8,
    # out_channels=20, kernel_size=3, n_heads=4, e=4, spatial size=8.
    N, Cin, Cout, K = 2, 8, 20, 3
    nh, e = 4, 4
    S = 8
    H = W = S
    Ce = Cout * e                     # 80
    dv = int(0.1 * Ce)                # 8
    dk = int(0.1 * Ce)                # 8
    Ca = Ce - dv                      # 72
    Cq = 2 * dk + dv                  # 24

    key = jax.random.PRNGKey(0)
    keys = jax.random.split(key, 32)
    kit = iter(keys)

    def u(shape, fan_in):
        bound = 1.0 / math.sqrt(fan_in)
        return jax.random.uniform(next(kit), shape, jnp.float32, -bound, bound)

    params = {
        'w_in': u((Ce, Cin, 1, 1), Cin), 'b_in': u((Ce,), Cin),
        'w_dw': u((Ce, 1, K, K), K * K), 'b_dw': u((Ce,), K * K),
        'w_aug': u((Ca, Ce, K, K), Ce * K * K), 'b_aug': u((Ca,), Ce * K * K),
        'w_qkv': u((Cq, Ce, 1, 1), Ce), 'b_qkv': u((Cq,), Ce),
        'w_att': u((dv, dv, 1, 1), dv), 'b_att': u((dv,), dv),
        'w_out': u((Cout, Ce, 1, 1), Ce), 'b_out': u((Cout,), Ce),
        'rel_w': jax.random.uniform(next(kit), (2 * S - 1, dk // nh), jnp.float32),
        'rel_h': jax.random.uniform(next(kit), (2 * S - 1, dk // nh), jnp.float32),
        'bn1': (1.0 + 0.1 * jax.random.normal(next(kit), (Ce,), jnp.float32),
                0.1 * jax.random.normal(next(kit), (Ce,), jnp.float32),
                0.1 * jax.random.normal(next(kit), (Ce,), jnp.float32),
                jax.random.uniform(next(kit), (Ce,), jnp.float32, 0.5, 1.5)),
        'bn2': (1.0 + 0.1 * jax.random.normal(next(kit), (Cout,), jnp.float32),
                0.1 * jax.random.normal(next(kit), (Cout,), jnp.float32),
                0.1 * jax.random.normal(next(kit), (Cout,), jnp.float32),
                jax.random.uniform(next(kit), (Cout,), jnp.float32, 0.5, 1.5)),
    }

    x = jax.random.normal(next(kit), (N, Cin, H, W), jnp.float32)

    y = aa_inverted_bottleneck_forward(x, params, K=K, S=S, nh=nh, dk=dk, dv=dv)
    y = jax.block_until_ready(y)

    y_ref = reference_forward(x, params, K=K, S=S, nh=nh, dk=dk, dv=dv)

    assert y.shape == (N, Cout, H, W), y.shape
    max_err = float(jnp.max(jnp.abs(y - y_ref)))
    assert jnp.allclose(y, y_ref, atol=1e-3, rtol=1e-3), f"mismatch, max_err={max_err}"

    print("KERNEL_OK")
</pallas_src>

<mosaic_0001>
module attributes {stable_mosaic.version = 11 : i64} {
  func.func @_trunk_kernel(%arg0: i32, %arg1: memref<1x64x8xf32, #tpu.memory_space<vmem>>, %arg2: memref<8x80xf32, #tpu.memory_space<vmem>>, %arg3: memref<1x80xf32, #tpu.memory_space<vmem>>, %arg4: memref<1x80xf32, #tpu.memory_space<vmem>>, %arg5: memref<1x80xf32, #tpu.memory_space<vmem>>, %arg6: memref<9x80xf32, #tpu.memory_space<vmem>>, %arg7: memref<1x80xf32, #tpu.memory_space<vmem>>, %arg8: memref<9x80x72xf32, #tpu.memory_space<vmem>>, %arg9: memref<1x72xf32, #tpu.memory_space<vmem>>, %arg10: memref<80x24xf32, #tpu.memory_space<vmem>>, %arg11: memref<1x24xf32, #tpu.memory_space<vmem>>, %arg12: memref<1x64x80xf32, #tpu.memory_space<vmem>>, %arg13: memref<1x64x72xf32, #tpu.memory_space<vmem>>, %arg14: memref<1x64x24xf32, #tpu.memory_space<vmem>>, %arg15: memref<10x10x80xf32, #tpu.memory_space<vmem>>) attributes {dimension_semantics = [#tpu.dimension_semantics<parallel>], iteration_bounds = array<i64: 2>, scalar_prefetch = 0 : i64, scratch_operands = 1 : i64, tpu.core_type = #tpu.core_type<tc>, window_params = [{transform_indices = @transform_0, window_bounds = array<i64: 1, 64, 8>}, {pipeline_mode = #tpu.pipeline_mode<synchronous>, transform_indices = @transform_1, window_bounds = array<i64: 8, 80>}, {pipeline_mode = #tpu.pipeline_mode<synchronous>, transform_indices = @transform_2, window_bounds = array<i64: 1, 80>}, {pipeline_mode = #tpu.pipeline_mode<synchronous>, transform_indices = @transform_3, window_bounds = array<i64: 1, 80>}, {pipeline_mode = #tpu.pipeline_mode<synchronous>, transform_indices = @transform_4, window_bounds = array<i64: 1, 80>}, {pipeline_mode = #tpu.pipeline_mode<synchronous>, transform_indices = @transform_5, window_bounds = array<i64: 9, 80>}, {pipeline_mode = #tpu.pipeline_mode<synchronous>, transform_indices = @transform_6, window_bounds = array<i64: 1, 80>}, {pipeline_mode = #tpu.pipeline_mode<synchronous>, transform_indices = @transform_7, window_bounds = array<i64: 9, 80, 72>}, {pipeline_mode = #tpu.pipeline_mode<synchronous>, transform_indices = @transform_8, window_bounds = array<i64: 1, 72>}, {pipeline_mode = #tpu.pipeline_mode<synchronous>, transform_indices = @transform_9, window_bounds = array<i64: 80, 24>}, {pipeline_mode = #tpu.pipeline_mode<synchronous>, transform_indices = @transform_10, window_bounds = array<i64: 1, 24>}, {transform_indices = @transform_11, window_bounds = array<i64: 1, 64, 80>}, {transform_indices = @transform_12, window_bounds = array<i64: 1, 64, 72>}, {transform_indices = @transform_13, window_bounds = array<i64: 1, 64, 24>}]} {
    %c0 = arith.constant 0 : index
    %c0_0 = arith.constant 0 : index
    %0 = vector.load %arg4[%c0, %c0_0] : memref<1x80xf32, #tpu.memory_space<vmem>>, vector<1x80xf32>
    %c0_1 = arith.constant 0 : index
    %c0_2 = arith.constant 0 : index
    %1 = vector.load %arg5[%c0_1, %c0_2] : memref<1x80xf32, #tpu.memory_space<vmem>>, vector<1x80xf32>
    %c0_3 = arith.constant 0 : index
    %c0_4 = arith.constant 0 : index
    %c0_5 = arith.constant 0 : index
    %2 = vector.load %arg1[%c0_3, %c0_4, %c0_5] : memref<1x64x8xf32, #tpu.memory_space<vmem>>, vector<1x64x8xf32>
    %3 = vector.shape_cast %2 : vector<1x64x8xf32> to vector<64x8xf32>
    %c0_6 = arith.constant 0 : index
    %c0_7 = arith.constant 0 : index
    %4 = vector.load %arg2[%c0_6, %c0_7] : memref<8x80xf32, #tpu.memory_space<vmem>>, vector<8x80xf32>
    %cst = arith.constant dense<0.000000e+00> : vector<64x80xf32>
    %5 = tpu.matmul %3, %4, %cst {dimension_numbers = #tpu.dot_dimension_numbers<[1], [0], [0], [1], [0, 0, 1, 1], [], []>} : vector<64x8xf32>, vector<8x80xf32>, vector<64x80xf32> -> vector<64x80xf32>
    %c0_8 = arith.constant 0 : index
    %c0_9 = arith.constant 0 : index
    %6 = vector.load %arg3[%c0_8, %c0_9] : memref<1x80xf32, #tpu.memory_space<vmem>>, vector<1x80xf32>
    %7 = vector.broadcast %6 : vector<1x80xf32> to vector<64x80xf32>
    %8 = arith.addf %5, %7 : vector<64x80xf32>
    %9 = vector.broadcast %0 : vector<1x80xf32> to vector<64x80xf32>
    %10 = arith.mulf %8, %9 : vector<64x80xf32>
    %11 = vector.broadcast %1 : vector<1x80xf32> to vector<64x80xf32>
    %12 = arith.addf %10, %11 : vector<64x80xf32>
    %cst_10 = arith.constant 0.000000e+00 : f32
    %13 = vector.broadcast %cst_10 : f32 to vector<64x80xf32>
    %14 = arith.maximumf %12, %13 : vector<64x80xf32>
    %15 = math.absf %12 : vector<64x80xf32>
    %cst_11 = arith.constant 0.000000e+00 : f32
    %16 = vector.broadcast %cst_11 : f32 to vector<64x80xf32>
    %17 = arith.subf %16, %15 : vector<64x80xf32>
    %18 = math.exp %17 : vector<64x80xf32>
    %cst_12 = arith.constant 1.000000e+00 : f32
    %19 = vector.broadcast %cst_12 : f32 to vector<64x80xf32>
    %20 = arith.addf %19, %18 : vector<64x80xf32>
    %21 = math.log %20 : vector<64x80xf32>
    %22 = arith.addf %14, %21 : vector<64x80xf32>
    %23 = math.tanh %22 : vector<64x80xf32>
    %24 = arith.mulf %12, %23 : vector<64x80xf32>
    %cst_13 = arith.constant 0.000000e+00 : f32
    %25 = vector.broadcast %cst_13 : f32 to vector<10x10x80xf32>
    %c0_14 = arith.constant 0 : index
    %c0_15 = arith.constant 0 : index
    %c0_16 = arith.constant 0 : index
    %26 = vector.load %arg15[%c0_14, %c0_15, %c0_16] : memref<10x10x80xf32, #tpu.memory_space<vmem>>, vector<10x10x80xf32>
    tpu.vector_store %arg15[%c0_14, %c0_15, %c0_16], %25 {strides = array<i32>} : memref<10x10x80xf32, #tpu.memory_space<vmem>>, vector<10x10x80xf32>,
    %27 = vector.shape_cast %24 : vector<64x80xf32> to vector<8x8x80xf32>
    %c1 = arith.constant 1 : index
    %c1_17 = arith.constant 1 : index
    %c0_18 = arith.constant 0 : index
    %28 = vector.load %arg15[%c1, %c1_17, %c0_18] : memref<10x10x80xf32, #tpu.memory_space<vmem>>, vector<8x8x80xf32>
    tpu.vector_store %arg15[%c1, %c1_17, %c0_18], %27 {strides = array<i32>} : memref<10x10x80xf32, #tpu.memory_space<vmem>>, vector<8x8x80xf32>,
    %cst_19 = arith.constant 0.000000e+00 : f32
    %29 = vector.broadcast %cst_19 : f32 to vector<8x8x80xf32>
    %c0_20 = arith.constant 0 : index
    %c0_21 = arith.constant 0 : index
    %c0_22 = arith.constant 0 : index
    %30 = vector.load %arg15[%c0_20, %c0_21, %c0_22] : memref<10x10x80xf32, #tpu.memory_space<vmem>>, vector<8x8x80xf32>
    %c0_23 = arith.constant 0 : index
    %c0_24 = arith.constant 0 : index
    %31 = vector.load %arg6[%c0_23, %c0_24] : memref<9x80xf32, #tpu.memory_space<vmem>>, vector<1x80xf32>
    %32 = vector.shape_cast %31 : vector<1x80xf32> to vector<1x1x80xf32>
    %33 = vector.broadcast %32 : vector<1x1x80xf32> to vector<8x8x80xf32>
    %34 = arith.mulf %30, %33 : vector<8x8x80xf32>
    %35 = arith.addf %29, %34 : vector<8x8x80xf32>
    %c0_25 = arith.constant 0 : index
    %c1_26 = arith.constant 1 : index
    %c0_27 = arith.constant 0 : index
    %36 = vector.load %arg15[%c0_25, %c1_26, %c0_27] : memref<10x10x80xf32, #tpu.memory_space<vmem>>, vector<8x8x80xf32>
    %c1_28 = arith.constant 1 : index
    %c0_29 = arith.constant 0 : index
    %37 = vector.load %arg6[%c1_28, %c0_29] : memref<9x80xf32, #tpu.memory_space<vmem>>, vector<1x80xf32>
    %38 = vector.shape_cast %37 : vector<1x80xf32> to vector<1x1x80xf32>
    %39 = vector.broadcast %38 : vector<1x1x80xf32> to vector<8x8x80xf32>
    %40 = arith.mulf %36, %39 : vector<8x8x80xf32>
    %41 = arith.addf %35, %40 : vector<8x8x80xf32>
    %c0_30 = arith.constant 0 : index
    %c2 = arith.constant 2 : index
    %c0_31 = arith.constant 0 : index
    %42 = vector.load %arg15[%c0_30, %c2, %c0_31] : memref<10x10x80xf32, #tpu.memory_space<vmem>>, vector<8x8x80xf32>
    %c2_32 = arith.constant 2 : index
    %c0_33 = arith.constant 0 : index
    %43 = vector.load %arg6[%c2_32, %c0_33] : memref<9x80xf32, #tpu.memory_space<vmem>>, vector<1x80xf32>
    %44 = vector.shape_cast %43 : vector<1x80xf32> to vector<1x1x80xf32>
    %45 = vector.broadcast %44 : vector<1x1x80xf32> to vector<8x8x80xf32>
    %46 = arith.mulf %42, %45 : vector<8x8x80xf32>
    %47 = arith.addf %41, %46 : vector<8x8x80xf32>
    %c1_34 = arith.constant 1 : index
    %c0_35 = arith.constant 0 : index
    %c0_36 = arith.constant 0 : index
    %48 = vector.load %arg15[%c1_34, %c0_35, %c0_36] : memref<10x10x80xf32, #tpu.memory_space<vmem>>, vector<8x8x80xf32>
    %c3 = arith.constant 3 : index
    %c0_37 = arith.constant 0 : index
    %49 = vector.load %arg6[%c3, %c0_37] : memref<9x80xf32, #tpu.memory_space<vmem>>, vector<1x80xf32>
    %50 = vector.shape_cast %49 : vector<1x80xf32> to vector<1x1x80xf32>
    %51 = vector.broadcast %50 : vector<1x1x80xf32> to vector<8x8x80xf32>
    %52 = arith.mulf %48, %51 : vector<8x8x80xf32>
    %53 = arith.addf %47, %52 : vector<8x8x80xf32>
    %c1_38 = arith.constant 1 : index
    %c1_39 = arith.constant 1 : index
    %c0_40 = arith.constant 0 : index
    %54 = vector.load %arg15[%c1_38, %c1_39, %c0_40] : memref<10x10x80xf32, #tpu.memory_space<vmem>>, vector<8x8x80xf32>
    %c4 = arith.constant 4 : index
    %c0_41 = arith.constant 0 : index
    %55 = vector.load %arg6[%c4, %c0_41] : memref<9x80xf32, #tpu.memory_space<vmem>>, vector<1x80xf32>
    %56 = vector.shape_cast %55 : vector<1x80xf32> to vector<1x1x80xf32>
    %57 = vector.broadcast %56 : vector<1x1x80xf32> to vector<8x8x80xf32>
    %58 = arith.mulf %54, %57 : vector<8x8x80xf32>
    %59 = arith.addf %53, %58 : vector<8x8x80xf32>
    %c1_42 = arith.constant 1 : index
    %c2_43 = arith.constant 2 : index
    %c0_44 = arith.constant 0 : index
    %60 = vector.load %arg15[%c1_42, %c2_43, %c0_44] : memref<10x10x80xf32, #tpu.memory_space<vmem>>, vector<8x8x80xf32>
    %c5 = arith.constant 5 : index
    %c0_45 = arith.constant 0 : index
    %61 = vector.load %arg6[%c5, %c0_45] : memref<9x80xf32, #tpu.memory_space<vmem>>, vector<1x80xf32>
    %62 = vector.shape_cast %61 : vector<1x80xf32> to vector<1x1x80xf32>
    %63 = vector.broadcast %62 : vector<1x1x80xf32> to vector<8x8x80xf32>
    %64 = arith.mulf %60, %63 : vector<8x8x80xf32>
    %65 = arith.addf %59, %64 : vector<8x8x80xf32>
    %c2_46 = arith.constant 2 : index
    %c0_47 = arith.constant 0 : index
    %c0_48 = arith.constant 0 : index
    %66 = vector.load %arg15[%c2_46, %c0_47, %c0_48] : memref<10x10x80xf32, #tpu.memory_space<vmem>>, vector<8x8x80xf32>
    %c6 = arith.constant 6 : index
    %c0_49 = arith.constant 0 : index
    %67 = vector.load %arg6[%c6, %c0_49] : memref<9x80xf32, #tpu.memory_space<vmem>>, vector<1x80xf32>
    %68 = vector.shape_cast %67 : vector<1x80xf32> to vector<1x1x80xf32>
    %69 = vector.broadcast %68 : vector<1x1x80xf32> to vector<8x8x80xf32>
    %70 = arith.mulf %66, %69 : vector<8x8x80xf32>
    %71 = arith.addf %65, %70 : vector<8x8x80xf32>
    %c2_50 = arith.constant 2 : index
    %c1_51 = arith.constant 1 : index
    %c0_52 = arith.constant 0 : index
    %72 = vector.load %arg15[%c2_50, %c1_51, %c0_52] : memref<10x10x80xf32, #tpu.memory_space<vmem>>, vector<8x8x80xf32>
    %c7 = arith.constant 7 : index
    %c0_53 = arith.constant 0 : index
    %73 = vector.load %arg6[%c7, %c0_53] : memref<9x80xf32, #tpu.memory_space<vmem>>, vector<1x80xf32>
    %74 = vector.shape_cast %73 : vector<1x80xf32> to vector<1x1x80xf32>
    %75 = vector.broadcast %74 : vector<1x1x80xf32> to vector<8x8x80xf32>
    %76 = arith.mulf %72, %75 : vector<8x8x80xf32>
    %77 = arith.addf %71, %76 : vector<8x8x80xf32>
    %c2_54 = arith.constant 2 : index
    %c2_55 = arith.constant 2 : index
    %c0_56 = arith.constant 0 : index
    %78 = vector.load %arg15[%c2_54, %c2_55, %c0_56] : memref<10x10x80xf32, #tpu.memory_space<vmem>>, vector<8x8x80xf32>
    %c8 = arith.constant 8 : index
    %c0_57 = arith.constant 0 : index
    %79 = vector.load %arg6[%c8, %c0_57] : memref<9x80xf32, #tpu.memory_space<vmem>>, vector<1x80xf32>
    %80 = vector.shape_cast %79 : vector<1x80xf32> to vector<1x1x80xf32>
    %81 = vector.broadcast %80 : vector<1x1x80xf32> to vector<8x8x80xf32>
    %82 = arith.mulf %78, %81 : vector<8x8x80xf32>
    %83 = arith.addf %77, %82 : vector<8x8x80xf32>
    %84 = vector.shape_cast %83 : vector<8x8x80xf32> to vector<64x80xf32>
    %c0_58 = arith.constant 0 : index
    %c0_59 = arith.constant 0 : index
    %85 = vector.load %arg7[%c0_58, %c0_59] : memref<1x80xf32, #tpu.memory_space<vmem>>, vector<1x80xf32>
    %86 = vector.broadcast %85 : vector<1x80xf32> to vector<64x80xf32>
    %87 = arith.addf %84, %86 : vector<64x80xf32>
    %88 = vector.broadcast %0 : vector<1x80xf32> to vector<64x80xf32>
    %89 = arith.mulf %87, %88 : vector<64x80xf32>
    %90 = vector.broadcast %1 : vector<1x80xf32> to vector<64x80xf32>
    %91 = arith.addf %89, %90 : vector<64x80xf32>
    %cst_60 = arith.constant 0.000000e+00 : f32
    %92 = vector.broadcast %cst_60 : f32 to vector<64x80xf32>
    %93 = arith.maximumf %91, %92 : vector<64x80xf32>
    %94 = math.absf %91 : vector<64x80xf32>
    %cst_61 = arith.constant 0.000000e+00 : f32
    %95 = vector.broadcast %cst_61 : f32 to vector<64x80xf32>
    %96 = arith.subf %95, %94 : vector<64x80xf32>
    %97 = math.exp %96 : vector<64x80xf32>
    %cst_62 = arith.constant 1.000000e+00 : f32
    %98 = vector.broadcast %cst_62 : f32 to vector<64x80xf32>
    %99 = arith.addf %98, %97 : vector<64x80xf32>
    %100 = math.log %99 : vector<64x80xf32>
    %101 = arith.addf %93, %100 : vector<64x80xf32>
    %102 = math.tanh %101 : vector<64x80xf32>
    %103 = arith.mulf %91, %102 : vector<64x80xf32>
    %c0_63 = arith.constant 0 : index
    %c0_64 = arith.constant 0 : index
    %c0_65 = arith.constant 0 : index
    %104 = vector.load %arg12[%c0_63, %c0_64, %c0_65] : memref<1x64x80xf32, #tpu.memory_space<vmem>>, vector<1x64x80xf32>
    %105 = vector.shape_cast %104 : vector<1x64x80xf32> to vector<64x80xf32>
    %106 = vector.shape_cast %103 : vector<64x80xf32> to vector<1x64x80xf32>
    tpu.vector_store %arg12[%c0_63, %c0_64, %c0_65], %106 {strides = array<i32>} : memref<1x64x80xf32, #tpu.memory_space<vmem>>, vector<1x64x80xf32>,
    %107 = vector.shape_cast %103 : vector<64x80xf32> to vector<8x8x80xf32>
    %c1_66 = arith.constant 1 : index
    %c1_67 = arith.constant 1 : index
    %c0_68 = arith.constant 0 : index
    %108 = vector.load %arg15[%c1_66, %c1_67, %c0_68] : memref<10x10x80xf32, #tpu.memory_space<vmem>>, vector<8x8x80xf32>
    tpu.vector_store %arg15[%c1_66, %c1_67, %c0_68], %107 {strides = array<i32>} : memref<10x10x80xf32, #tpu.memory_space<vmem>>, vector<8x8x80xf32>,
    %c0_69 = arith.constant 0 : index
    %c0_70 = arith.constant 0 : index
    %109 = vector.load %arg9[%c0_69, %c0_70] : memref<1x72xf32, #tpu.memory_space<vmem>>, vector<1x72xf32>
    %110 = vector.shape_cast %109 : vector<1x72xf32> to vector<1x72xf32>
    %111 = vector.broadcast %110 : vector<1x72xf32> to vector<64x72xf32>
    %c0_71 = arith.constant 0 : index
    %c0_72 = arith.constant 0 : index
    %c0_73 = arith.constant 0 : index
    %112 = vector.load %arg15[%c0_71, %c0_72, %c0_73] : memref<10x10x80xf32, #tpu.memory_space<vmem>>, vector<8x8x80xf32>
    %113 = vector.shape_cast %112 : vector<8x8x80xf32> to vector<64x80xf32>
    %c0_74 = arith.constant 0 : index
    %c0_75 = arith.constant 0 : index
    %c0_76 = arith.constant 0 : index
    %114 = vector.load %arg8[%c0_74, %c0_75, %c0_76] : memref<9x80x72xf32, #tpu.memory_space<vmem>>, vector<1x80x72xf32>
    %115 = vector.shape_cast %114 : vector<1x80x72xf32> to vector<80x72xf32>
    %cst_77 = arith.constant dense<0.000000e+00> : vector<64x72xf32>
    %116 = tpu.matmul %113, %115, %cst_77 {dimension_numbers = #tpu.dot_dimension_numbers<[1], [0], [0], [1], [0, 0, 1, 1], [], []>} : vector<64x80xf32>, vector<80x72xf32>, vector<64x72xf32> -> vector<64x72xf32>
    %117 = arith.addf %111, %116 : vector<64x72xf32>
    %c0_78 = arith.constant 0 : index
    %c1_79 = arith.constant 1 : index
    %c0_80 = arith.constant 0 : index
    %118 = vector.load %arg15[%c0_78, %c1_79, %c0_80] : memref<10x10x80xf32, #tpu.memory_space<vmem>>, vector<8x8x80xf32>
    %119 = vector.shape_cast %118 : vector<8x8x80xf32> to vector<64x80xf32>
    %c1_81 = arith.constant 1 : index
    %c0_82 = arith.constant 0 : index
    %c0_83 = arith.constant 0 : index
    %120 = vector.load %arg8[%c1_81, %c0_82, %c0_83] : memref<9x80x72xf32, #tpu.memory_space<vmem>>, vector<1x80x72xf32>
    %121 = vector.shape_cast %120 : vector<1x80x72xf32> to vector<80x72xf32>
    %cst_84 = arith.constant dense<0.000000e+00> : vector<64x72xf32>
    %122 = tpu.matmul %119, %121, %cst_84 {dimension_numbers = #tpu.dot_dimension_numbers<[1], [0], [0], [1], [0, 0, 1, 1], [], []>} : vector<64x80xf32>, vector<80x72xf32>, vector<64x72xf32> -> vector<64x72xf32>
    %123 = arith.addf %117, %122 : vector<64x72xf32>
    %c0_85 = arith.constant 0 : index
    %c2_86 = arith.constant 2 : index
    %c0_87 = arith.constant 0 : index
    %124 = vector.load %arg15[%c0_85, %c2_86, %c0_87] : memref<10x10x80xf32, #tpu.memory_space<vmem>>, vector<8x8x80xf32>
    %125 = vector.shape_cast %124 : vector<8x8x80xf32> to vector<64x80xf32>
    %c2_88 = arith.constant 2 : index
    %c0_89 = arith.constant 0 : index
    %c0_90 = arith.constant 0 : index
    %126 = vector.load %arg8[%c2_88, %c0_89, %c0_90] : memref<9x80x72xf32, #tpu.memory_space<vmem>>, vector<1x80x72xf32>
    %127 = vector.shape_cast %126 : vector<1x80x72xf32> to vector<80x72xf32>
    %cst_91 = arith.constant dense<0.000000e+00> : vector<64x72xf32>
    %128 = tpu.matmul %125, %127, %cst_91 {dimension_numbers = #tpu.dot_dimension_numbers<[1], [0], [0], [1], [0, 0, 1, 1], [], []>} : vector<64x80xf32>, vector<80x72xf32>, vector<64x72xf32> -> vector<64x72xf32>
    %129 = arith.addf %123, %128 : vector<64x72xf32>
    %c1_92 = arith.constant 1 : index
    %c0_93 = arith.constant 0 : index
    %c0_94 = arith.constant 0 : index
    %130 = vector.load %arg15[%c1_92, %c0_93, %c0_94] : memref<10x10x80xf32, #tpu.memory_space<vmem>>, vector<8x8x80xf32>
    %131 = vector.shape_cast %130 : vector<8x8x80xf32> to vector<64x80xf32>
    %c3_95 = arith.constant 3 : index
    %c0_96 = arith.constant 0 : index
    %c0_97 = arith.constant 0 : index
    %132 = vector.load %arg8[%c3_95, %c0_96, %c0_97] : memref<9x80x72xf32, #tpu.memory_space<vmem>>, vector<1x80x72xf32>
    %133 = vector.shape_cast %132 : vector<1x80x72xf32> to vector<80x72xf32>
    %cst_98 = arith.constant dense<0.000000e+00> : vector<64x72xf32>
    %134 = tpu.matmul %131, %133, %cst_98 {dimension_numbers = #tpu.dot_dimension_numbers<[1], [0], [0], [1], [0, 0, 1, 1], [], []>} : vector<64x80xf32>, vector<80x72xf32>, vector<64x72xf32> -> vector<64x72xf32>
    %135 = arith.addf %129, %134 : vector<64x72xf32>
    %c1_99 = arith.constant 1 : index
    %c1_100 = arith.constant 1 : index
    %c0_101 = arith.constant 0 : index
    %136 = vector.load %arg15[%c1_99, %c1_100, %c0_101] : memref<10x10x80xf32, #tpu.memory_space<vmem>>, vector<8x8x80xf32>
    %137 = vector.shape_cast %136 : vector<8x8x80xf32> to vector<64x80xf32>
    %c4_102 = arith.constant 4 : index
    %c0_103 = arith.constant 0 : index
    %c0_104 = arith.constant 0 : index
    %138 = vector.load %arg8[%c4_102, %c0_103, %c0_104] : memref<9x80x72xf32, #tpu.memory_space<vmem>>, vector<1x80x72xf32>
    %139 = vector.shape_cast %138 : vector<1x80x72xf32> to vector<80x72xf32>
    %cst_105 = arith.constant dense<0.000000e+00> : vector<64x72xf32>
    %140 = tpu.matmul %137, %139, %cst_105 {dimension_numbers = #tpu.dot_dimension_numbers<[1], [0], [0], [1], [0, 0, 1, 1], [], []>} : vector<64x80xf32>, vector<80x72xf32>, vector<64x72xf32> -> vector<64x72xf32>
    %141 = arith.addf %135, %140 : vector<64x72xf32>
    %c1_106 = arith.constant 1 : index
    %c2_107 = arith.constant 2 : index
    %c0_108 = arith.constant 0 : index
    %142 = vector.load %arg15[%c1_106, %c2_107, %c0_108] : memref<10x10x80xf32, #tpu.memory_space<vmem>>, vector<8x8x80xf32>
    %143 = vector.shape_cast %142 : vector<8x8x80xf32> to vector<64x80xf32>
    %c5_109 = arith.constant 5 : index
    %c0_110 = arith.constant 0 : index
    %c0_111 = arith.constant 0 : index
    %144 = vector.load %arg8[%c5_109, %c0_110, %c0_111] : memref<9x80x72xf32, #tpu.memory_space<vmem>>, vector<1x80x72xf32>
    %145 = vector.shape_cast %144 : vector<1x80x72xf32> to vector<80x72xf32>
    %cst_112 = arith.constant dense<0.000000e+00> : vector<64x72xf32>
    %146 = tpu.matmul %143, %145, %cst_112 {dimension_numbers = #tpu.dot_dimension_numbers<[1], [0], [0], [1], [0, 0, 1, 1], [], []>} : vector<64x80xf32>, vector<80x72xf32>, vector<64x72xf32> -> vector<64x72xf32>
    %147 = arith.addf %141, %146 : vector<64x72xf32>
    %c2_113 = arith.constant 2 : index
    %c0_114 = arith.constant 0 : index
    %c0_115 = arith.constant 0 : index
    %148 = vector.load %arg15[%c2_113, %c0_114, %c0_115] : memref<10x10x80xf32, #tpu.memory_space<vmem>>, vector<8x8x80xf32>
    %149 = vector.shape_cast %148 : vector<8x8x80xf32> to vector<64x80xf32>
    %c6_116 = arith.constant 6 : index
    %c0_117 = arith.constant 0 : index
    %c0_118 = arith.constant 0 : index
    %150 = vector.load %arg8[%c6_116, %c0_117, %c0_118] : memref<9x80x72xf32, #tpu.memory_space<vmem>>, vector<1x80x72xf32>
    %151 = vector.shape_cast %150 : vector<1x80x72xf32> to vector<80x72xf32>
    %cst_119 = arith.constant dense<0.000000e+00> : vector<64x72xf32>
    %152 = tpu.matmul %149, %151, %cst_119 {dimension_numbers = #tpu.dot_dimension_numbers<[1], [0], [0], [1], [0, 0, 1, 1], [], []>} : vector<64x80xf32>, vector<80x72xf32>, vector<64x72xf32> -> vector<64x72xf32>
    %153 = arith.addf %147, %152 : vector<64x72xf32>
    %c2_120 = arith.constant 2 : index
    %c1_121 = arith.constant 1 : index
    %c0_122 = arith.constant 0 : index
    %154 = vector.load %arg15[%c2_120, %c1_121, %c0_122] : memref<10x10x80xf32, #tpu.memory_space<vmem>>, vector<8x8x80xf32>
    %155 = vector.shape_cast %154 : vector<8x8x80xf32> to vector<64x80xf32>
    %c7_123 = arith.constant 7 : index
    %c0_124 = arith.constant 0 : index
    %c0_125 = arith.constant 0 : index
    %156 = vector.load %arg8[%c7_123, %c0_124, %c0_125] : memref<9x80x72xf32, #tpu.memory_space<vmem>>, vector<1x80x72xf32>
    %157 = vector.shape_cast %156 : vector<1x80x72xf32> to vector<80x72xf32>
    %cst_126 = arith.constant dense<0.000000e+00> : vector<64x72xf32>
    %158 = tpu.matmul %155, %157, %cst_126 {dimension_numbers = #tpu.dot_dimension_numbers<[1], [0], [0], [1], [0, 0, 1, 1], [], []>} : vector<64x80xf32>, vector<80x72xf32>, vector<64x72xf32> -> vector<64x72xf32>
    %159 = arith.addf %153, %158 : vector<64x72xf32>
    %c2_127 = arith.constant 2 : index
    %c2_128 = arith.constant 2 : index
    %c0_129 = arith.constant 0 : index
    %160 = vector.load %arg15[%c2_127, %c2_128, %c0_129] : memref<10x10x80xf32, #tpu.memory_space<vmem>>, vector<8x8x80xf32>
    %161 = vector.shape_cast %160 : vector<8x8x80xf32> to vector<64x80xf32>
    %c8_130 = arith.constant 8 : index
    %c0_131 = arith.constant 0 : index
    %c0_132 = arith.constant 0 : index
    %162 = vector.load %arg8[%c8_130, %c0_131, %c0_132] : memref<9x80x72xf32, #tpu.memory_space<vmem>>, vector<1x80x72xf32>
    %163 = vector.shape_cast %162 : vector<1x80x72xf32> to vector<80x72xf32>
    %cst_133 = arith.constant dense<0.000000e+00> : vector<64x72xf32>
    %164 = tpu.matmul %161, %163, %cst_133 {dimension_numbers = #tpu.dot_dimension_numbers<[1], [0], [0], [1], [0, 0, 1, 1], [], []>} : vector<64x80xf32>, vector<80x72xf32>, vector<64x72xf32> -> vector<64x72xf32>
    %165 = arith.addf %159, %164 : vector<64x72xf32>
    %c0_134 = arith.constant 0 : index
    %c0_135 = arith.constant 0 : index
    %c0_136 = arith.constant 0 : index
    %166 = vector.load %arg13[%c0_134, %c0_135, %c0_136] : memref<1x64x72xf32, #tpu.memory_space<vmem>>, vector<1x64x72xf32>
    %167 = vector.shape_cast %166 : vector<1x64x72xf32> to vector<64x72xf32>
    %168 = vector.shape_cast %165 : vector<64x72xf32> to vector<1x64x72xf32>
    tpu.vector_store %arg13[%c0_134, %c0_135, %c0_136], %168 {strides = array<i32>} : memref<1x64x72xf32, #tpu.memory_space<vmem>>, vector<1x64x72xf32>,
    %c0_137 = arith.constant 0 : index
    %c0_138 = arith.constant 0 : index
    %169 = vector.load %arg10[%c0_137, %c0_138] : memref<80x24xf32, #tpu.memory_space<vmem>>, vector<80x24xf32>
    %cst_139 = arith.constant dense<0.000000e+00> : vector<64x24xf32>
    %170 = tpu.matmul %103, %169, %cst_139 {dimension_numbers = #tpu.dot_dimension_numbers<[1], [0], [0], [1], [0, 0, 1, 1], [], []>} : vector<64x80xf32>, vector<80x24xf32>, vector<64x24xf32> -> vector<64x24xf32>
    %c0_140 = arith.constant 0 : index
    %c0_141 = arith.constant 0 : index
    %171 = vector.load %arg11[%c0_140, %c0_141] : memref<1x24xf32, #tpu.memory_space<vmem>>, vector<1x24xf32>
    %172 = vector.broadcast %171 : vector<1x24xf32> to vector<64x24xf32>
    %173 = arith.addf %170, %172 : vector<64x24xf32>
    %c0_142 = arith.constant 0 : index
    %c0_143 = arith.constant 0 : index
    %c0_144 = arith.constant 0 : index
    %174 = vector.load %arg14[%c0_142, %c0_143, %c0_144] : memref<1x64x24xf32, #tpu.memory_space<vmem>>, vector<1x64x24xf32>
    %175 = vector.shape_cast %174 : vector<1x64x24xf32> to vector<64x24xf32>
    %176 = vector.shape_cast %173 : vector<64x24xf32> to vector<1x64x24xf32>
    tpu.vector_store %arg14[%c0_142, %c0_143, %c0_144], %176 {strides = array<i32>} : memref<1x64x24xf32, #tpu.memory_space<vmem>>, vector<1x64x24xf32>,
    return
  }
  func.func @transform_0(%arg0: i32) -> (i32, i32, i32) {
    %c0_i32 = arith.constant 0 : i32
    %c0_i32_0 = arith.constant 0 : i32
    %c0_i32_1 = arith.constant 0 : i32
    return %arg0, %c0_i32, %c0_i32_0 : i32, i32, i32
  }
  func.func @transform_1(%arg0: i32) -> (i32, i32) {
    %c0_i32 = arith.constant 0 : i32
    %c0_i32_0 = arith.constant 0 : i32
    %c0_i32_1 = arith.constant 0 : i32
    return %c0_i32, %c0_i32_0 : i32, i32
  }
  func.func @transform_2(%arg0: i32) -> (i32, i32) {
    %c0_i32 = arith.constant 0 : i32
    %c0_i32_0 = arith.constant 0 : i32
    %c0_i32_1 = arith.constant 0 : i32
    return %c0_i32, %c0_i32_0 : i32, i32
  }
  func.func @transform_3(%arg0: i32) -> (i32, i32) {
    %c0_i32 = arith.constant 0 : i32
    %c0_i32_0 = arith.constant 0 : i32
    %c0_i32_1 = arith.constant 0 : i32
    return %c0_i32, %c0_i32_0 : i32, i32
  }
  func.func @transform_4(%arg0: i32) -> (i32, i32) {
    %c0_i32 = arith.constant 0 : i32
    %c0_i32_0 = arith.constant 0 : i32
    %c0_i32_1 = arith.constant 0 : i32
    return %c0_i32, %c0_i32_0 : i32, i32
  }
  func.func @transform_5(%arg0: i32) -> (i32, i32) {
    %c0_i32 = arith.constant 0 : i32
    %c0_i32_0 = arith.constant 0 : i32
    %c0_i32_1 = arith.constant 0 : i32
    return %c0_i32, %c0_i32_0 : i32, i32
  }
  func.func @transform_6(%arg0: i32) -> (i32, i32) {
    %c0_i32 = arith.constant 0 : i32
    %c0_i32_0 = arith.constant 0 : i32
    %c0_i32_1 = arith.constant 0 : i32
    return %c0_i32, %c0_i32_0 : i32, i32
  }
  func.func @transform_7(%arg0: i32) -> (i32, i32, i32) {
    %c0_i32 = arith.constant 0 : i32
    %c0_i32_0 = arith.constant 0 : i32
    %c0_i32_1 = arith.constant 0 : i32
    %c0_i32_2 = arith.constant 0 : i32
    return %c0_i32, %c0_i32_0, %c0_i32_1 : i32, i32, i32
  }
  func.func @transform_8(%arg0: i32) -> (i32, i32) {
    %c0_i32 = arith.constant 0 : i32
    %c0_i32_0 = arith.constant 0 : i32
    %c0_i32_1 = arith.constant 0 : i32
    return %c0_i32, %c0_i32_0 : i32, i32
  }
  func.func @transform_9(%arg0: i32) -> (i32, i32) {
    %c0_i32 = arith.constant 0 : i32
    %c0_i32_0 = arith.constant 0 : i32
    %c0_i32_1 = arith.constant 0 : i32
    return %c0_i32, %c0_i32_0 : i32, i32
  }
  func.func @transform_10(%arg0: i32) -> (i32, i32) {
    %c0_i32 = arith.constant 0 : i32
    %c0_i32_0 = arith.constant 0 : i32
    %c0_i32_1 = arith.constant 0 : i32
    return %c0_i32, %c0_i32_0 : i32, i32
  }
  func.func @transform_11(%arg0: i32) -> (i32, i32, i32) {
    %c0_i32 = arith.constant 0 : i32
    %c0_i32_0 = arith.constant 0 : i32
    %c0_i32_1 = arith.constant 0 : i32
    return %arg0, %c0_i32, %c0_i32_0 : i32, i32, i32
  }
  func.func @transform_12(%arg0: i32) -> (i32, i32, i32) {
    %c0_i32 = arith.constant 0 : i32
    %c0_i32_0 = arith.constant 0 : i32
    %c0_i32_1 = arith.constant 0 : i32
    return %arg0, %c0_i32, %c0_i32_0 : i32, i32, i32
  }
  func.func @transform_13(%arg0: i32) -> (i32, i32, i32) {
    %c0_i32 = arith.constant 0 : i32
    %c0_i32_0 = arith.constant 0 : i32
    %c0_i32_1 = arith.constant 0 : i32
    return %arg0, %c0_i32, %c0_i32_0 : i32, i32, i32
  }
}

module attributes {stable_mosaic.version = 11 : i64} {
  func.func @_attn_kernel(%arg0: i32, %arg1: memref<1x64x24xf32, #tpu.memory_space<vmem>>, %arg2: memref<2x64x64xf32, #tpu.memory_space<vmem>>, %arg3: memref<1x4x2x64xf32, #tpu.memory_space<vmem>>) attributes {dimension_semantics = [#tpu.dimension_semantics<parallel>], iteration_bounds = array<i64: 2>, scalar_prefetch = 0 : i64, scratch_operands = 0 : i64, tpu.core_type = #tpu.core_type<tc>, window_params = [{transform_indices = @transform_0, window_bounds = array<i64: 1, 64, 24>}, {pipeline_mode = #tpu.pipeline_mode<synchronous>, transform_indices = @transform_1, window_bounds = array<i64: 2, 64, 64>}, {transform_indices = @transform_2, window_bounds = array<i64: 1, 4, 2, 64>}]} {
    %c0 = arith.constant 0 : index
    %c0_0 = arith.constant 0 : index
    %c0_1 = arith.constant 0 : index
    %0 = vector.load %arg1[%c0, %c0_0, %c0_1] : memref<1x64x24xf32, #tpu.memory_space<vmem>>, vector<1x64x24xf32>
    %1 = vector.shape_cast %0 : vector<1x64x24xf32> to vector<64x24xf32>
    %c0_2 = arith.constant 0 : index
    %c0_3 = arith.constant 0 : index
    %c0_4 = arith.constant 0 : index
    %2 = vector.load %arg2[%c0_2, %c0_3, %c0_4] : memref<2x64x64xf32, #tpu.memory_space<vmem>>, vector<1x64x64xf32>
    %3 = vector.shape_cast %2 : vector<1x64x64xf32> to vector<64x64xf32>
    %c1 = arith.constant 1 : index
    %c0_5 = arith.constant 0 : index
    %c0_6 = arith.constant 0 : index
    %4 = vector.load %arg2[%c1, %c0_5, %c0_6] : memref<2x64x64xf32, #tpu.memory_space<vmem>>, vector<1x64x64xf32>
    %5 = vector.shape_cast %4 : vector<1x64x64xf32> to vector<64x64xf32>
    %6 = vector.extract_strided_slice %1 {offsets = [0, 0], sizes = [64, 2], strides = [1, 1]} : vector<64x24xf32> to vector<64x2xf32>
    %cst = arith.constant 0.707106769 : f32
    %7 = vector.broadcast %cst : f32 to vector<64x2xf32>
    %8 = arith.mulf %6, %7 : vector<64x2xf32>
    %9 = vector.extract_strided_slice %1 {offsets = [0, 8], sizes = [64, 2], strides = [1, 1]} : vector<64x24xf32> to vector<64x2xf32>
    %10 = vector.extract_strided_slice %1 {offsets = [0, 16], sizes = [64, 2], strides = [1, 1]} : vector<64x24xf32> to vector<64x2xf32>
    %cst_7 = arith.constant dense<0.000000e+00> : vector<64x64xf32>
    %11 = tpu.matmul %9, %8, %cst_7 {dimension_numbers = #tpu.dot_dimension_numbers<[1], [1], [0], [0], [0, 0, 1, 0], [], []>} : vector<64x2xf32>, vector<64x2xf32>, vector<64x64xf32> -> vector<64x64xf32>
    %cst_8 = arith.constant 0.000000e+00 : f32
    %12 = vector.broadcast %cst_8 : f32 to vector<64x64xf32>
    %13 = vector.extract_strided_slice %8 {offsets = [0, 0], sizes = [64, 1], strides = [1, 1]} : vector<64x2xf32> to vector<64x1xf32>
    %14 = vector.broadcast %13 : vector<64x1xf32> to vector<64x64xf32>
    %15 = arith.mulf %14, %3 : vector<64x64xf32>
    %16 = arith.addf %12, %15 : vector<64x64xf32>
    %17 = vector.extract_strided_slice %8 {offsets = [0, 1], sizes = [64, 1], strides = [1, 1]} : vector<64x2xf32> to vector<64x1xf32>
    %18 = vector.broadcast %17 : vector<64x1xf32> to vector<64x64xf32>
    %19 = arith.mulf %18, %5 : vector<64x64xf32>
    %20 = arith.addf %16, %19 : vector<64x64xf32>
    %21 = arith.addf %11, %20 : vector<64x64xf32>
    %cst_9 = arith.constant dense<0xFF800000> : vector<64xf32>
    %22 = vector.multi_reduction <maximumf>, %21, %cst_9 [1] : vector<64x64xf32> to vector<64xf32>
    %23 = vector.shape_cast %22 : vector<64xf32> to vector<64x1xf32>
    %24 = vector.broadcast %23 : vector<64x1xf32> to vector<64x64xf32>
    %25 = arith.subf %21, %24 : vector<64x64xf32>
    %26 = math.exp %25 : vector<64x64xf32>
    %cst_10 = arith.constant dense<0.000000e+00> : vector<64xf32>
    %27 = vector.multi_reduction <add>, %26, %cst_10 [1] : vector<64x64xf32> to vector<64xf32>
    %28 = vector.shape_cast %27 : vector<64xf32> to vector<64x1xf32>
    %29 = vector.broadcast %28 : vector<64x1xf32> to vector<64x64xf32>
    %30 = arith.divf %26, %29 : vector<64x64xf32>
    %cst_11 = arith.constant dense<0.000000e+00> : vector<2x64xf32>
    %31 = tpu.matmul %10, %30, %cst_11 {dimension_numbers = #tpu.dot_dimension_numbers<[0], [0], [1], [1], [0, 1, 1, 1], [], []>} : vector<64x2xf32>, vector<64x64xf32>, vector<2x64xf32> -> vector<2x64xf32>
    %c0_12 = arith.constant 0 : index
    %c0_13 = arith.constant 0 : index
    %c0_14 = arith.constant 0 : index
    %c0_15 = arith.constant 0 : index
    %32 = vector.load %arg3[%c0_12, %c0_13, %c0_14, %c0_15] : memref<1x4x2x64xf32, #tpu.memory_space<vmem>>, vector<1x1x2x64xf32>
    %33 = vector.shape_cast %32 : vector<1x1x2x64xf32> to vector<2x64xf32>
    %34 = vector.shape_cast %31 : vector<2x64xf32> to vector<1x1x2x64xf32>
    tpu.vector_store %arg3[%c0_12, %c0_13, %c0_14, %c0_15], %34 {strides = array<i32>} : memref<1x4x2x64xf32, #tpu.memory_space<vmem>>, vector<1x1x2x64xf32>,
    %35 = vector.extract_strided_slice %1 {offsets = [0, 2], sizes = [64, 2], strides = [1, 1]} : vector<64x24xf32> to vector<64x2xf32>
    %cst_16 = arith.constant 0.707106769 : f32
    %36 = vector.broadcast %cst_16 : f32 to vector<64x2xf32>
    %37 = arith.mulf %35, %36 : vector<64x2xf32>
    %38 = vector.extract_strided_slice %1 {offsets = [0, 10], sizes = [64, 2], strides = [1, 1]} : vector<64x24xf32> to vector<64x2xf32>
    %39 = vector.extract_strided_slice %1 {offsets = [0, 18], sizes = [64, 2], strides = [1, 1]} : vector<64x24xf32> to vector<64x2xf32>
    %cst_17 = arith.constant dense<0.000000e+00> : vector<64x64xf32>
    %40 = tpu.matmul %38, %37, %cst_17 {dimension_numbers = #tpu.dot_dimension_numbers<[1], [1], [0], [0], [0, 0, 1, 0], [], []>} : vector<64x2xf32>, vector<64x2xf32>, vector<64x64xf32> -> vector<64x64xf32>
    %cst_18 = arith.constant 0.000000e+00 : f32
    %41 = vector.broadcast %cst_18 : f32 to vector<64x64xf32>
    %42 = vector.extract_strided_slice %37 {offsets = [0, 0], sizes = [64, 1], strides = [1, 1]} : vector<64x2xf32> to vector<64x1xf32>
    %43 = vector.broadcast %42 : vector<64x1xf32> to vector<64x64xf32>
    %44 = arith.mulf %43, %3 : vector<64x64xf32>
    %45 = arith.addf %41, %44 : vector<64x64xf32>
    %46 = vector.extract_strided_slice %37 {offsets = [0, 1], sizes = [64, 1], strides = [1, 1]} : vector<64x2xf32> to vector<64x1xf32>
    %47 = vector.broadcast %46 : vector<64x1xf32> to vector<64x64xf32>
    %48 = arith.mulf %47, %5 : vector<64x64xf32>
    %49 = arith.addf %45, %48 : vector<64x64xf32>
    %50 = arith.addf %40, %49 : vector<64x64xf32>
    %cst_19 = arith.constant dense<0xFF800000> : vector<64xf32>
    %51 = vector.multi_reduction <maximumf>, %50, %cst_19 [1] : vector<64x64xf32> to vector<64xf32>
    %52 = vector.shape_cast %51 : vector<64xf32> to vector<64x1xf32>
    %53 = vector.broadcast %52 : vector<64x1xf32> to vector<64x64xf32>
    %54 = arith.subf %50, %53 : vector<64x64xf32>
    %55 = math.exp %54 : vector<64x64xf32>
    %cst_20 = arith.constant dense<0.000000e+00> : vector<64xf32>
    %56 = vector.multi_reduction <add>, %55, %cst_20 [1] : vector<64x64xf32> to vector<64xf32>
    %57 = vector.shape_cast %56 : vector<64xf32> to vector<64x1xf32>
    %58 = vector.broadcast %57 : vector<64x1xf32> to vector<64x64xf32>
    %59 = arith.divf %55, %58 : vector<64x64xf32>
    %cst_21 = arith.constant dense<0.000000e+00> : vector<2x64xf32>
    %60 = tpu.matmul %39, %59, %cst_21 {dimension_numbers = #tpu.dot_dimension_numbers<[0], [0], [1], [1], [0, 1, 1, 1], [], []>} : vector<64x2xf32>, vector<64x64xf32>, vector<2x64xf32> -> vector<2x64xf32>
    %c0_22 = arith.constant 0 : index
    %c1_23 = arith.constant 1 : index
    %c0_24 = arith.constant 0 : index
    %c0_25 = arith.constant 0 : index
    %61 = vector.load %arg3[%c0_22, %c1_23, %c0_24, %c0_25] : memref<1x4x2x64xf32, #tpu.memory_space<vmem>>, vector<1x1x2x64xf32>
    %62 = vector.shape_cast %61 : vector<1x1x2x64xf32> to vector<2x64xf32>
    %63 = vector.shape_cast %60 : vector<2x64xf32> to vector<1x1x2x64xf32>
    tpu.vector_store %arg3[%c0_22, %c1_23, %c0_24, %c0_25], %63 {strides = array<i32>} : memref<1x4x2x64xf32, #tpu.memory_space<vmem>>, vector<1x1x2x64xf32>,
    %64 = vector.extract_strided_slice %1 {offsets = [0, 4], sizes = [64, 2], strides = [1, 1]} : vector<64x24xf32> to vector<64x2xf32>
    %cst_26 = arith.constant 0.707106769 : f32
    %65 = vector.broadcast %cst_26 : f32 to vector<64x2xf32>
    %66 = arith.mulf %64, %65 : vector<64x2xf32>
    %67 = vector.extract_strided_slice %1 {offsets = [0, 12], sizes = [64, 2], strides = [1, 1]} : vector<64x24xf32> to vector<64x2xf32>
    %68 = vector.extract_strided_slice %1 {offsets = [0, 20], sizes = [64, 2], strides = [1, 1]} : vector<64x24xf32> to vector<64x2xf32>
    %cst_27 = arith.constant dense<0.000000e+00> : vector<64x64xf32>
    %69 = tpu.matmul %67, %66, %cst_27 {dimension_numbers = #tpu.dot_dimension_numbers<[1], [1], [0], [0], [0, 0, 1, 0], [], []>} : vector<64x2xf32>, vector<64x2xf32>, vector<64x64xf32> -> vector<64x64xf32>
    %cst_28 = arith.constant 0.000000e+00 : f32
    %70 = vector.broadcast %cst_28 : f32 to vector<64x64xf32>
    %71 = vector.extract_strided_slice %66 {offsets = [0, 0], sizes = [64, 1], strides = [1, 1]} : vector<64x2xf32> to vector<64x1xf32>
    %72 = vector.broadcast %71 : vector<64x1xf32> to vector<64x64xf32>
    %73 = arith.mulf %72, %3 : vector<64x64xf32>
    %74 = arith.addf %70, %73 : vector<64x64xf32>
    %75 = vector.extract_strided_slice %66 {offsets = [0, 1], sizes = [64, 1], strides = [1, 1]} : vector<64x2xf32> to vector<64x1xf32>
    %76 = vector.broadcast %75 : vector<64x1xf32> to vector<64x64xf32>
    %77 = arith.mulf %76, %5 : vector<64x64xf32>
    %78 = arith.addf %74, %77 : vector<64x64xf32>
    %79 = arith.addf %69, %78 : vector<64x64xf32>
    %cst_29 = arith.constant dense<0xFF800000> : vector<64xf32>
    %80 = vector.multi_reduction <maximumf>, %79, %cst_29 [1] : vector<64x64xf32> to vector<64xf32>
    %81 = vector.shape_cast %80 : vector<64xf32> to vector<64x1xf32>
    %82 = vector.broadcast %81 : vector<64x1xf32> to vector<64x64xf32>
    %83 = arith.subf %79, %82 : vector<64x64xf32>
    %84 = math.exp %83 : vector<64x64xf32>
    %cst_30 = arith.constant dense<0.000000e+00> : vector<64xf32>
    %85 = vector.multi_reduction <add>, %84, %cst_30 [1] : vector<64x64xf32> to vector<64xf32>
    %86 = vector.shape_cast %85 : vector<64xf32> to vector<64x1xf32>
    %87 = vector.broadcast %86 : vector<64x1xf32> to vector<64x64xf32>
    %88 = arith.divf %84, %87 : vector<64x64xf32>
    %cst_31 = arith.constant dense<0.000000e+00> : vector<2x64xf32>
    %89 = tpu.matmul %68, %88, %cst_31 {dimension_numbers = #tpu.dot_dimension_numbers<[0], [0], [1], [1], [0, 1, 1, 1], [], []>} : vector<64x2xf32>, vector<64x64xf32>, vector<2x64xf32> -> vector<2x64xf32>
    %c0_32 = arith.constant 0 : index
    %c2 = arith.constant 2 : index
    %c0_33 = arith.constant 0 : index
    %c0_34 = arith.constant 0 : index
    %90 = vector.load %arg3[%c0_32, %c2, %c0_33, %c0_34] : memref<1x4x2x64xf32, #tpu.memory_space<vmem>>, vector<1x1x2x64xf32>
    %91 = vector.shape_cast %90 : vector<1x1x2x64xf32> to vector<2x64xf32>
    %92 = vector.shape_cast %89 : vector<2x64xf32> to vector<1x1x2x64xf32>
    tpu.vector_store %arg3[%c0_32, %c2, %c0_33, %c0_34], %92 {strides = array<i32>} : memref<1x4x2x64xf32, #tpu.memory_space<vmem>>, vector<1x1x2x64xf32>,
    %93 = vector.extract_strided_slice %1 {offsets = [0, 6], sizes = [64, 2], strides = [1, 1]} : vector<64x24xf32> to vector<64x2xf32>
    %cst_35 = arith.constant 0.707106769 : f32
    %94 = vector.broadcast %cst_35 : f32 to vector<64x2xf32>
    %95 = arith.mulf %93, %94 : vector<64x2xf32>
    %96 = vector.extract_strided_slice %1 {offsets = [0, 14], sizes = [64, 2], strides = [1, 1]} : vector<64x24xf32> to vector<64x2xf32>
    %97 = vector.extract_strided_slice %1 {offsets = [0, 22], sizes = [64, 2], strides = [1, 1]} : vector<64x24xf32> to vector<64x2xf32>
    %cst_36 = arith.constant dense<0.000000e+00> : vector<64x64xf32>
    %98 = tpu.matmul %96, %95, %cst_36 {dimension_numbers = #tpu.dot_dimension_numbers<[1], [1], [0], [0], [0, 0, 1, 0], [], []>} : vector<64x2xf32>, vector<64x2xf32>, vector<64x64xf32> -> vector<64x64xf32>
    %cst_37 = arith.constant 0.000000e+00 : f32
    %99 = vector.broadcast %cst_37 : f32 to vector<64x64xf32>
    %100 = vector.extract_strided_slice %95 {offsets = [0, 0], sizes = [64, 1], strides = [1, 1]} : vector<64x2xf32> to vector<64x1xf32>
    %101 = vector.broadcast %100 : vector<64x1xf32> to vector<64x64xf32>
    %102 = arith.mulf %101, %3 : vector<64x64xf32>
    %103 = arith.addf %99, %102 : vector<64x64xf32>
    %104 = vector.extract_strided_slice %95 {offsets = [0, 1], sizes = [64, 1], strides = [1, 1]} : vector<64x2xf32> to vector<64x1xf32>
    %105 = vector.broadcast %104 : vector<64x1xf32> to vector<64x64xf32>
    %106 = arith.mulf %105, %5 : vector<64x64xf32>
    %107 = arith.addf %103, %106 : vector<64x64xf32>
    %108 = arith.addf %98, %107 : vector<64x64xf32>
    %cst_38 = arith.constant dense<0xFF800000> : vector<64xf32>
    %109 = vector.multi_reduction <maximumf>, %108, %cst_38 [1] : vector<64x64xf32> to vector<64xf32>
    %110 = vector.shape_cast %109 : vector<64xf32> to vector<64x1xf32>
    %111 = vector.broadcast %110 : vector<64x1xf32> to vector<64x64xf32>
    %112 = arith.subf %108, %111 : vector<64x64xf32>
    %113 = math.exp %112 : vector<64x64xf32>
    %cst_39 = arith.constant dense<0.000000e+00> : vector<64xf32>
    %114 = vector.multi_reduction <add>, %113, %cst_39 [1] : vector<64x64xf32> to vector<64xf32>
    %115 = vector.shape_cast %114 : vector<64xf32> to vector<64x1xf32>
    %116 = vector.broadcast %115 : vector<64x1xf32> to vector<64x64xf32>
    %117 = arith.divf %113, %116 : vector<64x64xf32>
    %cst_40 = arith.constant dense<0.000000e+00> : vector<2x64xf32>
    %118 = tpu.matmul %97, %117, %cst_40 {dimension_numbers = #tpu.dot_dimension_numbers<[0], [0], [1], [1], [0, 1, 1, 1], [], []>} : vector<64x2xf32>, vector<64x64xf32>, vector<2x64xf32> -> vector<2x64xf32>
    %c0_41 = arith.constant 0 : index
    %c3 = arith.constant 3 : index
    %c0_42 = arith.constant 0 : index
    %c0_43 = arith.constant 0 : index
    %119 = vector.load %arg3[%c0_41, %c3, %c0_42, %c0_43] : memref<1x4x2x64xf32, #tpu.memory_space<vmem>>, vector<1x1x2x64xf32>
    %120 = vector.shape_cast %119 : vector<1x1x2x64xf32> to vector<2x64xf32>
    %121 = vector.shape_cast %118 : vector<2x64xf32> to vector<1x1x2x64xf32>
    tpu.vector_store %arg3[%c0_41, %c3, %c0_42, %c0_43], %121 {strides = array<i32>} : memref<1x4x2x64xf32, #tpu.memory_space<vmem>>, vector<1x1x2x64xf32>,
    return
  }
  func.func @transform_0(%arg0: i32) -> (i32, i32, i32) {
    %c0_i32 = arith.constant 0 : i32
    %c0_i32_0 = arith.constant 0 : i32
    %c0_i32_1 = arith.constant 0 : i32
    return %arg0, %c0_i32, %c0_i32_0 : i32, i32, i32
  }
  func.func @transform_1(%arg0: i32) -> (i32, i32, i32) {
    %c0_i32 = arith.constant 0 : i32
    %c0_i32_0 = arith.constant 0 : i32
    %c0_i32_1 = arith.constant 0 : i32
    %c0_i32_2 = arith.constant 0 : i32
    return %c0_i32, %c0_i32_0, %c0_i32_1 : i32, i32, i32
  }
  func.func @transform_2(%arg0: i32) -> (i32, i32, i32, i32) {
    %c0_i32 = arith.constant 0 : i32
    %c0_i32_0 = arith.constant 0 : i32
    %c0_i32_1 = arith.constant 0 : i32
    %c0_i32_2 = arith.constant 0 : i32
    return %arg0, %c0_i32, %c0_i32_0, %c0_i32_1 : i32, i32, i32, i32
  }
}

module attributes {stable_mosaic.version = 11 : i64} {
  func.func @_epilogue_kernel(%arg0: i32, %arg1: memref<1x64x80xf32, #tpu.memory_space<vmem>>, %arg2: memref<1x64x72xf32, #tpu.memory_space<vmem>>, %arg3: memref<1x64x8xf32, #tpu.memory_space<vmem>>, %arg4: memref<8x8xf32, #tpu.memory_space<vmem>>, %arg5: memref<1x8xf32, #tpu.memory_space<vmem>>, %arg6: memref<1x80xf32, #tpu.memory_space<vmem>>, %arg7: memref<1x80xf32, #tpu.memory_space<vmem>>, %arg8: memref<80x20xf32, #tpu.memory_space<vmem>>, %arg9: memref<1x20xf32, #tpu.memory_space<vmem>>, %arg10: memref<1x20xf32, #tpu.memory_space<vmem>>, %arg11: memref<1x20xf32, #tpu.memory_space<vmem>>, %arg12: memref<1x64x20xf32, #tpu.memory_space<vmem>>) attributes {dimension_semantics = [#tpu.dimension_semantics<parallel>], iteration_bounds = array<i64: 2>, scalar_prefetch = 0 : i64, scratch_operands = 0 : i64, tpu.core_type = #tpu.core_type<tc>, window_params = [{transform_indices = @transform_0, window_bounds = array<i64: 1, 64, 80>}, {transform_indices = @transform_1, window_bounds = array<i64: 1, 64, 72>}, {transform_indices = @transform_2, window_bounds = array<i64: 1, 64, 8>}, {pipeline_mode = #tpu.pipeline_mode<synchronous>, transform_indices = @transform_3, window_bounds = array<i64: 8, 8>}, {pipeline_mode = #tpu.pipeline_mode<synchronous>, transform_indices = @transform_4, window_bounds = array<i64: 1, 8>}, {pipeline_mode = #tpu.pipeline_mode<synchronous>, transform_indices = @transform_5, window_bounds = array<i64: 1, 80>}, {pipeline_mode = #tpu.pipeline_mode<synchronous>, transform_indices = @transform_6, window_bounds = array<i64: 1, 80>}, {pipeline_mode = #tpu.pipeline_mode<synchronous>, transform_indices = @transform_7, window_bounds = array<i64: 80, 20>}, {pipeline_mode = #tpu.pipeline_mode<synchronous>, transform_indices = @transform_8, window_bounds = array<i64: 1, 20>}, {pipeline_mode = #tpu.pipeline_mode<synchronous>, transform_indices = @transform_9, window_bounds = array<i64: 1, 20>}, {pipeline_mode = #tpu.pipeline_mode<synchronous>, transform_indices = @transform_10, window_bounds = array<i64: 1, 20>}, {transform_indices = @transform_11, window_bounds = array<i64: 1, 64, 20>}]} {
    %c0 = arith.constant 0 : index
    %c0_0 = arith.constant 0 : index
    %0 = vector.load %arg6[%c0, %c0_0] : memref<1x80xf32, #tpu.memory_space<vmem>>, vector<1x80xf32>
    %c0_1 = arith.constant 0 : index
    %c0_2 = arith.constant 0 : index
    %1 = vector.load %arg7[%c0_1, %c0_2] : memref<1x80xf32, #tpu.memory_space<vmem>>, vector<1x80xf32>
    %c0_3 = arith.constant 0 : index
    %c0_4 = arith.constant 0 : index
    %c0_5 = arith.constant 0 : index
    %2 = vector.load %arg3[%c0_3, %c0_4, %c0_5] : memref<1x64x8xf32, #tpu.memory_space<vmem>>, vector<1x64x8xf32>
    %3 = vector.shape_cast %2 : vector<1x64x8xf32> to vector<64x8xf32>
    %c0_6 = arith.constant 0 : index
    %c0_7 = arith.constant 0 : index
    %4 = vector.load %arg4[%c0_6, %c0_7] : memref<8x8xf32, #tpu.memory_space<vmem>>, vector<8x8xf32>
    %cst = arith.constant dense<0.000000e+00> : vector<64x8xf32>
    %5 = tpu.matmul %3, %4, %cst {dimension_numbers = #tpu.dot_dimension_numbers<[1], [0], [0], [1], [0, 0, 1, 1], [], []>} : vector<64x8xf32>, vector<8x8xf32>, vector<64x8xf32> -> vector<64x8xf32>
    %c0_8 = arith.constant 0 : index
    %c0_9 = arith.constant 0 : index
    %6 = vector.load %arg5[%c0_8, %c0_9] : memref<1x8xf32, #tpu.memory_space<vmem>>, vector<1x8xf32>
    %7 = vector.broadcast %6 : vector<1x8xf32> to vector<64x8xf32>
    %8 = arith.addf %5, %7 : vector<64x8xf32>
    %c0_10 = arith.constant 0 : index
    %c0_11 = arith.constant 0 : index
    %c0_12 = arith.constant 0 : index
    %9 = vector.load %arg1[%c0_10, %c0_11, %c0_12] : memref<1x64x80xf32, #tpu.memory_space<vmem>>, vector<1x64x80xf32>
    %10 = vector.shape_cast %9 : vector<1x64x80xf32> to vector<64x80xf32>
    %c0_13 = arith.constant 0 : index
    %c0_14 = arith.constant 0 : index
    %c0_15 = arith.constant 0 : index
    %11 = vector.load %arg2[%c0_13, %c0_14, %c0_15] : memref<1x64x72xf32, #tpu.memory_space<vmem>>, vector<1x64x72xf32>
    %12 = vector.shape_cast %11 : vector<1x64x72xf32> to vector<64x72xf32>
    %13 = vector.extract_strided_slice %0 {offsets = [0, 0], sizes = [1, 72], strides = [1, 1]} : vector<1x80xf32> to vector<1x72xf32>
    %14 = vector.broadcast %13 : vector<1x72xf32> to vector<64x72xf32>
    %15 = arith.mulf %12, %14 : vector<64x72xf32>
    %16 = vector.extract_strided_slice %1 {offsets = [0, 0], sizes = [1, 72], strides = [1, 1]} : vector<1x80xf32> to vector<1x72xf32>
    %17 = vector.broadcast %16 : vector<1x72xf32> to vector<64x72xf32>
    %18 = arith.addf %15, %17 : vector<64x72xf32>
    %cst_16 = arith.constant 0.000000e+00 : f32
    %19 = vector.broadcast %cst_16 : f32 to vector<64x72xf32>
    %20 = arith.maximumf %18, %19 : vector<64x72xf32>
    %21 = math.absf %18 : vector<64x72xf32>
    %cst_17 = arith.constant 0.000000e+00 : f32
    %22 = vector.broadcast %cst_17 : f32 to vector<64x72xf32>
    %23 = arith.subf %22, %21 : vector<64x72xf32>
    %24 = math.exp %23 : vector<64x72xf32>
    %cst_18 = arith.constant 1.000000e+00 : f32
    %25 = vector.broadcast %cst_18 : f32 to vector<64x72xf32>
    %26 = arith.addf %25, %24 : vector<64x72xf32>
    %27 = math.log %26 : vector<64x72xf32>
    %28 = arith.addf %20, %27 : vector<64x72xf32>
    %29 = math.tanh %28 : vector<64x72xf32>
    %30 = arith.mulf %18, %29 : vector<64x72xf32>
    %31 = vector.extract_strided_slice %0 {offsets = [0, 72], sizes = [1, 8], strides = [1, 1]} : vector<1x80xf32> to vector<1x8xf32>
    %32 = vector.broadcast %31 : vector<1x8xf32> to vector<64x8xf32>
    %33 = arith.mulf %8, %32 : vector<64x8xf32>
    %34 = vector.extract_strided_slice %1 {offsets = [0, 72], sizes = [1, 8], strides = [1, 1]} : vector<1x80xf32> to vector<1x8xf32>
    %35 = vector.broadcast %34 : vector<1x8xf32> to vector<64x8xf32>
    %36 = arith.addf %33, %35 : vector<64x8xf32>
    %cst_19 = arith.constant 0.000000e+00 : f32
    %37 = vector.broadcast %cst_19 : f32 to vector<64x8xf32>
    %38 = arith.maximumf %36, %37 : vector<64x8xf32>
    %39 = math.absf %36 : vector<64x8xf32>
    %cst_20 = arith.constant 0.000000e+00 : f32
    %40 = vector.broadcast %cst_20 : f32 to vector<64x8xf32>
    %41 = arith.subf %40, %39 : vector<64x8xf32>
    %42 = math.exp %41 : vector<64x8xf32>
    %cst_21 = arith.constant 1.000000e+00 : f32
    %43 = vector.broadcast %cst_21 : f32 to vector<64x8xf32>
    %44 = arith.addf %43, %42 : vector<64x8xf32>
    %45 = math.log %44 : vector<64x8xf32>
    %46 = arith.addf %38, %45 : vector<64x8xf32>
    %47 = math.tanh %46 : vector<64x8xf32>
    %48 = arith.mulf %36, %47 : vector<64x8xf32>
    %49 = vector.extract_strided_slice %10 {offsets = [0, 0], sizes = [64, 72], strides = [1, 1]} : vector<64x80xf32> to vector<64x72xf32>
    %50 = arith.addf %49, %30 : vector<64x72xf32>
    %51 = vector.extract_strided_slice %10 {offsets = [0, 72], sizes = [64, 8], strides = [1, 1]} : vector<64x80xf32> to vector<64x8xf32>
    %52 = arith.addf %51, %48 : vector<64x8xf32>
    %c0_22 = arith.constant 0 : index
    %c0_23 = arith.constant 0 : index
    %53 = vector.load %arg8[%c0_22, %c0_23] : memref<80x20xf32, #tpu.memory_space<vmem>>, vector<72x20xf32>
    %cst_24 = arith.constant dense<0.000000e+00> : vector<64x20xf32>
    %54 = tpu.matmul %50, %53, %cst_24 {dimension_numbers = #tpu.dot_dimension_numbers<[1], [0], [0], [1], [0, 0, 1, 1], [], []>} : vector<64x72xf32>, vector<72x20xf32>, vector<64x20xf32> -> vector<64x20xf32>
    %c72 = arith.constant 72 : index
    %c0_25 = arith.constant 0 : index
    %55 = vector.load %arg8[%c72, %c0_25] : memref<80x20xf32, #tpu.memory_space<vmem>>, vector<8x20xf32>
    %cst_26 = arith.constant dense<0.000000e+00> : vector<64x20xf32>
    %56 = tpu.matmul %52, %55, %cst_26 {dimension_numbers = #tpu.dot_dimension_numbers<[1], [0], [0], [1], [0, 0, 1, 1], [], []>} : vector<64x8xf32>, vector<8x20xf32>, vector<64x20xf32> -> vector<64x20xf32>
    %57 = arith.addf %54, %56 : vector<64x20xf32>
    %c0_27 = arith.constant 0 : index
    %c0_28 = arith.constant 0 : index
    %58 = vector.load %arg9[%c0_27, %c0_28] : memref<1x20xf32, #tpu.memory_space<vmem>>, vector<1x20xf32>
    %59 = vector.broadcast %58 : vector<1x20xf32> to vector<64x20xf32>
    %60 = arith.addf %57, %59 : vector<64x20xf32>
    %c0_29 = arith.constant 0 : index
    %c0_30 = arith.constant 0 : index
    %61 = vector.load %arg10[%c0_29, %c0_30] : memref<1x20xf32, #tpu.memory_space<vmem>>, vector<1x20xf32>
    %62 = vector.broadcast %61 : vector<1x20xf32> to vector<64x20xf32>
    %63 = arith.mulf %60, %62 : vector<64x20xf32>
    %c0_31 = arith.constant 0 : index
    %c0_32 = arith.constant 0 : index
    %64 = vector.load %arg11[%c0_31, %c0_32] : memref<1x20xf32, #tpu.memory_space<vmem>>, vector<1x20xf32>
    %65 = vector.broadcast %64 : vector<1x20xf32> to vector<64x20xf32>
    %66 = arith.addf %63, %65 : vector<64x20xf32>
    %cst_33 = arith.constant 0.000000e+00 : f32
    %67 = vector.broadcast %cst_33 : f32 to vector<64x20xf32>
    %68 = arith.maximumf %66, %67 : vector<64x20xf32>
    %69 = math.absf %66 : vector<64x20xf32>
    %cst_34 = arith.constant 0.000000e+00 : f32
    %70 = vector.broadcast %cst_34 : f32 to vector<64x20xf32>
    %71 = arith.subf %70, %69 : vector<64x20xf32>
    %72 = math.exp %71 : vector<64x20xf32>
    %cst_35 = arith.constant 1.000000e+00 : f32
    %73 = vector.broadcast %cst_35 : f32 to vector<64x20xf32>
    %74 = arith.addf %73, %72 : vector<64x20xf32>
    %75 = math.log %74 : vector<64x20xf32>
    %76 = arith.addf %68, %75 : vector<64x20xf32>
    %77 = math.tanh %76 : vector<64x20xf32>
    %78 = arith.mulf %66, %77 : vector<64x20xf32>
    %c0_36 = arith.constant 0 : index
    %c0_37 = arith.constant 0 : index
    %c0_38 = arith.constant 0 : index
    %79 = vector.load %arg12[%c0_36, %c0_37, %c0_38] : memref<1x64x20xf32, #tpu.memory_space<vmem>>, vector<1x64x20xf32>
    %80 = vector.shape_cast %79 : vector<1x64x20xf32> to vector<64x20xf32>
    %81 = vector.shape_cast %78 : vector<64x20xf32> to vector<1x64x20xf32>
    tpu.vector_store %arg12[%c0_36, %c0_37, %c0_38], %81 {strides = array<i32>} : memref<1x64x20xf32, #tpu.memory_space<vmem>>, vector<1x64x20xf32>,
    return
  }
  func.func @transform_0(%arg0: i32) -> (i32, i32, i32) {
    %c0_i32 = arith.constant 0 : i32
    %c0_i32_0 = arith.constant 0 : i32
    %c0_i32_1 = arith.constant 0 : i32
    return %arg0, %c0_i32, %c0_i32_0 : i32, i32, i32
  }
  func.func @transform_1(%arg0: i32) -> (i32, i32, i32) {
    %c0_i32 = arith.constant 0 : i32
    %c0_i32_0 = arith.constant 0 : i32
    %c0_i32_1 = arith.constant 0 : i32
    return %arg0, %c0_i32, %c0_i32_0 : i32, i32, i32
  }
  func.func @transform_2(%arg0: i32) -> (i32, i32, i32) {
    %c0_i32 = arith.constant 0 : i32
    %c0_i32_0 = arith.constant 0 : i32
    %c0_i32_1 = arith.constant 0 : i32
    return %arg0, %c0_i32, %c0_i32_0 : i32, i32, i32
  }
  func.func @transform_3(%arg0: i32) -> (i32, i32) {
    %c0_i32 = arith.constant 0 : i32
    %c0_i32_0 = arith.constant 0 : i32
    %c0_i32_1 = arith.constant 0 : i32
    return %c0_i32, %c0_i32_0 : i32, i32
  }
  func.func @transform_4(%arg0: i32) -> (i32, i32) {
    %c0_i32 = arith.constant 0 : i32
    %c0_i32_0 = arith.constant 0 : i32
    %c0_i32_1 = arith.constant 0 : i32
    return %c0_i32, %c0_i32_0 : i32, i32
  }
  func.func @transform_5(%arg0: i32) -> (i32, i32) {
    %c0_i32 = arith.constant 0 : i32
    %c0_i32_0 = arith.constant 0 : i32
    %c0_i32_1 = arith.constant 0 : i32
    return %c0_i32, %c0_i32_0 : i32, i32
  }
  func.func @transform_6(%arg0: i32) -> (i32, i32) {
    %c0_i32 = arith.constant 0 : i32
    %c0_i32_0 = arith.constant 0 : i32
    %c0_i32_1 = arith.constant 0 : i32
    return %c0_i32, %c0_i32_0 : i32, i32
  }
  func.func @transform_7(%arg0: i32) -> (i32, i32) {
    %c0_i32 = arith.constant 0 : i32
    %c0_i32_0 = arith.constant 0 : i32
    %c0_i32_1 = arith.constant 0 : i32
    return %c0_i32, %c0_i32_0 : i32, i32
  }
  func.func @transform_8(%arg0: i32) -> (i32, i32) {
    %c0_i32 = arith.constant 0 : i32
    %c0_i32_0 = arith.constant 0 : i32
    %c0_i32_1 = arith.constant 0 : i32
    return %c0_i32, %c0_i32_0 : i32, i32
  }
  func.func @transform_9(%arg0: i32) -> (i32, i32) {
    %c0_i32 = arith.constant 0 : i32
    %c0_i32_0 = arith.constant 0 : i32
    %c0_i32_1 = arith.constant 0 : i32
    return %c0_i32, %c0_i32_0 : i32, i32
  }
  func.func @transform_10(%arg0: i32) -> (i32, i32) {
    %c0_i32 = arith.constant 0 : i32
    %c0_i32_0 = arith.constant 0 : i32
    %c0_i32_1 = arith.constant 0 : i32
    return %c0_i32, %c0_i32_0 : i32, i32
  }
  func.func @transform_11(%arg0: i32) -> (i32, i32, i32) {
    %c0_i32 = arith.constant 0 : i32
    %c0_i32_0 = arith.constant 0 : i32
    %c0_i32_1 = arith.constant 0 : i32
    return %arg0, %c0_i32, %c0_i32_0 : i32, i32, i32
  }
}

</mosaic_0001>

<llo_original>
// kernel: aa_inverted_bottleneck_forward.4
$region0: #{aa_inverted_bottleneck_forward.4}
  #allocation0 [shape = 'u32[]', space=smem, size = 0x4, offset = 0x4, fixed_abs, tag = 'smem constant byte address 0x4 - core index']
  #allocation1 [shape = 'u32[72,128]{1,0:T(1,128)}', space=vmem, size = 0x9000, scoped, tag = 'internal scratch']
  %s0 = inlined_call_operand.vmem [shape: f32[2,64,24], index: 0, kind: input, shape index: {}]
  %s1 = inlined_call_operand.vmem [shape: f32[2,64,64], index: 1, kind: input, shape index: {}]
  %s2 = inlined_call_operand.vmem [shape: f32[2,4,2,64], index: 2, kind: output, shape index: {}]
  %s3 = sld [smem:[#allocation0]]
  $region41: #{aa_inverted_bottleneck_forward.4} parent=0
    _
  %s5 = ssub.s32 1, %s3
  %s6 = scalar_select 0, %s5, %s3
  loop: start=0, step=1, limit=4
  $region2: #{aa_inverted_bottleneck_forward.4} parent=0 // loop_pre_header
    _
  $region3: #{aa_inverted_bottleneck_forward.4} parent=0 // loop_header
    %s8 = sphi 0, %s12
    %p9 = scmp.ge.s32.totalorder %s8, 4
    %s18 = sphi 0, %s20
    %s21 = sphi 0, %s18
    %s22 = sphi 0, %s21
    %s38 = sphi 0, %s22
    %s42 = sphi 0, %s42
    %s44 = sphi 0, %s42
    %s45 = sphi 0, %s44
    %s59 = sphi 0, %s45
    %s65 = sphi 0, %s67
    %s68 = sphi 0, %s65
    %s69 = sphi 0, %s68
    %s85 = sphi 0, %s69
  $region4: #{aa_inverted_bottleneck_forward.4} parent=0 // loop_header_branch
    %11 = sbr.rel (%p9) target = $region8
  $region5: #{aa_inverted_bottleneck_forward.4} parent=0 // loop_body
    %s13 = ssub.s32 %s8, 1
    %s14 = ssub.s32 %s8, 2
    %s15 = sadd.s32 %s8, 1
    %s16 = ssub.s32 %s8, %s15
    %p17 = scmp.eq.s32.totalorder %s16, 0
    %s19 = sadd.s32 %s18, 1
    %s20 = scalar_select %p17, %s18, %s19
    %p23 = pneg %p17
    %p24 = scmp.eq.s32.totalorder %s8, 1
    %p25 = por %p23, %p24
    %p26 = scmp.ne.s32.totalorder %s18, %s21
    %p27 = scmp.eq.s32.totalorder %s8, 0
    %p28 = por %p26, %p27
    %p29 = scmp.ne.s32.totalorder %s18, %s21
    %p30 = scmp.eq.s32.totalorder %s13, 1
    %p31 = por %p29, %p30
    %p32 = scmp.ne.s32.totalorder %s21, %s22
    %p33 = scmp.eq.s32.totalorder %s13, 0
    %p34 = por %p32, %p33
    %p35 = scmp.ne.s32.totalorder %s21, %s22
    %p36 = scmp.eq.s32.totalorder %s14, 1
    %p37 = por %p35, %p36
    %p39 = scmp.ne.s32.totalorder %s22, %s38
    %p40 = scmp.eq.s32.totalorder %s14, 0
    %p41 = por %p39, %p40
    %s43 = sadd.s32 %s42, 1
    %p46 = scmp.eq.s32.totalorder %s8, 1
    %p47 = scmp.ne.s32.totalorder %s42, %s44
    %p48 = scmp.eq.s32.totalorder %s8, 0
    %p49 = por %p47, %p48
    %p50 = scmp.ne.s32.totalorder %s42, %s44
    %p51 = scmp.eq.s32.totalorder %s13, 1
    %p52 = por %p50, %p51
    %p53 = scmp.ne.s32.totalorder %s44, %s45
    %p54 = scmp.eq.s32.totalorder %s13, 0
    %p55 = por %p53, %p54
    %p56 = scmp.ne.s32.totalorder %s44, %s45
    %p57 = scmp.eq.s32.totalorder %s14, 1
    %p58 = por %p56, %p57
    %p60 = scmp.ne.s32.totalorder %s45, %s59
    %p61 = scmp.eq.s32.totalorder %s14, 0
    %p62 = por %p60, %p61
    %s63 = ssub.s32 %s8, %s15
    %p64 = scmp.eq.s32.totalorder %s63, 0
    %s66 = sadd.s32 %s65, 1
    %s67 = scalar_select %p64, %s65, %s66
    %p70 = pneg %p64
    %p71 = scmp.eq.s32.totalorder %s8, 1
    %p72 = por %p70, %p71
    %p73 = scmp.ne.s32.totalorder %s65, %s68
    %p74 = scmp.eq.s32.totalorder %s8, 0
    %p75 = por %p73, %p74
    %p76 = scmp.ne.s32.totalorder %s65, %s68
    %p77 = scmp.eq.s32.totalorder %s13, 1
    %p78 = por %p76, %p77
    %p79 = scmp.ne.s32.totalorder %s68, %s69
    %p80 = scmp.eq.s32.totalorder %s13, 0
    %p81 = por %p79, %p80
    %p82 = scmp.ne.s32.totalorder %s68, %s69
    %p83 = scmp.eq.s32.totalorder %s14, 1
    %p84 = por %p82, %p83
    %p86 = scmp.ne.s32.totalorder %s69, %s85
    %p87 = scmp.eq.s32.totalorder %s14, 0
    %p88 = por %p86, %p87
    %p89 = scmp.le.s32.totalorder 1, %s8
    %p90 = scmp.lt.s32.totalorder %s8, 3
    %p91 = pnand %p89, %p90
    %p92 = pneg %p91
    // Predicated region
    $region9: #{aa_inverted_bottleneck_forward.4} parent=5 // pred_check
      _
    $region10: #{aa_inverted_bottleneck_forward.4} parent=5 // pred_check_branch
      %94 = sbr.rel (%p91) target = $region12
    $region11: #{aa_inverted_bottleneck_forward.4} parent=5 // pred_region
      %s95 = ssub.s32 %s8, 1
      // Predicated region
      $region13: #{aa_inverted_bottleneck_forward.4} parent=11 // pred_check
        %p96 = pneg %p55
      $region14: #{aa_inverted_bottleneck_forward.4} parent=11 // pred_check_branch
        %98 = sbr.rel (%p96) target = $region16
      $region15: #{aa_inverted_bottleneck_forward.4} parent=11 // pred_region
        _
      $region16: #{aa_inverted_bottleneck_forward.4} parent=11 // pred_fallthru
        _
    $region12: #{aa_inverted_bottleneck_forward.4} parent=5 // pred_fallthru
      _
    %p99 = scmp.lt.s32.totalorder %s8, 2
    // Predicated region
    $region17: #{aa_inverted_bottleneck_forward.4} parent=5 // pred_check
      %p100 = pneg %p99
    $region18: #{aa_inverted_bottleneck_forward.4} parent=5 // pred_check_branch
      %102 = sbr.rel (%p100) target = $region20
    $region19: #{aa_inverted_bottleneck_forward.4} parent=5 // pred_region
      // Predicated region
      $region21: #{aa_inverted_bottleneck_forward.4} parent=19 // pred_check
        %p103 = pneg %p28
      $region22: #{aa_inverted_bottleneck_forward.4} parent=19 // pred_check_branch
        %105 = sbr.rel (%p103) target = $region24
      $region23: #{aa_inverted_bottleneck_forward.4} parent=19 // pred_region
        %p106 = scmp.lt.s32.totalorder %s8, 1
        %s107 = scalar_select %p106, %s8, 1
        %s108 = smul.addr %s107, 8
        %s109 = smul.addr %s108, 8
        %s110 = scalar_lea.vmem %s0, %s109
      $region24: #{aa_inverted_bottleneck_forward.4} parent=19 // pred_fallthru
        _
    $region20: #{aa_inverted_bottleneck_forward.4} parent=5 // pred_fallthru
      _
    %p111 = scmp.le.s32.totalorder 1, %s8
    %p112 = scmp.lt.s32.totalorder %s8, 3
    %p113 = pnand %p111, %p112
    %p114 = pneg %p113
    // Predicated region
    $region25: #{aa_inverted_bottleneck_forward.4} parent=5 // pred_check
      _
    $region26: #{aa_inverted_bottleneck_forward.4} parent=5 // pred_check_branch
      %116 = sbr.rel (%p113) target = $region28
    $region27: #{aa_inverted_bottleneck_forward.4} parent=5 // pred_region
      %s117 = ssub.s32 %s8, 1
      %p118 = scmp.lt.s32.totalorder %s13, 1
      %s119 = scalar_select %p118, %s13, 1
      %s120 = smul.addr %s119, 8
      %s121 = smul.addr %s120, 8
      %s122 = scalar_lea.vmem %s0, %s121
      %p123 = pneg %p34
      %p124 = pneg %p31
      %p125 = pneg %p55
      %p126 = pneg %p52
      %p127 = pneg %p81
      %p128 = pneg %p78
      %p129 = scmp.lt.s32.totalorder %s13, 1
      %s130 = scalar_select %p129, %s13, 1
      %s131 = smul.addr %s130, 4
      %s132 = smul.addr %s131, 2
      %s133 = scalar_lea.vmem %s2, %s132
      %p134 = scmp.lt.s32.totalorder %s13, 1
      %s135 = scalar_select %p134, %s13, 1
      %s136 = smul.addr %s135, 8
      %s137 = smul.addr %s136, 8
      %s138 = scalar_lea.vmem %s0, %s137
      %p139 = scmp.lt.s32.totalorder %s13, 1
      %s140 = scalar_select %p139, %s13, 1
      %s141 = smul.addr %s140, 4
      %s142 = smul.addr %s141, 2
      %s143 = scalar_lea.vmem %s2, %s142
      %v144 = vld [vmem:[%s138] sm:$0xff]
      %v145 = vld [vmem:[%s138 + $0x8] sm:$0xff]
      %v146 = vld [vmem:[%s138 + $0x10] sm:$0xff]
      %v147 = vld [vmem:[%s138 + $0x18] sm:$0xff]
      %v148 = vld [vmem:[%s138 + $0x20] sm:$0xff]
      %v149 = vld [vmem:[%s138 + $0x28] sm:$0xff]
      %v150 = vld [vmem:[%s138 + $0x30] sm:$0xff]
      %v151 = vld [vmem:[%s138 + $0x38] sm:$0xff]
      %v152 = vld [vmem:[%s1] sm:$0xff]
      %v153 = vld [vmem:[%s1 + $0x8] sm:$0xff]
      %v154 = vld [vmem:[%s1 + $0x10] sm:$0xff]
      %v155 = vld [vmem:[%s1 + $0x18] sm:$0xff]
      %v156 = vld [vmem:[%s1 + $0x20] sm:$0xff]
      %v157 = vld [vmem:[%s1 + $0x28] sm:$0xff]
      %v158 = vld [vmem:[%s1 + $0x30] sm:$0xff]
      %v159 = vld [vmem:[%s1 + $0x38] sm:$0xff]
      %s160 = scalar_lea.vmem %s1, 64
      %v161 = vld [vmem:[%s160] sm:$0xff]
      %v162 = vld [vmem:[%s160 + $0x8] sm:$0xff]
      %v163 = vld [vmem:[%s160 + $0x10] sm:$0xff]
      %v164 = vld [vmem:[%s160 + $0x18] sm:$0xff]
      %v165 = vld [vmem:[%s160 + $0x20] sm:$0xff]
      %v166 = vld [vmem:[%s160 + $0x28] sm:$0xff]
      %v167 = vld [vmem:[%s160 + $0x30] sm:$0xff]
      %v168 = vld [vmem:[%s160 + $0x38] sm:$0xff]
      %v169 = vmul.f32 %v144, 0.70710677
      %v170 = vmul.f32 %v145, 0.70710677
      %v171 = vmul.f32 %v146, 0.70710677
      %v172 = vmul.f32 %v147, 0.70710677
      %v173 = vmul.f32 %v148, 0.70710677
      %v174 = vmul.f32 %v149, 0.70710677
      %v175 = vmul.f32 %v150, 0.70710677
      %v176 = vmul.f32 %v151, 0.70710677
      %178 = vset.pattern.permute.xlu0 0
      %179 = vperm.xlu0 %178, %v169
      %v180 = vpop.permute.xlu0 %179
      %183 = vset.pattern.permute.xlu0 0
      %184 = vperm.xlu0 %183, %v170
      %v185 = vpop.permute.xlu0 %184
      %188 = vset.pattern.permute.xlu0 0
      %189 = vperm.xlu0 %188, %v171
      %v190 = vpop.permute.xlu0 %189
      %193 = vset.pattern.permute.xlu0 0
      %194 = vperm.xlu0 %193, %v172
      %v195 = vpop.permute.xlu0 %194
      %198 = vset.pattern.permute.xlu0 0
      %199 = vperm.xlu0 %198, %v173
      %v200 = vpop.permute.xlu0 %199
      %203 = vset.pattern.permute.xlu0 0
      %204 = vperm.xlu0 %203, %v174
      %v205 = vpop.permute.xlu0 %204
      %208 = vset.pattern.permute.xlu0 0
      %209 = vperm.xlu0 %208, %v175
      %v210 = vpop.permute.xlu0 %209
      %213 = vset.pattern.permute.xlu0 0
      %214 = vperm.xlu0 %213, %v176
      %v215 = vpop.permute.xlu0 %214
      %v217 = vmul.f32 %v180, %v152
      %v218 = vmul.f32 %v185, %v153
      %v219 = vmul.f32 %v190, %v154
      %v220 = vmul.f32 %v195, %v155
      %v221 = vmul.f32 %v200, %v156
      %v222 = vmul.f32 %v205, %v157
      %v223 = vmul.f32 %v210, %v158
      %v224 = vmul.f32 %v215, %v159
      %v225 = vadd.f32 %v217, 0.0
      %v226 = vadd.f32 %v218, 0.0
      %v227 = vadd.f32 %v219, 0.0
      %v228 = vadd.f32 %v220, 0.0
      %v229 = vadd.f32 %v221, 0.0
      %v230 = vadd.f32 %v222, 0.0
      %v231 = vadd.f32 %v223, 0.0
      %v232 = vadd.f32 %v224, 0.0
      %233 = vset.pattern.permute.xlu0 1
      %234 = vperm.xlu0 %233, %v169
      %v235 = vpop.permute.xlu0 %234
      %237 = vset.pattern.permute.xlu0 1
      %238 = vperm.xlu0 %237, %v170
      %v239 = vpop.permute.xlu0 %238
      %241 = vset.pattern.permute.xlu0 1
      %242 = vperm.xlu0 %241, %v171
      %v243 = vpop.permute.xlu0 %242
      %245 = vset.pattern.permute.xlu0 1
      %246 = vperm.xlu0 %245, %v172
      %v247 = vpop.permute.xlu0 %246
      %249 = vset.pattern.permute.xlu0 1
      %250 = vperm.xlu0 %249, %v173
      %v251 = vpop.permute.xlu0 %250
      %253 = vset.pattern.permute.xlu0 1
      %254 = vperm.xlu0 %253, %v174
      %v255 = vpop.permute.xlu0 %254
      %257 = vset.pattern.permute.xlu0 1
      %258 = vperm.xlu0 %257, %v175
      %v259 = vpop.permute.xlu0 %258
      %261 = vset.pattern.permute.xlu0 1
      %262 = vperm.xlu0 %261, %v176
      %v263 = vpop.permute.xlu0 %262
      %v265 = vmul.f32 %v235, %v161
      %v266 = vmul.f32 %v239, %v162
      %v267 = vmul.f32 %v243, %v163
      %v268 = vmul.f32 %v247, %v164
      %v269 = vmul.f32 %v251, %v165
      %v270 = vmul.f32 %v255, %v166
      %v271 = vmul.f32 %v259, %v167
      %v272 = vmul.f32 %v263, %v168
      %v273 = vadd.f32 %v225, %v265
      %v274 = vadd.f32 %v226, %v266
      %v275 = vadd.f32 %v227, %v267
      %v276 = vadd.f32 %v228, %v268
      %v277 = vadd.f32 %v229, %v269
      %v278 = vadd.f32 %v230, %v270
      %v279 = vadd.f32 %v231, %v271
      %v280 = vadd.f32 %v232, %v272
      %289 = vrot.lane.b32.xlu0 %v144, 120
      %v290 = vpop.permute.xlu0 %289
      %291 = vrot.lane.b32.xlu0 %v145, 120
      %v292 = vpop.permute.xlu0 %291
      %293 = vrot.lane.b32.xlu0 %v146, 120
      %v294 = vpop.permute.xlu0 %293
      %295 = vrot.lane.b32.xlu0 %v147, 120
      %v296 = vpop.permute.xlu0 %295
      %297 = vrot.lane.b32.xlu0 %v148, 120
      %v298 = vpop.permute.xlu0 %297
      %299 = vrot.lane.b32.xlu0 %v149, 120
      %v300 = vpop.permute.xlu0 %299
      %301 = vrot.lane.b32.xlu0 %v150, 120
      %v302 = vpop.permute.xlu0 %301
      %303 = vrot.lane.b32.xlu0 %v151, 120
      %v304 = vpop.permute.xlu0 %303
      %vm305 = vcmask 15360
      %v306 = vsel %vm305, %v290, 0
      %v308 = vsel %vm305, %v292, 0
      %v310 = vsel %vm305, %v294, 0
      %v312 = vsel %vm305, %v296, 0
      %v314 = vsel %vm305, %v298, 0
      %v316 = vsel %vm305, %v300, 0
      %v318 = vsel %vm305, %v302, 0
      %v320 = vsel %vm305, %v304, 0
      %v322 = vsel %vm305, %v169, 0
      %v324 = vsel %vm305, %v170, 0
      %v326 = vsel %vm305, %v171, 0
      %v328 = vsel %vm305, %v172, 0
      %v330 = vsel %vm305, %v173, 0
      %v332 = vsel %vm305, %v174, 0
      %v334 = vsel %vm305, %v175, 0
      %v336 = vsel %vm305, %v176, 0
      %338 = vmatpush.xpose.msra.mxu0 0.0
      %339 = vmatpush.xpose.msra.mxu0 0.0
      %340 = vmatpush.xpose.msra.mxu0 0.0
      %341 = vmatpush.xpose.msra.mxu0 0.0
      %342 = vmatpush.xpose.msra.mxu0 0.0
      %343 = vmatpush.xpose.msra.mxu0 0.0
      %344 = vmatpush.xpose.msra.mxu0 0.0
      %345 = vmatpush.xpose.msra.mxu0 0.0
      %346 = vmatpush.xpose.msra.mxu0 %v336
      %347 = vmatpush.xpose.msra.mxu0 %v334
      %348 = vmatpush.xpose.msra.mxu0 %v332
      %349 = vmatpush.xpose.msra.mxu0 %v330
      %350 = vmatpush.xpose.msra.mxu0 %v328
      %351 = vmatpush.xpose.msra.mxu0 %v326
      %352 = vmatpush.xpose.msra.mxu0 %v324
      %353 = vmatpush.xpose.msra.mxu0 %v322
      %354 = vmatmul.f32.gmra.mxu0 %v306
      %v355 = vpop.f32.mrf.mxu0
      %v356 = vadd.f32 %v273, %v355
      %357 = vmatmul.f32.gmra.mxu0 %v308
      %v358 = vpop.f32.mrf.mxu0
      %v359 = vadd.f32 %v274, %v358
      %360 = vmatmul.f32.gmra.mxu0 %v310
      %v361 = vpop.f32.mrf.mxu0
      %v362 = vadd.f32 %v275, %v361
      %363 = vmatmul.f32.gmra.mxu0 %v312
      %v364 = vpop.f32.mrf.mxu0
      %v365 = vadd.f32 %v276, %v364
      %366 = vmatmul.f32.gmra.mxu0 %v314
      %v367 = vpop.f32.mrf.mxu0
      %v368 = vadd.f32 %v277, %v367
      %369 = vmatmul.f32.gmra.mxu0 %v316
      %v370 = vpop.f32.mrf.mxu0
      %v371 = vadd.f32 %v278, %v370
      %372 = vmatmul.f32.gmra.mxu0 %v318
      %v373 = vpop.f32.mrf.mxu0
      %v374 = vadd.f32 %v279, %v373
      %375 = vmatmul.f32.gmra.mxu0 %v320
      %v376 = vpop.f32.mrf.mxu0
      %v377 = vadd.f32 %v280, %v376
      %378 = vdwg.mxu0
      %vm379 = vcmask 523264
      %v380 = vsel %vm379, %v356, -inf
      %381 = vmax.xlane.f32.xlu0 %v380
      %v382 = vpop.xlane.xlu0 %381
      %v383 = vsel %vm379, %v359, -inf
      %384 = vmax.xlane.f32.xlu0 %v383
      %v385 = vpop.xlane.xlu0 %384
      %v386 = vsel %vm379, %v362, -inf
      %387 = vmax.xlane.f32.xlu0 %v386
      %v388 = vpop.xlane.xlu0 %387
      %v389 = vsel %vm379, %v365, -inf
      %390 = vmax.xlane.f32.xlu0 %v389
      %v391 = vpop.xlane.xlu0 %390
      %v392 = vsel %vm379, %v368, -inf
      %393 = vmax.xlane.f32.xlu0 %v392
      %v394 = vpop.xlane.xlu0 %393
      %v395 = vsel %vm379, %v371, -inf
      %396 = vmax.xlane.f32.xlu0 %v395
      %v397 = vpop.xlane.xlu0 %396
      %v398 = vsel %vm379, %v374, -inf
      %399 = vmax.xlane.f32.xlu0 %v398
      %v400 = vpop.xlane.xlu0 %399
      %v401 = vsel %vm379, %v377, -inf
      %402 = vmax.xlane.f32.xlu0 %v401
      %v403 = vpop.xlane.xlu0 %402
      %v404 = vsub.f32 %v356, %v382
      %v405 = vsub.f32 %v359, %v385
      %v406 = vsub.f32 %v362, %v388
      %v407 = vsub.f32 %v365, %v391
      %v408 = vsub.f32 %v368, %v394
      %v409 = vsub.f32 %v371, %v397
      %v410 = vsub.f32 %v374, %v400
      %v411 = vsub.f32 %v377, %v403
      %v412 = vmul.f32 %v404, 1.442695
      %v413 = vpow.pop %v412
      %v414 = vmul.f32 %v405, 1.442695
      %v415 = vpow.pop %v414
      %v416 = vmul.f32 %v406, 1.442695
      %v417 = vpow.pop %v416
      %v418 = vmul.f32 %v407, 1.442695
      %v419 = vpow.pop %v418
      %v420 = vmul.f32 %v408, 1.442695
      %v421 = vpow.pop %v420
      %v422 = vmul.f32 %v409, 1.442695
      %v423 = vpow.pop %v422
      %v424 = vmul.f32 %v410, 1.442695
      %v425 = vpow.pop %v424
      %v426 = vmul.f32 %v411, 1.442695
      %v427 = vpow.pop %v426
      %v428 = vsel %vm379, %v413, 0.0
      %429 = vadd.xlane.f32.xlu0 %v428
      %v430 = vpop.xlane.xlu0 %429
      %v431 = vsel %vm379, %v415, 0.0
      %432 = vadd.xlane.f32.xlu0 %v431
      %v433 = vpop.xlane.xlu0 %432
      %v434 = vsel %vm379, %v417, 0.0
      %435 = vadd.xlane.f32.xlu0 %v434
      %v436 = vpop.xlane.xlu0 %435
      %v437 = vsel %vm379, %v419, 0.0
      %438 = vadd.xlane.f32.xlu0 %v437
      %v439 = vpop.xlane.xlu0 %438
      %v440 = vsel %vm379, %v421, 0.0
      %441 = vadd.xlane.f32.xlu0 %v440
      %v442 = vpop.xlane.xlu0 %441
      %v443 = vsel %vm379, %v423, 0.0
      %444 = vadd.xlane.f32.xlu0 %v443
      %v445 = vpop.xlane.xlu0 %444
      %v446 = vsel %vm379, %v425, 0.0
      %447 = vadd.xlane.f32.xlu0 %v446
      %v448 = vpop.xlane.xlu0 %447
      %v449 = vsel %vm379, %v427, 0.0
      %450 = vadd.xlane.f32.xlu0 %v449
      %v451 = vpop.xlane.xlu0 %450
      %v452 = vrcp.pop %v430
      %v453 = vmul.f32 %v430, %v452
      %v454 = vsub.f32 1.0, %v453
      %v455 = vmul.f32 %v452, %v454
      %v456 = vadd.f32 %v452, %v455
      %vm457 = vweird.f32 %v430
      %vm458 = vweird.f32 %v452
      %vm459 = vmor %vm457, %vm458
      %v460 = vsel %vm459, %v452, %v456
      %v461 = vand.u32 2147483647, %v430
      %vm462 = vcmp.eq.f32.partialorder %v461, 8.507059e+37
      %v463 = vand.u32 %v430, 2147483648
      %v464 = vor.u32 1.1754944e-38, %v463
      %v465 = vsel %vm462, %v464, %v460
      %v466 = vmul.f32 %v413, %v465
      %v467 = vrcp.pop %v433
      %v468 = vmul.f32 %v433, %v467
      %v469 = vsub.f32 1.0, %v468
      %v470 = vmul.f32 %v467, %v469
      %v471 = vadd.f32 %v467, %v470
      %vm472 = vweird.f32 %v433
      %vm473 = vweird.f32 %v467
      %vm474 = vmor %vm472, %vm473
      %v475 = vsel %vm474, %v467, %v471
      %v476 = vand.u32 2147483647, %v433
      %vm477 = vcmp.eq.f32.partialorder %v476, 8.507059e+37
      %v478 = vand.u32 %v433, 2147483648
      %v479 = vor.u32 1.1754944e-38, %v478
      %v480 = vsel %vm477, %v479, %v475
      %v481 = vmul.f32 %v415, %v480
      %v482 = vrcp.pop %v436
      %v483 = vmul.f32 %v436, %v482
      %v484 = vsub.f32 1.0, %v483
      %v485 = vmul.f32 %v482, %v484
      %v486 = vadd.f32 %v482, %v485
      %vm487 = vweird.f32 %v436
      %vm488 = vweird.f32 %v482
      %vm489 = vmor %vm487, %vm488
      %v490 = vsel %vm489, %v482, %v486
      %v491 = vand.u32 2147483647, %v436
      %vm492 = vcmp.eq.f32.partialorder %v491, 8.507059e+37
      %v493 = vand.u32 %v436, 2147483648
      %v494 = vor.u32 1.1754944e-38, %v493
      %v495 = vsel %vm492, %v494, %v490
      %v496 = vmul.f32 %v417, %v495
      %v497 = vrcp.pop %v439
      %v498 = vmul.f32 %v439, %v497
      %v499 = vsub.f32 1.0, %v498
      %v500 = vmul.f32 %v497, %v499
      %v501 = vadd.f32 %v497, %v500
      %vm502 = vweird.f32 %v439
      %vm503 = vweird.f32 %v497
      %vm504 = vmor %vm502, %vm503
      %v505 = vsel %vm504, %v497, %v501
      %v506 = vand.u32 2147483647, %v439
      %vm507 = vcmp.eq.f32.partialorder %v506, 8.507059e+37
      %v508 = vand.u32 %v439, 2147483648
      %v509 = vor.u32 1.1754944e-38, %v508
      %v510 = vsel %vm507, %v509, %v505
      %v511 = vmul.f32 %v419, %v510
      %v512 = vrcp.pop %v442
      %v513 = vmul.f32 %v442, %v512
      %v514 = vsub.f32 1.0, %v513
      %v515 = vmul.f32 %v512, %v514
      %v516 = vadd.f32 %v512, %v515
      %vm517 = vweird.f32 %v442
      %vm518 = vweird.f32 %v512
      %vm519 = vmor %vm517, %vm518
      %v520 = vsel %vm519, %v512, %v516
      %v521 = vand.u32 2147483647, %v442
      %vm522 = vcmp.eq.f32.partialorder %v521, 8.507059e+37
      %v523 = vand.u32 %v442, 2147483648
      %v524 = vor.u32 1.1754944e-38, %v523
      %v525 = vsel %vm522, %v524, %v520
      %v526 = vmul.f32 %v421, %v525
      %v527 = vrcp.pop %v445
      %v528 = vmul.f32 %v445, %v527
      %v529 = vsub.f32 1.0, %v528
      %v530 = vmul.f32 %v527, %v529
      %v531 = vadd.f32 %v527, %v530
      %vm532 = vweird.f32 %v445
      %vm533 = vweird.f32 %v527
      %vm534 = vmor %vm532, %vm533
      %v535 = vsel %vm534, %v527, %v531
      %v536 = vand.u32 2147483647, %v445
      %vm537 = vcmp.eq.f32.partialorder %v536, 8.507059e+37
      %v538 = vand.u32 %v445, 2147483648
      %v539 = vor.u32 1.1754944e-38, %v538
      %v540 = vsel %vm537, %v539, %v535
      %v541 = vmul.f32 %v423, %v540
      %v542 = vrcp.pop %v448
      %v543 = vmul.f32 %v448, %v542
      %v544 = vsub.f32 1.0, %v543
      %v545 = vmul.f32 %v542, %v544
      %v546 = vadd.f32 %v542, %v545
      %vm547 = vweird.f32 %v448
      %vm548 = vweird.f32 %v542
      %vm549 = vmor %vm547, %vm548
      %v550 = vsel %vm549, %v542, %v546
      %v551 = vand.u32 2147483647, %v448
      %vm552 = vcmp.eq.f32.partialorder %v551, 8.507059e+37
      %v553 = vand.u32 %v448, 2147483648
      %v554 = vor.u32 1.1754944e-38, %v553
      %v555 = vsel %vm552, %v554, %v550
      %v556 = vmul.f32 %v425, %v555
      %v557 = vrcp.pop %v451
      %v558 = vmul.f32 %v451, %v557
      %v559 = vsub.f32 1.0, %v558
      %v560 = vmul.f32 %v557, %v559
      %v561 = vadd.f32 %v557, %v560
      %vm562 = vweird.f32 %v451
      %vm563 = vweird.f32 %v557
      %vm564 = vmor %vm562, %vm563
      %v565 = vsel %vm564, %v557, %v561
      %v566 = vand.u32 2147483647, %v451
      %vm567 = vcmp.eq.f32.partialorder %v566, 8.507059e+37
      %v568 = vand.u32 %v451, 2147483648
      %v569 = vor.u32 1.1754944e-38, %v568
      %v570 = vsel %vm567, %v569, %v565
      %v571 = vmul.f32 %v427, %v570
      %572 = vrot.lane.b32.xlu0 %v144, 112
      %v573 = vpop.permute.xlu0 %572
      %574 = vrot.lane.b32.xlu0 %v145, 112
      %v575 = vpop.permute.xlu0 %574
      %576 = vrot.lane.b32.xlu0 %v146, 112
      %v577 = vpop.permute.xlu0 %576
      %578 = vrot.lane.b32.xlu0 %v147, 112
      %v579 = vpop.permute.xlu0 %578
      %580 = vrot.lane.b32.xlu0 %v148, 112
      %v581 = vpop.permute.xlu0 %580
      %582 = vrot.lane.b32.xlu0 %v149, 112
      %v583 = vpop.permute.xlu0 %582
      %584 = vrot.lane.b32.xlu0 %v150, 112
      %v585 = vpop.permute.xlu0 %584
      %586 = vrot.lane.b32.xlu0 %v151, 112
      %v587 = vpop.permute.xlu0 %586
      %596 = vxpose.xlu0.b32.start [1/16] %v573, 128
      %597 = vxpose.xlu0.b32.cont [2/16] %v575, 128
      %598 = vxpose.xlu0.b32.cont [3/16] %v577, 128
      %599 = vxpose.xlu0.b32.cont [4/16] %v579, 128
      %600 = vxpose.xlu0.b32.cont [5/16] %v581, 128
      %601 = vxpose.xlu0.b32.cont [6/16] %v583, 128
      %602 = vxpose.xlu0.b32.cont [7/16] %v585, 128
      %603 = vxpose.xlu0.b32.cont [8/16] %v587, 128
      %604 = vxpose.xlu0.b32.cont [9/16] 0.0, 128
      %605 = vxpose.xlu0.b32.cont [10/16] 0.0, 128
      %606 = vxpose.xlu0.b32.cont [11/16] 0.0, 128
      %607 = vxpose.xlu0.b32.cont [12/16] 0.0, 128
      %608 = vxpose.xlu0.b32.cont [13/16] 0.0, 128
      %609 = vxpose.xlu0.b32.cont [14/16] 0.0, 128
      %610 = vxpose.xlu0.b32.cont [15/16] 0.0, 128
      %611 = vxpose.xlu0.b32.end [16/16] 0.0, 128
      %v612 = vpop.trf.xlu0
      %v613 = vpop.trf.xlu0
      %v614 = vpop.trf.xlu0
      %v615 = vpop.trf.xlu0
      %v616 = vpop.trf.xlu0
      %v617 = vpop.trf.xlu0
      %v618 = vpop.trf.xlu0
      %v619 = vpop.trf.xlu0
      %v620 = vpop.trf.xlu0
      %v621 = vpop.trf.xlu0
      %v622 = vpop.trf.xlu0
      %v623 = vpop.trf.xlu0
      %v624 = vpop.trf.xlu0
      %v625 = vpop.trf.xlu0
      %v626 = vpop.trf.xlu0
      %v627 = vpop.trf.xlu0
      %v629 = vsel %vm379, %v612, 0
      %631 = vmatpush.msra.mxu0 0.0
      %632 = vmatpush.msra.mxu0 0.0
      %633 = vmatpush.msra.mxu0 0.0
      %634 = vmatpush.msra.mxu0 0.0
      %635 = vmatpush.msra.mxu0 0.0
      %636 = vmatpush.msra.mxu0 0.0
      %637 = vmatpush.msra.mxu0 0.0
      %638 = vmatpush.msra.mxu0 0.0
      %639 = vmatpush.msra.mxu0 %v571
      %640 = vmatpush.msra.mxu0 %v556
      %641 = vmatpush.msra.mxu0 %v541
      %642 = vmatpush.msra.mxu0 %v526
      %643 = vmatpush.msra.mxu0 %v511
      %644 = vmatpush.msra.mxu0 %v496
      %645 = vmatpush.msra.mxu0 %v481
      %646 = vmatpush.msra.mxu0 %v466
      %647 = vmatmul.f32.gmra.mxu0 %v629
      %v648 = vpop.f32.mrf.mxu0
      %v649 = vadd.f32 0.0, %v648
      %650 = vdwg.mxu0
      %vm651 = vcmask 517120
      %652 = vst.msk [vmem:[%s143] sm:$0x3] %vm651, %v649
      %653 = vset.pattern.permute.xlu0 2
      %654 = vperm.xlu0 %653, %v169
      %v655 = vpop.permute.xlu0 %654
      %657 = vset.pattern.permute.xlu0 2
      %658 = vperm.xlu0 %657, %v170
      %v659 = vpop.permute.xlu0 %658
      %661 = vset.pattern.permute.xlu0 2
      %662 = vperm.xlu0 %661, %v171
      %v663 = vpop.permute.xlu0 %662
      %665 = vset.pattern.permute.xlu0 2
      %666 = vperm.xlu0 %665, %v172
      %v667 = vpop.permute.xlu0 %666
      %669 = vset.pattern.permute.xlu0 2
      %670 = vperm.xlu0 %669, %v173
      %v671 = vpop.permute.xlu0 %670
      %673 = vset.pattern.permute.xlu0 2
      %674 = vperm.xlu0 %673, %v174
      %v675 = vpop.permute.xlu0 %674
      %677 = vset.pattern.permute.xlu0 2
      %678 = vperm.xlu0 %677, %v175
      %v679 = vpop.permute.xlu0 %678
      %681 = vset.pattern.permute.xlu0 2
      %682 = vperm.xlu0 %681, %v176
      %v683 = vpop.permute.xlu0 %682
      %v685 = vmul.f32 %v655, %v152
      %v686 = vmul.f32 %v659, %v153
      %v687 = vmul.f32 %v663, %v154
      %v688 = vmul.f32 %v667, %v155
      %v689 = vmul.f32 %v671, %v156
      %v690 = vmul.f32 %v675, %v157
      %v691 = vmul.f32 %v679, %v158
      %v692 = vmul.f32 %v683, %v159
      %v693 = vadd.f32 %v685, 0.0
      %v694 = vadd.f32 %v686, 0.0
      %v695 = vadd.f32 %v687, 0.0
      %v696 = vadd.f32 %v688, 0.0
      %v697 = vadd.f32 %v689, 0.0
      %v698 = vadd.f32 %v690, 0.0
      %v699 = vadd.f32 %v691, 0.0
      %v700 = vadd.f32 %v692, 0.0
      %701 = vset.pattern.permute.xlu0 3
      %702 = vperm.xlu0 %701, %v169
      %v703 = vpop.permute.xlu0 %702
      %705 = vset.pattern.permute.xlu0 3
      %706 = vperm.xlu0 %705, %v170
      %v707 = vpop.permute.xlu0 %706
      %709 = vset.pattern.permute.xlu0 3
      %710 = vperm.xlu0 %709, %v171
      %v711 = vpop.permute.xlu0 %710
      %713 = vset.pattern.permute.xlu0 3
      %714 = vperm.xlu0 %713, %v172
      %v715 = vpop.permute.xlu0 %714
      %717 = vset.pattern.permute.xlu0 3
      %718 = vperm.xlu0 %717, %v173
      %v719 = vpop.permute.xlu0 %718
      %721 = vset.pattern.permute.xlu0 3
      %722 = vperm.xlu0 %721, %v174
      %v723 = vpop.permute.xlu0 %722
      %725 = vset.pattern.permute.xlu0 3
      %726 = vperm.xlu0 %725, %v175
      %v727 = vpop.permute.xlu0 %726
      %729 = vset.pattern.permute.xlu0 3
      %730 = vperm.xlu0 %729, %v176
      %v731 = vpop.permute.xlu0 %730
      %v733 = vmul.f32 %v703, %v161
      %v734 = vmul.f32 %v707, %v162
      %v735 = vmul.f32 %v711, %v163
      %v736 = vmul.f32 %v715, %v164
      %v737 = vmul.f32 %v719, %v165
      %v738 = vmul.f32 %v723, %v166
      %v739 = vmul.f32 %v727, %v167
      %v740 = vmul.f32 %v731, %v168
      %v741 = vadd.f32 %v693, %v733
      %v742 = vadd.f32 %v694, %v734
      %v743 = vadd.f32 %v695, %v735
      %v744 = vadd.f32 %v696, %v736
      %v745 = vadd.f32 %v697, %v737
      %v746 = vadd.f32 %v698, %v738
      %v747 = vadd.f32 %v699, %v739
      %v748 = vadd.f32 %v700, %v740
      %749 = vrot.lane.b32.xlu0 %v144, 118
      %v750 = vpop.permute.xlu0 %749
      %751 = vrot.lane.b32.xlu0 %v145, 118
      %v752 = vpop.permute.xlu0 %751
      %753 = vrot.lane.b32.xlu0 %v146, 118
      %v754 = vpop.permute.xlu0 %753
      %755 = vrot.lane.b32.xlu0 %v147, 118
      %v756 = vpop.permute.xlu0 %755
      %757 = vrot.lane.b32.xlu0 %v148, 118
      %v758 = vpop.permute.xlu0 %757
      %759 = vrot.lane.b32.xlu0 %v149, 118
      %v760 = vpop.permute.xlu0 %759
      %761 = vrot.lane.b32.xlu0 %v150, 118
      %v762 = vpop.permute.xlu0 %761
      %763 = vrot.lane.b32.xlu0 %v151, 118
      %v764 = vpop.permute.xlu0 %763
      %765 = vrot.lane.b32.xlu0 %v169, 126
      %v766 = vpop.permute.xlu0 %765
      %767 = vrot.lane.b32.xlu0 %v170, 126
      %v768 = vpop.permute.xlu0 %767
      %769 = vrot.lane.b32.xlu0 %v171, 126
      %v770 = vpop.permute.xlu0 %769
      %771 = vrot.lane.b32.xlu0 %v172, 126
      %v772 = vpop.permute.xlu0 %771
      %773 = vrot.lane.b32.xlu0 %v173, 126
      %v774 = vpop.permute.xlu0 %773
      %775 = vrot.lane.b32.xlu0 %v174, 126
      %v776 = vpop.permute.xlu0 %775
      %777 = vrot.lane.b32.xlu0 %v175, 126
      %v778 = vpop.permute.xlu0 %777
      %779 = vrot.lane.b32.xlu0 %v176, 126
      %v780 = vpop.permute.xlu0 %779
      %v781 = vsel %vm305, %v750, 0
      %v783 = vsel %vm305, %v752, 0
      %v785 = vsel %vm305, %v754, 0
      %v787 = vsel %vm305, %v756, 0
      %v789 = vsel %vm305, %v758, 0
      %v791 = vsel %vm305, %v760, 0
      %v793 = vsel %vm305, %v762, 0
      %v795 = vsel %vm305, %v764, 0
      %v797 = vsel %vm305, %v766, 0
      %v799 = vsel %vm305, %v768, 0
      %v801 = vsel %vm305, %v770, 0
      %v803 = vsel %vm305, %v772, 0
      %v805 = vsel %vm305, %v774, 0
      %v807 = vsel %vm305, %v776, 0
      %v809 = vsel %vm305, %v778, 0
      %v811 = vsel %vm305, %v780, 0
      %813 = vmatpush.xpose.msra.mxu0 0.0
      %814 = vmatpush.xpose.msra.mxu0 0.0
      %815 = vmatpush.xpose.msra.mxu0 0.0
      %816 = vmatpush.xpose.msra.mxu0 0.0
      %817 = vmatpush.xpose.msra.mxu0 0.0
      %818 = vmatpush.xpose.msra.mxu0 0.0
      %819 = vmatpush.xpose.msra.mxu0 0.0
      %820 = vmatpush.xpose.msra.mxu0 0.0
      %821 = vmatpush.xpose.msra.mxu0 %v811
      %822 = vmatpush.xpose.msra.mxu0 %v809
      %823 = vmatpush.xpose.msra.mxu0 %v807
      %824 = vmatpush.xpose.msra.mxu0 %v805
      %825 = vmatpush.xpose.msra.mxu0 %v803
      %826 = vmatpush.xpose.msra.mxu0 %v801
      %827 = vmatpush.xpose.msra.mxu0 %v799
      %828 = vmatpush.xpose.msra.mxu0 %v797
      %829 = vmatmul.f32.gmra.mxu0 %v781
      %v830 = vpop.f32.mrf.mxu0
      %v831 = vadd.f32 %v741, %v830
      %832 = vmatmul.f32.gmra.mxu0 %v783
      %v833 = vpop.f32.mrf.mxu0
      %v834 = vadd.f32 %v742, %v833
      %835 = vmatmul.f32.gmra.mxu0 %v785
      %v836 = vpop.f32.mrf.mxu0
      %v837 = vadd.f32 %v743, %v836
      %838 = vmatmul.f32.gmra.mxu0 %v787
      %v839 = vpop.f32.mrf.mxu0
      %v840 = vadd.f32 %v744, %v839
      %841 = vmatmul.f32.gmra.mxu0 %v789
      %v842 = vpop.f32.mrf.mxu0
      %v843 = vadd.f32 %v745, %v842
      %844 = vmatmul.f32.gmra.mxu0 %v791
      %v845 = vpop.f32.mrf.mxu0
      %v846 = vadd.f32 %v746, %v845
      %847 = vmatmul.f32.gmra.mxu0 %v793
      %v848 = vpop.f32.mrf.mxu0
      %v849 = vadd.f32 %v747, %v848
      %850 = vmatmul.f32.gmra.mxu0 %v795
      %v851 = vpop.f32.mrf.mxu0
      %v852 = vadd.f32 %v748, %v851
      %853 = vdwg.mxu0
      %v854 = vsel %vm379, %v831, -inf
      %855 = vmax.xlane.f32.xlu0 %v854
      %v856 = vpop.xlane.xlu0 %855
      %v857 = vsel %vm379, %v834, -inf
      %858 = vmax.xlane.f32.xlu0 %v857
      %v859 = vpop.xlane.xlu0 %858
      %v860 = vsel %vm379, %v837, -inf
      %861 = vmax.xlane.f32.xlu0 %v860
      %v862 = vpop.xlane.xlu0 %861
      %v863 = vsel %vm379, %v840, -inf
      %864 = vmax.xlane.f32.xlu0 %v863
      %v865 = vpop.xlane.xlu0 %864
      %v866 = vsel %vm379, %v843, -inf
      %867 = vmax.xlane.f32.xlu0 %v866
      %v868 = vpop.xlane.xlu0 %867
      %v869 = vsel %vm379, %v846, -inf
      %870 = vmax.xlane.f32.xlu0 %v869
      %v871 = vpop.xlane.xlu0 %870
      %v872 = vsel %vm379, %v849, -inf
      %873 = vmax.xlane.f32.xlu0 %v872
      %v874 = vpop.xlane.xlu0 %873
      %v875 = vsel %vm379, %v852, -inf
      %876 = vmax.xlane.f32.xlu0 %v875
      %v877 = vpop.xlane.xlu0 %876
      %v878 = vsub.f32 %v831, %v856
      %v879 = vsub.f32 %v834, %v859
      %v880 = vsub.f32 %v837, %v862
      %v881 = vsub.f32 %v840, %v865
      %v882 = vsub.f32 %v843, %v868
      %v883 = vsub.f32 %v846, %v871
      %v884 = vsub.f32 %v849, %v874
      %v885 = vsub.f32 %v852, %v877
      %v886 = vmul.f32 %v878, 1.442695
      %v887 = vpow.pop %v886
      %v888 = vmul.f32 %v879, 1.442695
      %v889 = vpow.pop %v888
      %v890 = vmul.f32 %v880, 1.442695
      %v891 = vpow.pop %v890
      %v892 = vmul.f32 %v881, 1.442695
      %v893 = vpow.pop %v892
      %v894 = vmul.f32 %v882, 1.442695
      %v895 = vpow.pop %v894
      %v896 = vmul.f32 %v883, 1.442695
      %v897 = vpow.pop %v896
      %v898 = vmul.f32 %v884, 1.442695
      %v899 = vpow.pop %v898
      %v900 = vmul.f32 %v885, 1.442695
      %v901 = vpow.pop %v900
      %v902 = vsel %vm379, %v887, 0.0
      %903 = vadd.xlane.f32.xlu0 %v902
      %v904 = vpop.xlane.xlu0 %903
      %v905 = vsel %vm379, %v889, 0.0
      %906 = vadd.xlane.f32.xlu0 %v905
      %v907 = vpop.xlane.xlu0 %906
      %v908 = vsel %vm379, %v891, 0.0
      %909 = vadd.xlane.f32.xlu0 %v908
      %v910 = vpop.xlane.xlu0 %909
      %v911 = vsel %vm379, %v893, 0.0
      %912 = vadd.xlane.f32.xlu0 %v911
      %v913 = vpop.xlane.xlu0 %912
      %v914 = vsel %vm379, %v895, 0.0
      %915 = vadd.xlane.f32.xlu0 %v914
      %v916 = vpop.xlane.xlu0 %915
      %v917 = vsel %vm379, %v897, 0.0
      %918 = vadd.xlane.f32.xlu0 %v917
      %v919 = vpop.xlane.xlu0 %918
      %v920 = vsel %vm379, %v899, 0.0
      %921 = vadd.xlane.f32.xlu0 %v920
      %v922 = vpop.xlane.xlu0 %921
      %v923 = vsel %vm379, %v901, 0.0
      %924 = vadd.xlane.f32.xlu0 %v923
      %v925 = vpop.xlane.xlu0 %924
      %v926 = vrcp.pop %v904
      %v927 = vmul.f32 %v904, %v926
      %v928 = vsub.f32 1.0, %v927
      %v929 = vmul.f32 %v926, %v928
      %v930 = vadd.f32 %v926, %v929
      %vm931 = vweird.f32 %v904
      %vm932 = vweird.f32 %v926
      %vm933 = vmor %vm931, %vm932
      %v934 = vsel %vm933, %v926, %v930
      %v935 = vand.u32 2147483647, %v904
      %vm936 = vcmp.eq.f32.partialorder %v935, 8.507059e+37
      %v937 = vand.u32 %v904, 2147483648
      %v938 = vor.u32 1.1754944e-38, %v937
      %v939 = vsel %vm936, %v938, %v934
      %v940 = vmul.f32 %v887, %v939
      %v941 = vrcp.pop %v907
      %v942 = vmul.f32 %v907, %v941
      %v943 = vsub.f32 1.0, %v942
      %v944 = vmul.f32 %v941, %v943
      %v945 = vadd.f32 %v941, %v944
      %vm946 = vweird.f32 %v907
      %vm947 = vweird.f32 %v941
      %vm948 = vmor %vm946, %vm947
      %v949 = vsel %vm948, %v941, %v945
      %v950 = vand.u32 2147483647, %v907
      %vm951 = vcmp.eq.f32.partialorder %v950, 8.507059e+37
      %v952 = vand.u32 %v907, 2147483648
      %v953 = vor.u32 1.1754944e-38, %v952
      %v954 = vsel %vm951, %v953, %v949
      %v955 = vmul.f32 %v889, %v954
      %v956 = vrcp.pop %v910
      %v957 = vmul.f32 %v910, %v956
      %v958 = vsub.f32 1.0, %v957
      %v959 = vmul.f32 %v956, %v958
      %v960 = vadd.f32 %v956, %v959
      %vm961 = vweird.f32 %v910
      %vm962 = vweird.f32 %v956
      %vm963 = vmor %vm961, %vm962
      %v964 = vsel %vm963, %v956, %v960
      %v965 = vand.u32 2147483647, %v910
      %vm966 = vcmp.eq.f32.partialorder %v965, 8.507059e+37
      %v967 = vand.u32 %v910, 2147483648
      %v968 = vor.u32 1.1754944e-38, %v967
      %v969 = vsel %vm966, %v968, %v964
      %v970 = vmul.f32 %v891, %v969
      %v971 = vrcp.pop %v913
      %v972 = vmul.f32 %v913, %v971
      %v973 = vsub.f32 1.0, %v972
      %v974 = vmul.f32 %v971, %v973
      %v975 = vadd.f32 %v971, %v974
      %vm976 = vweird.f32 %v913
      %vm977 = vweird.f32 %v971
      %vm978 = vmor %vm976, %vm977
      %v979 = vsel %vm978, %v971, %v975
      %v980 = vand.u32 2147483647, %v913
      %vm981 = vcmp.eq.f32.partialorder %v980, 8.507059e+37
      %v982 = vand.u32 %v913, 2147483648
      %v983 = vor.u32 1.1754944e-38, %v982
      %v984 = vsel %vm981, %v983, %v979
      %v985 = vmul.f32 %v893, %v984
      %v986 = vrcp.pop %v916
      %v987 = vmul.f32 %v916, %v986
      %v988 = vsub.f32 1.0, %v987
      %v989 = vmul.f32 %v986, %v988
      %v990 = vadd.f32 %v986, %v989
      %vm991 = vweird.f32 %v916
      %vm992 = vweird.f32 %v986
      %vm993 = vmor %vm991, %vm992
      %v994 = vsel %vm993, %v986, %v990
      %v995 = vand.u32 2147483647, %v916
      %vm996 = vcmp.eq.f32.partialorder %v995, 8.507059e+37
      %v997 = vand.u32 %v916, 2147483648
      %v998 = vor.u32 1.1754944e-38, %v997
      %v999 = vsel %vm996, %v998, %v994
      %v1000 = vmul.f32 %v895, %v999
      %v1001 = vrcp.pop %v919
      %v1002 = vmul.f32 %v919, %v1001
      %v1003 = vsub.f32 1.0, %v1002
      %v1004 = vmul.f32 %v1001, %v1003
      %v1005 = vadd.f32 %v1001, %v1004
      %vm1006 = vweird.f32 %v919
      %vm1007 = vweird.f32 %v1001
      %vm1008 = vmor %vm1006, %vm1007
      %v1009 = vsel %vm1008, %v1001, %v1005
      %v1010 = vand.u32 2147483647, %v919
      %vm1011 = vcmp.eq.f32.partialorder %v1010, 8.507059e+37
      %v1012 = vand.u32 %v919, 2147483648
      %v1013 = vor.u32 1.1754944e-38, %v1012
      %v1014 = vsel %vm1011, %v1013, %v1009
      %v1015 = vmul.f32 %v897, %v1014
      %v1016 = vrcp.pop %v922
      %v1017 = vmul.f32 %v922, %v1016
      %v1018 = vsub.f32 1.0, %v1017
      %v1019 = vmul.f32 %v1016, %v1018
      %v1020 = vadd.f32 %v1016, %v1019
      %vm1021 = vweird.f32 %v922
      %vm1022 = vweird.f32 %v1016
      %vm1023 = vmor %vm1021, %vm1022
      %v1024 = vsel %vm1023, %v1016, %v1020
      %v1025 = vand.u32 2147483647, %v922
      %vm1026 = vcmp.eq.f32.partialorder %v1025, 8.507059e+37
      %v1027 = vand.u32 %v922, 2147483648
      %v1028 = vor.u32 1.1754944e-38, %v1027
      %v1029 = vsel %vm1026, %v1028, %v1024
      %v1030 = vmul.f32 %v899, %v1029
      %v1031 = vrcp.pop %v925
      %v1032 = vmul.f32 %v925, %v1031
      %v1033 = vsub.f32 1.0, %v1032
      %v1034 = vmul.f32 %v1031, %v1033
      %v1035 = vadd.f32 %v1031, %v1034
      %vm1036 = vweird.f32 %v925
      %vm1037 = vweird.f32 %v1031
      %vm1038 = vmor %vm1036, %vm1037
      %v1039 = vsel %vm1038, %v1031, %v1035
      %v1040 = vand.u32 2147483647, %v925
      %vm1041 = vcmp.eq.f32.partialorder %v1040, 8.507059e+37
      %v1042 = vand.u32 %v925, 2147483648
      %v1043 = vor.u32 1.1754944e-38, %v1042
      %v1044 = vsel %vm1041, %v1043, %v1039
      %v1045 = vmul.f32 %v901, %v1044
      %1046 = vrot.lane.b32.xlu0 %v144, 110
      %v1047 = vpop.permute.xlu0 %1046
      %1048 = vrot.lane.b32.xlu0 %v145, 110
      %v1049 = vpop.permute.xlu0 %1048
      %1050 = vrot.lane.b32.xlu0 %v146, 110
      %v1051 = vpop.permute.xlu0 %1050
      %1052 = vrot.lane.b32.xlu0 %v147, 110
      %v1053 = vpop.permute.xlu0 %1052
      %1054 = vrot.lane.b32.xlu0 %v148, 110
      %v1055 = vpop.permute.xlu0 %1054
      %1056 = vrot.lane.b32.xlu0 %v149, 110
      %v1057 = vpop.permute.xlu0 %1056
      %1058 = vrot.lane.b32.xlu0 %v150, 110
      %v1059 = vpop.permute.xlu0 %1058
      %1060 = vrot.lane.b32.xlu0 %v151, 110
      %v1061 = vpop.permute.xlu0 %1060
      %1070 = vxpose.xlu0.b32.start [1/16] %v1047, 128
      %1071 = vxpose.xlu0.b32.cont [2/16] %v1049, 128
      %1072 = vxpose.xlu0.b32.cont [3/16] %v1051, 128
      %1073 = vxpose.xlu0.b32.cont [4/16] %v1053, 128
      %1074 = vxpose.xlu0.b32.cont [5/16] %v1055, 128
      %1075 = vxpose.xlu0.b32.cont [6/16] %v1057, 128
      %1076 = vxpose.xlu0.b32.cont [7/16] %v1059, 128
      %1077 = vxpose.xlu0.b32.cont [8/16] %v1061, 128
      %1078 = vxpose.xlu0.b32.cont [9/16] 0.0, 128
      %1079 = vxpose.xlu0.b32.cont [10/16] 0.0, 128
      %1080 = vxpose.xlu0.b32.cont [11/16] 0.0, 128
      %1081 = vxpose.xlu0.b32.cont [12/16] 0.0, 128
      %1082 = vxpose.xlu0.b32.cont [13/16] 0.0, 128
      %1083 = vxpose.xlu0.b32.cont [14/16] 0.0, 128
      %1084 = vxpose.xlu0.b32.cont [15/16] 0.0, 128
      %1085 = vxpose.xlu0.b32.end [16/16] 0.0, 128
      %v1086 = vpop.trf.xlu0
      %v1087 = vpop.trf.xlu0
      %v1088 = vpop.trf.xlu0
      %v1089 = vpop.trf.xlu0
      %v1090 = vpop.trf.xlu0
      %v1091 = vpop.trf.xlu0
      %v1092 = vpop.trf.xlu0
      %v1093 = vpop.trf.xlu0
      %v1094 = vpop.trf.xlu0
      %v1095 = vpop.trf.xlu0
      %v1096 = vpop.trf.xlu0
      %v1097 = vpop.trf.xlu0
      %v1098 = vpop.trf.xlu0
      %v1099 = vpop.trf.xlu0
      %v1100 = vpop.trf.xlu0
      %v1101 = vpop.trf.xlu0
      %v1103 = vsel %vm379, %v1086, 0
      %1105 = vmatpush.msra.mxu0 0.0
      %1106 = vmatpush.msra.mxu0 0.0
      %1107 = vmatpush.msra.mxu0 0.0
      %1108 = vmatpush.msra.mxu0 0.0
      %1109 = vmatpush.msra.mxu0 0.0
      %1110 = vmatpush.msra.mxu0 0.0
      %1111 = vmatpush.msra.mxu0 0.0
      %1112 = vmatpush.msra.mxu0 0.0
      %1113 = vmatpush.msra.mxu0 %v1045
      %1114 = vmatpush.msra.mxu0 %v1030
      %1115 = vmatpush.msra.mxu0 %v1015
      %1116 = vmatpush.msra.mxu0 %v1000
      %1117 = vmatpush.msra.mxu0 %v985
      %1118 = vmatpush.msra.mxu0 %v970
      %1119 = vmatpush.msra.mxu0 %v955
      %1120 = vmatpush.msra.mxu0 %v940
      %1121 = vmatmul.f32.gmra.mxu0 %v1103
      %v1122 = vpop.f32.mrf.mxu0
      %v1123 = vadd.f32 0.0, %v1122
      %1124 = vdwg.mxu0
      %s1125 = scalar_lea.vmem %s143, 2
      %1126 = vst.msk [vmem:[%s1125] sm:$0x3] %vm651, %v1123
      %1127 = vset.pattern.permute.xlu0 4
      %1128 = vperm.xlu0 %1127, %v169
      %v1129 = vpop.permute.xlu0 %1128
      %1131 = vset.pattern.permute.xlu0 4
      %1132 = vperm.xlu0 %1131, %v170
      %v1133 = vpop.permute.xlu0 %1132
      %1135 = vset.pattern.permute.xlu0 4
      %1136 = vperm.xlu0 %1135, %v171
      %v1137 = vpop.permute.xlu0 %1136
      %1139 = vset.pattern.permute.xlu0 4
      %1140 = vperm.xlu0 %1139, %v172
      %v1141 = vpop.permute.xlu0 %1140
      %1143 = vset.pattern.permute.xlu0 4
      %1144 = vperm.xlu0 %1143, %v173
      %v1145 = vpop.permute.xlu0 %1144
      %1147 = vset.pattern.permute.xlu0 4
      %1148 = vperm.xlu0 %1147, %v174
      %v1149 = vpop.permute.xlu0 %1148
      %1151 = vset.pattern.permute.xlu0 4
      %1152 = vperm.xlu0 %1151, %v175
      %v1153 = vpop.permute.xlu0 %1152
      %1155 = vset.pattern.permute.xlu0 4
      %1156 = vperm.xlu0 %1155, %v176
      %v1157 = vpop.permute.xlu0 %1156
      %v1159 = vmul.f32 %v1129, %v152
      %v1160 = vmul.f32 %v1133, %v153
      %v1161 = vmul.f32 %v1137, %v154
      %v1162 = vmul.f32 %v1141, %v155
      %v1163 = vmul.f32 %v1145, %v156
      %v1164 = vmul.f32 %v1149, %v157
      %v1165 = vmul.f32 %v1153, %v158
      %v1166 = vmul.f32 %v1157, %v159
      %v1167 = vadd.f32 %v1159, 0.0
      %v1168 = vadd.f32 %v1160, 0.0
      %v1169 = vadd.f32 %v1161, 0.0
      %v1170 = vadd.f32 %v1162, 0.0
      %v1171 = vadd.f32 %v1163, 0.0
      %v1172 = vadd.f32 %v1164, 0.0
      %v1173 = vadd.f32 %v1165, 0.0
      %v1174 = vadd.f32 %v1166, 0.0
      %1175 = vset.pattern.permute.xlu0 5
      %1176 = vperm.xlu0 %1175, %v169
      %v1177 = vpop.permute.xlu0 %1176
      %1179 = vset.pattern.permute.xlu0 5
      %1180 = vperm.xlu0 %1179, %v170
      %v1181 = vpop.permute.xlu0 %1180
      %1183 = vset.pattern.permute.xlu0 5
      %1184 = vperm.xlu0 %1183, %v171
      %v1185 = vpop.permute.xlu0 %1184
      %1187 = vset.pattern.permute.xlu0 5
      %1188 = vperm.xlu0 %1187, %v172
      %v1189 = vpop.permute.xlu0 %1188
      %1191 = vset.pattern.permute.xlu0 5
      %1192 = vperm.xlu0 %1191, %v173
      %v1193 = vpop.permute.xlu0 %1192
      %1195 = vset.pattern.permute.xlu0 5
      %1196 = vperm.xlu0 %1195, %v174
      %v1197 = vpop.permute.xlu0 %1196
      %1199 = vset.pattern.permute.xlu0 5
      %1200 = vperm.xlu0 %1199, %v175
      %v1201 = vpop.permute.xlu0 %1200
      %1203 = vset.pattern.permute.xlu0 5
      %1204 = vperm.xlu0 %1203, %v176
      %v1205 = vpop.permute.xlu0 %1204
      %v1207 = vmul.f32 %v1177, %v161
      %v1208 = vmul.f32 %v1181, %v162
      %v1209 = vmul.f32 %v1185, %v163
      %v1210 = vmul.f32 %v1189, %v164
      %v1211 = vmul.f32 %v1193, %v165
      %v1212 = vmul.f32 %v1197, %v166
      %v1213 = vmul.f32 %v1201, %v167
      %v1214 = vmul.f32 %v1205, %v168
      %v1215 = vadd.f32 %v1167, %v1207
      %v1216 = vadd.f32 %v1168, %v1208
      %v1217 = vadd.f32 %v1169, %v1209
      %v1218 = vadd.f32 %v1170, %v1210
      %v1219 = vadd.f32 %v1171, %v1211
      %v1220 = vadd.f32 %v1172, %v1212
      %v1221 = vadd.f32 %v1173, %v1213
      %v1222 = vadd.f32 %v1174, %v1214
      %1223 = vrot.lane.b32.xlu0 %v144, 116
      %v1224 = vpop.permute.xlu0 %1223
      %1225 = vrot.lane.b32.xlu0 %v145, 116
      %v1226 = vpop.permute.xlu0 %1225
      %1227 = vrot.lane.b32.xlu0 %v146, 116
      %v1228 = vpop.permute.xlu0 %1227
      %1229 = vrot.lane.b32.xlu0 %v147, 116
      %v1230 = vpop.permute.xlu0 %1229
      %1231 = vrot.lane.b32.xlu0 %v148, 116
      %v1232 = vpop.permute.xlu0 %1231
      %1233 = vrot.lane.b32.xlu0 %v149, 116
      %v1234 = vpop.permute.xlu0 %1233
      %1235 = vrot.lane.b32.xlu0 %v150, 116
      %v1236 = vpop.permute.xlu0 %1235
      %1237 = vrot.lane.b32.xlu0 %v151, 116
      %v1238 = vpop.permute.xlu0 %1237
      %1239 = vrot.lane.b32.xlu0 %v169, 124
      %v1240 = vpop.permute.xlu0 %1239
      %1241 = vrot.lane.b32.xlu0 %v170, 124
      %v1242 = vpop.permute.xlu0 %1241
      %1243 = vrot.lane.b32.xlu0 %v171, 124
      %v1244 = vpop.permute.xlu0 %1243
      %1245 = vrot.lane.b32.xlu0 %v172, 124
      %v1246 = vpop.permute.xlu0 %1245
      %1247 = vrot.lane.b32.xlu0 %v173, 124
      %v1248 = vpop.permute.xlu0 %1247
      %1249 = vrot.lane.b32.xlu0 %v174, 124
      %v1250 = vpop.permute.xlu0 %1249
      %1251 = vrot.lane.b32.xlu0 %v175, 124
      %v1252 = vpop.permute.xlu0 %1251
      %1253 = vrot.lane.b32.xlu0 %v176, 124
      %v1254 = vpop.permute.xlu0 %1253
      %v1255 = vsel %vm305, %v1224, 0
      %v1257 = vsel %vm305, %v1226, 0
      %v1259 = vsel %vm305, %v1228, 0
      %v1261 = vsel %vm305, %v1230, 0
      %v1263 = vsel %vm305, %v1232, 0
      %v1265 = vsel %vm305, %v1234, 0
      %v1267 = vsel %vm305, %v1236, 0
      %v1269 = vsel %vm305, %v1238, 0
      %v1271 = vsel %vm305, %v1240, 0
      %v1273 = vsel %vm305, %v1242, 0
      %v1275 = vsel %vm305, %v1244, 0
      %v1277 = vsel %vm305, %v1246, 0
      %v1279 = vsel %vm305, %v1248, 0
      %v1281 = vsel %vm305, %v1250, 0
      %v1283 = vsel %vm305, %v1252, 0
      %v1285 = vsel %vm305, %v1254, 0
      %1287 = vmatpush.xpose.msra.mxu0 0.0
      %1288 = vmatpush.xpose.msra.mxu0 0.0
      %1289 = vmatpush.xpose.msra.mxu0 0.0
      %1290 = vmatpush.xpose.msra.mxu0 0.0
      %1291 = vmatpush.xpose.msra.mxu0 0.0
      %1292 = vmatpush.xpose.msra.mxu0 0.0
      %1293 = vmatpush.xpose.msra.mxu0 0.0
      %1294 = vmatpush.xpose.msra.mxu0 0.0
      %1295 = vmatpush.xpose.msra.mxu0 %v1285
      %1296 = vmatpush.xpose.msra.mxu0 %v1283
      %1297 = vmatpush.xpose.msra.mxu0 %v1281
      %1298 = vmatpush.xpose.msra.mxu0 %v1279
      %1299 = vmatpush.xpose.msra.mxu0 %v1277
      %1300 = vmatpush.xpose.msra.mxu0 %v1275
      %1301 = vmatpush.xpose.msra.mxu0 %v1273
      %1302 = vmatpush.xpose.msra.mxu0 %v1271
      %1303 = vmatmul.f32.gmra.mxu0 %v1255
      %v1304 = vpop.f32.mrf.mxu0
      %v1305 = vadd.f32 %v1215, %v1304
      %1306 = vmatmul.f32.gmra.mxu0 %v1257
      %v1307 = vpop.f32.mrf.mxu0
      %v1308 = vadd.f32 %v1216, %v1307
      %1309 = vmatmul.f32.gmra.mxu0 %v1259
      %v1310 = vpop.f32.mrf.mxu0
      %v1311 = vadd.f32 %v1217, %v1310
      %1312 = vmatmul.f32.gmra.mxu0 %v1261
      %v1313 = vpop.f32.mrf.mxu0
      %v1314 = vadd.f32 %v1218, %v1313
      %1315 = vmatmul.f32.gmra.mxu0 %v1263
      %v1316 = vpop.f32.mrf.mxu0
      %v1317 = vadd.f32 %v1219, %v1316
      %1318 = vmatmul.f32.gmra.mxu0 %v1265
      %v1319 = vpop.f32.mrf.mxu0
      %v1320 = vadd.f32 %v1220, %v1319
      %1321 = vmatmul.f32.gmra.mxu0 %v1267
      %v1322 = vpop.f32.mrf.mxu0
      %v1323 = vadd.f32 %v1221, %v1322
      %1324 = vmatmul.f32.gmra.mxu0 %v1269
      %v1325 = vpop.f32.mrf.mxu0
      %v1326 = vadd.f32 %v1222, %v1325
      %1327 = vdwg.mxu0
      %v1328 = vsel %vm379, %v1305, -inf
      %1329 = vmax.xlane.f32.xlu0 %v1328
      %v1330 = vpop.xlane.xlu0 %1329
      %v1331 = vsel %vm379, %v1308, -inf
      %1332 = vmax.xlane.f32.xlu0 %v1331
      %v1333 = vpop.xlane.xlu0 %1332
      %v1334 = vsel %vm379, %v1311, -inf
      %1335 = vmax.xlane.f32.xlu0 %v1334
      %v1336 = vpop.xlane.xlu0 %1335
      %v1337 = vsel %vm379, %v1314, -inf
      %1338 = vmax.xlane.f32.xlu0 %v1337
      %v1339 = vpop.xlane.xlu0 %1338
      %v1340 = vsel %vm379, %v1317, -inf
      %1341 = vmax.xlane.f32.xlu0 %v1340
      %v1342 = vpop.xlane.xlu0 %1341
      %v1343 = vsel %vm379, %v1320, -inf
      %1344 = vmax.xlane.f32.xlu0 %v1343
      %v1345 = vpop.xlane.xlu0 %1344
      %v1346 = vsel %vm379, %v1323, -inf
      %1347 = vmax.xlane.f32.xlu0 %v1346
      %v1348 = vpop.xlane.xlu0 %1347
      %v1349 = vsel %vm379, %v1326, -inf
      %1350 = vmax.xlane.f32.xlu0 %v1349
      %v1351 = vpop.xlane.xlu0 %1350
      %v1352 = vsub.f32 %v1305, %v1330
      %v1353 = vsub.f32 %v1308, %v1333
      %v1354 = vsub.f32 %v1311, %v1336
      %v1355 = vsub.f32 %v1314, %v1339
      %v1356 = vsub.f32 %v1317, %v1342
      %v1357 = vsub.f32 %v1320, %v1345
      %v1358 = vsub.f32 %v1323, %v1348
      %v1359 = vsub.f32 %v1326, %v1351
      %v1360 = vmul.f32 %v1352, 1.442695
      %v1361 = vpow.pop %v1360
      %v1362 = vmul.f32 %v1353, 1.442695
      %v1363 = vpow.pop %v1362
      %v1364 = vmul.f32 %v1354, 1.442695
      %v1365 = vpow.pop %v1364
      %v1366 = vmul.f32 %v1355, 1.442695
      %v1367 = vpow.pop %v1366
      %v1368 = vmul.f32 %v1356, 1.442695
      %v1369 = vpow.pop %v1368
      %v1370 = vmul.f32 %v1357, 1.442695
      %v1371 = vpow.pop %v1370
      %v1372 = vmul.f32 %v1358, 1.442695
      %v1373 = vpow.pop %v1372
      %v1374 = vmul.f32 %v1359, 1.442695
      %v1375 = vpow.pop %v1374
      %v1376 = vsel %vm379, %v1361, 0.0
      %1377 = vadd.xlane.f32.xlu0 %v1376
      %v1378 = vpop.xlane.xlu0 %1377
      %v1379 = vsel %vm379, %v1363, 0.0
      %1380 = vadd.xlane.f32.xlu0 %v1379
      %v1381 = vpop.xlane.xlu0 %1380
      %v1382 = vsel %vm379, %v1365, 0.0
      %1383 = vadd.xlane.f32.xlu0 %v1382
      %v1384 = vpop.xlane.xlu0 %1383
      %v1385 = vsel %vm379, %v1367, 0.0
      %1386 = vadd.xlane.f32.xlu0 %v1385
      %v1387 = vpop.xlane.xlu0 %1386
      %v1388 = vsel %vm379, %v1369, 0.0
      %1389 = vadd.xlane.f32.xlu0 %v1388
      %v1390 = vpop.xlane.xlu0 %1389
      %v1391 = vsel %vm379, %v1371, 0.0
      %1392 = vadd.xlane.f32.xlu0 %v1391
      %v1393 = vpop.xlane.xlu0 %1392
      %v1394 = vsel %vm379, %v1373, 0.0
      %1395 = vadd.xlane.f32.xlu0 %v1394
      %v1396 = vpop.xlane.xlu0 %1395
      %v1397 = vsel %vm379, %v1375, 0.0
      %1398 = vadd.xlane.f32.xlu0 %v1397
      %v1399 = vpop.xlane.xlu0 %1398
      %v1400 = vrcp.pop %v1378
      %v1401 = vmul.f32 %v1378, %v1400
      %v1402 = vsub.f32 1.0, %v1401
      %v1403 = vmul.f32 %v1400, %v1402
      %v1404 = vadd.f32 %v1400, %v1403
      %vm1405 = vweird.f32 %v1378
      %vm1406 = vweird.f32 %v1400
      %vm1407 = vmor %vm1405, %vm1406
      %v1408 = vsel %vm1407, %v1400, %v1404
      %v1409 = vand.u32 2147483647, %v1378
      %vm1410 = vcmp.eq.f32.partialorder %v1409, 8.507059e+37
      %v1411 = vand.u32 %v1378, 2147483648
      %v1412 = vor.u32 1.1754944e-38, %v1411
      %v1413 = vsel %vm1410, %v1412, %v1408
      %v1414 = vmul.f32 %v1361, %v1413
      %v1415 = vrcp.pop %v1381
      %v1416 = vmul.f32 %v1381, %v1415
      %v1417 = vsub.f32 1.0, %v1416
      %v1418 = vmul.f32 %v1415, %v1417
      %v1419 = vadd.f32 %v1415, %v1418
      %vm1420 = vweird.f32 %v1381
      %vm1421 = vweird.f32 %v1415
      %vm1422 = vmor %vm1420, %vm1421
      %v1423 = vsel %vm1422, %v1415, %v1419
      %v1424 = vand.u32 2147483647, %v1381
      %vm1425 = vcmp.eq.f32.partialorder %v1424, 8.507059e+37
      %v1426 = vand.u32 %v1381, 2147483648
      %v1427 = vor.u32 1.1754944e-38, %v1426
      %v1428 = vsel %vm1425, %v1427, %v1423
      %v1429 = vmul.f32 %v1363, %v1428
      %v1430 = vrcp.pop %v1384
      %v1431 = vmul.f32 %v1384, %v1430
      %v1432 = vsub.f32 1.0, %v1431
      %v1433 = vmul.f32 %v1430, %v1432
      %v1434 = vadd.f32 %v1430, %v1433
      %vm1435 = vweird.f32 %v1384
      %vm1436 = vweird.f32 %v1430
      %vm1437 = vmor %vm1435, %vm1436
      %v1438 = vsel %vm1437, %v1430, %v1434
      %v1439 = vand.u32 2147483647, %v1384
      %vm1440 = vcmp.eq.f32.partialorder %v1439, 8.507059e+37
      %v1441 = vand.u32 %v1384, 2147483648
      %v1442 = vor.u32 1.1754944e-38, %v1441
      %v1443 = vsel %vm1440, %v1442, %v1438
      %v1444 = vmul.f32 %v1365, %v1443
      %v1445 = vrcp.pop %v1387
      %v1446 = vmul.f32 %v1387, %v1445
      %v1447 = vsub.f32 1.0, %v1446
      %v1448 = vmul.f32 %v1445, %v1447
      %v1449 = vadd.f32 %v1445, %v1448
      %vm1450 = vweird.f32 %v1387
      %vm1451 = vweird.f32 %v1445
      %vm1452 = vmor %vm1450, %vm1451
      %v1453 = vsel %vm1452, %v1445, %v1449
      %v1454 = vand.u32 2147483647, %v1387
      %vm1455 = vcmp.eq.f32.partialorder %v1454, 8.507059e+37
      %v1456 = vand.u32 %v1387, 2147483648
      %v1457 = vor.u32 1.1754944e-38, %v1456
      %v1458 = vsel %vm1455, %v1457, %v1453
      %v1459 = vmul.f32 %v1367, %v1458
      %v1460 = vrcp.pop %v1390
      %v1461 = vmul.f32 %v1390, %v1460
      %v1462 = vsub.f32 1.0, %v1461
      %v1463 = vmul.f32 %v1460, %v1462
      %v1464 = vadd.f32 %v1460, %v1463
      %vm1465 = vweird.f32 %v1390
      %vm1466 = vweird.f32 %v1460
      %vm1467 = vmor %vm1465, %vm1466
      %v1468 = vsel %vm1467, %v1460, %v1464
      %v1469 = vand.u32 2147483647, %v1390
      %vm1470 = vcmp.eq.f32.partialorder %v1469, 8.507059e+37
      %v1471 = vand.u32 %v1390, 2147483648
      %v1472 = vor.u32 1.1754944e-38, %v1471
      %v1473 = vsel %vm1470, %v1472, %v1468
      %v1474 = vmul.f32 %v1369, %v1473
      %v1475 = vrcp.pop %v1393
      %v1476 = vmul.f32 %v1393, %v1475
      %v1477 = vsub.f32 1.0, %v1476
      %v1478 = vmul.f32 %v1475, %v1477
      %v1479 = vadd.f32 %v1475, %v1478
      %vm1480 = vweird.f32 %v1393
      %vm1481 = vweird.f32 %v1475
      %vm1482 = vmor %vm1480, %vm1481
      %v1483 = vsel %vm1482, %v1475, %v1479
      %v1484 = vand.u32 2147483647, %v1393
      %vm1485 = vcmp.eq.f32.partialorder %v1484, 8.507059e+37
      %v1486 = vand.u32 %v1393, 2147483648
      %v1487 = vor.u32 1.1754944e-38, %v1486
      %v1488 = vsel %vm1485, %v1487, %v1483
      %v1489 = vmul.f32 %v1371, %v1488
      %v1490 = vrcp.pop %v1396
      %v1491 = vmul.f32 %v1396, %v1490
      %v1492 = vsub.f32 1.0, %v1491
      %v1493 = vmul.f32 %v1490, %v1492
      %v1494 = vadd.f32 %v1490, %v1493
      %vm1495 = vweird.f32 %v1396
      %vm1496 = vweird.f32 %v1490
      %vm1497 = vmor %vm1495, %vm1496
      %v1498 = vsel %vm1497, %v1490, %v1494
      %v1499 = vand.u32 2147483647, %v1396
      %vm1500 = vcmp.eq.f32.partialorder %v1499, 8.507059e+37
      %v1501 = vand.u32 %v1396, 2147483648
      %v1502 = vor.u32 1.1754944e-38, %v1501
      %v1503 = vsel %vm1500, %v1502, %v1498
      %v1504 = vmul.f32 %v1373, %v1503
      %v1505 = vrcp.pop %v1399
      %v1506 = vmul.f32 %v1399, %v1505
      %v1507 = vsub.f32 1.0, %v1506
      %v1508 = vmul.f32 %v1505, %v1507
      %v1509 = vadd.f32 %v1505, %v1508
      %vm1510 = vweird.f32 %v1399
      %vm1511 = vweird.f32 %v1505
      %vm1512 = vmor %vm1510, %vm1511
      %v1513 = vsel %vm1512, %v1505, %v1509
      %v1514 = vand.u32 2147483647, %v1399
      %vm1515 = vcmp.eq.f32.partialorder %v1514, 8.507059e+37
      %v1516 = vand.u32 %v1399, 2147483648
      %v1517 = vor.u32 1.1754944e-38, %v1516
      %v1518 = vsel %vm1515, %v1517, %v1513
      %v1519 = vmul.f32 %v1375, %v1518
      %1520 = vrot.lane.b32.xlu0 %v144, 108
      %v1521 = vpop.permute.xlu0 %1520
      %1522 = vrot.lane.b32.xlu0 %v145, 108
      %v1523 = vpop.permute.xlu0 %1522
      %1524 = vrot.lane.b32.xlu0 %v146, 108
      %v1525 = vpop.permute.xlu0 %1524
      %1526 = vrot.lane.b32.xlu0 %v147, 108
      %v1527 = vpop.permute.xlu0 %1526
      %1528 = vrot.lane.b32.xlu0 %v148, 108
      %v1529 = vpop.permute.xlu0 %1528
      %1530 = vrot.lane.b32.xlu0 %v149, 108
      %v1531 = vpop.permute.xlu0 %1530
      %1532 = vrot.lane.b32.xlu0 %v150, 108
      %v1533 = vpop.permute.xlu0 %1532
      %1534 = vrot.lane.b32.xlu0 %v151, 108
      %v1535 = vpop.permute.xlu0 %1534
      %1544 = vxpose.xlu0.b32.start [1/16] %v1521, 128
      %1545 = vxpose.xlu0.b32.cont [2/16] %v1523, 128
      %1546 = vxpose.xlu0.b32.cont [3/16] %v1525, 128
      %1547 = vxpose.xlu0.b32.cont [4/16] %v1527, 128
      %1548 = vxpose.xlu0.b32.cont [5/16] %v1529, 128
      %1549 = vxpose.xlu0.b32.cont [6/16] %v1531, 128
      %1550 = vxpose.xlu0.b32.cont [7/16] %v1533, 128
      %1551 = vxpose.xlu0.b32.cont [8/16] %v1535, 128
      %1552 = vxpose.xlu0.b32.cont [9/16] 0.0, 128
      %1553 = vxpose.xlu0.b32.cont [10/16] 0.0, 128
      %1554 = vxpose.xlu0.b32.cont [11/16] 0.0, 128
      %1555 = vxpose.xlu0.b32.cont [12/16] 0.0, 128
      %1556 = vxpose.xlu0.b32.cont [13/16] 0.0, 128
      %1557 = vxpose.xlu0.b32.cont [14/16] 0.0, 128
      %1558 = vxpose.xlu0.b32.cont [15/16] 0.0, 128
      %1559 = vxpose.xlu0.b32.end [16/16] 0.0, 128
      %v1560 = vpop.trf.xlu0
      %v1561 = vpop.trf.xlu0
      %v1562 = vpop.trf.xlu0
      %v1563 = vpop.trf.xlu0
      %v1564 = vpop.trf.xlu0
      %v1565 = vpop.trf.xlu0
      %v1566 = vpop.trf.xlu0
      %v1567 = vpop.trf.xlu0
      %v1568 = vpop.trf.xlu0
      %v1569 = vpop.trf.xlu0
      %v1570 = vpop.trf.xlu0
      %v1571 = vpop.trf.xlu0
      %v1572 = vpop.trf.xlu0
      %v1573 = vpop.trf.xlu0
      %v1574 = vpop.trf.xlu0
      %v1575 = vpop.trf.xlu0
      %v1577 = vsel %vm379, %v1560, 0
      %1579 = vmatpush.msra.mxu0 0.0
      %1580 = vmatpush.msra.mxu0 0.0
      %1581 = vmatpush.msra.mxu0 0.0
      %1582 = vmatpush.msra.mxu0 0.0
      %1583 = vmatpush.msra.mxu0 0.0
      %1584 = vmatpush.msra.mxu0 0.0
      %1585 = vmatpush.msra.mxu0 0.0
      %1586 = vmatpush.msra.mxu0 0.0
      %1587 = vmatpush.msra.mxu0 %v1519
      %1588 = vmatpush.msra.mxu0 %v1504
      %1589 = vmatpush.msra.mxu0 %v1489
      %1590 = vmatpush.msra.mxu0 %v1474
      %1591 = vmatpush.msra.mxu0 %v1459
      %1592 = vmatpush.msra.mxu0 %v1444
      %1593 = vmatpush.msra.mxu0 %v1429
      %1594 = vmatpush.msra.mxu0 %v1414
      %1595 = vmatmul.f32.gmra.mxu0 %v1577
      %v1596 = vpop.f32.mrf.mxu0
      %v1597 = vadd.f32 0.0, %v1596
      %1598 = vdwg.mxu0
      %s1599 = scalar_lea.vmem %s143, 4
      %1600 = vst.msk [vmem:[%s1599] sm:$0x3] %vm651, %v1597
      %1601 = vset.pattern.permute.xlu0 6
      %1602 = vperm.xlu0 %1601, %v169
      %v1603 = vpop.permute.xlu0 %1602
      %1605 = vset.pattern.permute.xlu0 6
      %1606 = vperm.xlu0 %1605, %v170
      %v1607 = vpop.permute.xlu0 %1606
      %1609 = vset.pattern.permute.xlu0 6
      %1610 = vperm.xlu0 %1609, %v171
      %v1611 = vpop.permute.xlu0 %1610
      %1613 = vset.pattern.permute.xlu0 6
      %1614 = vperm.xlu0 %1613, %v172
      %v1615 = vpop.permute.xlu0 %1614
      %1617 = vset.pattern.permute.xlu0 6
      %1618 = vperm.xlu0 %1617, %v173
      %v1619 = vpop.permute.xlu0 %1618
      %1621 = vset.pattern.permute.xlu0 6
      %1622 = vperm.xlu0 %1621, %v174
      %v1623 = vpop.permute.xlu0 %1622
      %1625 = vset.pattern.permute.xlu0 6
      %1626 = vperm.xlu0 %1625, %v175
      %v1627 = vpop.permute.xlu0 %1626
      %1629 = vset.pattern.permute.xlu0 6
      %1630 = vperm.xlu0 %1629, %v176
      %v1631 = vpop.permute.xlu0 %1630
      %v1633 = vmul.f32 %v1603, %v152
      %v1634 = vmul.f32 %v1607, %v153
      %v1635 = vmul.f32 %v1611, %v154
      %v1636 = vmul.f32 %v1615, %v155
      %v1637 = vmul.f32 %v1619, %v156
      %v1638 = vmul.f32 %v1623, %v157
      %v1639 = vmul.f32 %v1627, %v158
      %v1640 = vmul.f32 %v1631, %v159
      %v1641 = vadd.f32 %v1633, 0.0
      %v1642 = vadd.f32 %v1634, 0.0
      %v1643 = vadd.f32 %v1635, 0.0
      %v1644 = vadd.f32 %v1636, 0.0
      %v1645 = vadd.f32 %v1637, 0.0
      %v1646 = vadd.f32 %v1638, 0.0
      %v1647 = vadd.f32 %v1639, 0.0
      %v1648 = vadd.f32 %v1640, 0.0
      %1649 = vset.pattern.permute.xlu0 7
      %1650 = vperm.xlu0 %1649, %v169
      %v1651 = vpop.permute.xlu0 %1650
      %1653 = vset.pattern.permute.xlu0 7
      %1654 = vperm.xlu0 %1653, %v170
      %v1655 = vpop.permute.xlu0 %1654
      %1657 = vset.pattern.permute.xlu0 7
      %1658 = vperm.xlu0 %1657, %v171
      %v1659 = vpop.permute.xlu0 %1658
      %1661 = vset.pattern.permute.xlu0 7
      %1662 = vperm.xlu0 %1661, %v172
      %v1663 = vpop.permute.xlu0 %1662
      %1665 = vset.pattern.permute.xlu0 7
      %1666 = vperm.xlu0 %1665, %v173
      %v1667 = vpop.permute.xlu0 %1666
      %1669 = vset.pattern.permute.xlu0 7
      %1670 = vperm.xlu0 %1669, %v174
      %v1671 = vpop.permute.xlu0 %1670
      %1673 = vset.pattern.permute.xlu0 7
      %1674 = vperm.xlu0 %1673, %v175
      %v1675 = vpop.permute.xlu0 %1674
      %1677 = vset.pattern.permute.xlu0 7
      %1678 = vperm.xlu0 %1677, %v176
      %v1679 = vpop.permute.xlu0 %1678
      %v1681 = vmul.f32 %v1651, %v161
      %v1682 = vmul.f32 %v1655, %v162
      %v1683 = vmul.f32 %v1659, %v163
      %v1684 = vmul.f32 %v1663, %v164
      %v1685 = vmul.f32 %v1667, %v165
      %v1686 = vmul.f32 %v1671, %v166
      %v1687 = vmul.f32 %v1675, %v167
      %v1688 = vmul.f32 %v1679, %v168
      %v1689 = vadd.f32 %v1641, %v1681
      %v1690 = vadd.f32 %v1642, %v1682
      %v1691 = vadd.f32 %v1643, %v1683
      %v1692 = vadd.f32 %v1644, %v1684
      %v1693 = vadd.f32 %v1645, %v1685
      %v1694 = vadd.f32 %v1646, %v1686
      %v1695 = vadd.f32 %v1647, %v1687
      %v1696 = vadd.f32 %v1648, %v1688
      %1697 = vrot.lane.b32.xlu0 %v144, 114
      %v1698 = vpop.permute.xlu0 %1697
      %1699 = vrot.lane.b32.xlu0 %v145, 114
      %v1700 = vpop.permute.xlu0 %1699
      %1701 = vrot.lane.b32.xlu0 %v146, 114
      %v1702 = vpop.permute.xlu0 %1701
      %1703 = vrot.lane.b32.xlu0 %v147, 114
      %v1704 = vpop.permute.xlu0 %1703
      %1705 = vrot.lane.b32.xlu0 %v148, 114
      %v1706 = vpop.permute.xlu0 %1705
      %1707 = vrot.lane.b32.xlu0 %v149, 114
      %v1708 = vpop.permute.xlu0 %1707
      %1709 = vrot.lane.b32.xlu0 %v150, 114
      %v1710 = vpop.permute.xlu0 %1709
      %1711 = vrot.lane.b32.xlu0 %v151, 114
      %v1712 = vpop.permute.xlu0 %1711
      %1713 = vrot.lane.b32.xlu0 %v169, 122
      %v1714 = vpop.permute.xlu0 %1713
      %1715 = vrot.lane.b32.xlu0 %v170, 122
      %v1716 = vpop.permute.xlu0 %1715
      %1717 = vrot.lane.b32.xlu0 %v171, 122
      %v1718 = vpop.permute.xlu0 %1717
      %1719 = vrot.lane.b32.xlu0 %v172, 122
      %v1720 = vpop.permute.xlu0 %1719
      %1721 = vrot.lane.b32.xlu0 %v173, 122
      %v1722 = vpop.permute.xlu0 %1721
      %1723 = vrot.lane.b32.xlu0 %v174, 122
      %v1724 = vpop.permute.xlu0 %1723
      %1725 = vrot.lane.b32.xlu0 %v175, 122
      %v1726 = vpop.permute.xlu0 %1725
      %1727 = vrot.lane.b32.xlu0 %v176, 122
      %v1728 = vpop.permute.xlu0 %1727
      %v1729 = vsel %vm305, %v1698, 0
      %v1731 = vsel %vm305, %v1700, 0
      %v1733 = vsel %vm305, %v1702, 0
      %v1735 = vsel %vm305, %v1704, 0
      %v1737 = vsel %vm305, %v1706, 0
      %v1739 = vsel %vm305, %v1708, 0
      %v1741 = vsel %vm305, %v1710, 0
      %v1743 = vsel %vm305, %v1712, 0
      %v1745 = vsel %vm305, %v1714, 0
      %v1747 = vsel %vm305, %v1716, 0
      %v1749 = vsel %vm305, %v1718, 0
      %v1751 = vsel %vm305, %v1720, 0
      %v1753 = vsel %vm305, %v1722, 0
      %v1755 = vsel %vm305, %v1724, 0
      %v1757 = vsel %vm305, %v1726, 0
      %v1759 = vsel %vm305, %v1728, 0
      %1761 = vmatpush.xpose.msra.mxu0 0.0
      %1762 = vmatpush.xpose.msra.mxu0 0.0
      %1763 = vmatpush.xpose.msra.mxu0 0.0
      %1764 = vmatpush.xpose.msra.mxu0 0.0
      %1765 = vmatpush.xpose.msra.mxu0 0.0
      %1766 = vmatpush.xpose.msra.mxu0 0.0
      %1767 = vmatpush.xpose.msra.mxu0 0.0
      %1768 = vmatpush.xpose.msra.mxu0 0.0
      %1769 = vmatpush.xpose.msra.mxu0 %v1759
      %1770 = vmatpush.xpose.msra.mxu0 %v1757
      %1771 = vmatpush.xpose.msra.mxu0 %v1755
      %1772 = vmatpush.xpose.msra.mxu0 %v1753
      %1773 = vmatpush.xpose.msra.mxu0 %v1751
      %1774 = vmatpush.xpose.msra.mxu0 %v1749
      %1775 = vmatpush.xpose.msra.mxu0 %v1747
      %1776 = vmatpush.xpose.msra.mxu0 %v1745
      %1777 = vmatmul.f32.gmra.mxu0 %v1729
      %v1778 = vpop.f32.mrf.mxu0
      %v1779 = vadd.f32 %v1689, %v1778
      %1780 = vmatmul.f32.gmra.mxu0 %v1731
      %v1781 = vpop.f32.mrf.mxu0
      %v1782 = vadd.f32 %v1690, %v1781
      %1783 = vmatmul.f32.gmra.mxu0 %v1733
      %v1784 = vpop.f32.mrf.mxu0
      %v1785 = vadd.f32 %v1691, %v1784
      %1786 = vmatmul.f32.gmra.mxu0 %v1735
      %v1787 = vpop.f32.mrf.mxu0
      %v1788 = vadd.f32 %v1692, %v1787
      %1789 = vmatmul.f32.gmra.mxu0 %v1737
      %v1790 = vpop.f32.mrf.mxu0
      %v1791 = vadd.f32 %v1693, %v1790
      %1792 = vmatmul.f32.gmra.mxu0 %v1739
      %v1793 = vpop.f32.mrf.mxu0
      %v1794 = vadd.f32 %v1694, %v1793
      %1795 = vmatmul.f32.gmra.mxu0 %v1741
      %v1796 = vpop.f32.mrf.mxu0
      %v1797 = vadd.f32 %v1695, %v1796
      %1798 = vmatmul.f32.gmra.mxu0 %v1743
      %v1799 = vpop.f32.mrf.mxu0
      %v1800 = vadd.f32 %v1696, %v1799
      %1801 = vdwg.mxu0
      %v1802 = vsel %vm379, %v1779, -inf
      %1803 = vmax.xlane.f32.xlu0 %v1802
      %v1804 = vpop.xlane.xlu0 %1803
      %v1805 = vsel %vm379, %v1782, -inf
      %1806 = vmax.xlane.f32.xlu0 %v1805
      %v1807 = vpop.xlane.xlu0 %1806
      %v1808 = vsel %vm379, %v1785, -inf
      %1809 = vmax.xlane.f32.xlu0 %v1808
      %v1810 = vpop.xlane.xlu0 %1809
      %v1811 = vsel %vm379, %v1788, -inf
      %1812 = vmax.xlane.f32.xlu0 %v1811
      %v1813 = vpop.xlane.xlu0 %1812
      %v1814 = vsel %vm379, %v1791, -inf
      %1815 = vmax.xlane.f32.xlu0 %v1814
      %v1816 = vpop.xlane.xlu0 %1815
      %v1817 = vsel %vm379, %v1794, -inf
      %1818 = vmax.xlane.f32.xlu0 %v1817
      %v1819 = vpop.xlane.xlu0 %1818
      %v1820 = vsel %vm379, %v1797, -inf
      %1821 = vmax.xlane.f32.xlu0 %v1820
      %v1822 = vpop.xlane.xlu0 %1821
      %v1823 = vsel %vm379, %v1800, -inf
      %1824 = vmax.xlane.f32.xlu0 %v1823
      %v1825 = vpop.xlane.xlu0 %1824
      %v1826 = vsub.f32 %v1779, %v1804
      %v1827 = vsub.f32 %v1782, %v1807
      %v1828 = vsub.f32 %v1785, %v1810
      %v1829 = vsub.f32 %v1788, %v1813
      %v1830 = vsub.f32 %v1791, %v1816
      %v1831 = vsub.f32 %v1794, %v1819
      %v1832 = vsub.f32 %v1797, %v1822
      %v1833 = vsub.f32 %v1800, %v1825
      %v1834 = vmul.f32 %v1826, 1.442695
      %v1835 = vpow.pop %v1834
      %v1836 = vmul.f32 %v1827, 1.442695
      %v1837 = vpow.pop %v1836
      %v1838 = vmul.f32 %v1828, 1.442695
      %v1839 = vpow.pop %v1838
      %v1840 = vmul.f32 %v1829, 1.442695
      %v1841 = vpow.pop %v1840
      %v1842 = vmul.f32 %v1830, 1.442695
      %v1843 = vpow.pop %v1842
      %v1844 = vmul.f32 %v1831, 1.442695
      %v1845 = vpow.pop %v1844
      %v1846 = vmul.f32 %v1832, 1.442695
      %v1847 = vpow.pop %v1846
      %v1848 = vmul.f32 %v1833, 1.442695
      %v1849 = vpow.pop %v1848
      %v1850 = vsel %vm379, %v1835, 0.0
      %1851 = vadd.xlane.f32.xlu0 %v1850
      %v1852 = vpop.xlane.xlu0 %1851
      %v1853 = vsel %vm379, %v1837, 0.0
      %1854 = vadd.xlane.f32.xlu0 %v1853
      %v1855 = vpop.xlane.xlu0 %1854
      %v1856 = vsel %vm379, %v1839, 0.0
      %1857 = vadd.xlane.f32.xlu0 %v1856
      %v1858 = vpop.xlane.xlu0 %1857
      %v1859 = vsel %vm379, %v1841, 0.0
      %1860 = vadd.xlane.f32.xlu0 %v1859
      %v1861 = vpop.xlane.xlu0 %1860
      %v1862 = vsel %vm379, %v1843, 0.0
      %1863 = vadd.xlane.f32.xlu0 %v1862
      %v1864 = vpop.xlane.xlu0 %1863
      %v1865 = vsel %vm379, %v1845, 0.0
      %1866 = vadd.xlane.f32.xlu0 %v1865
      %v1867 = vpop.xlane.xlu0 %1866
      %v1868 = vsel %vm379, %v1847, 0.0
      %1869 = vadd.xlane.f32.xlu0 %v1868
      %v1870 = vpop.xlane.xlu0 %1869
      %v1871 = vsel %vm379, %v1849, 0.0
      %1872 = vadd.xlane.f32.xlu0 %v1871
      %v1873 = vpop.xlane.xlu0 %1872
      %v1874 = vrcp.pop %v1852
      %v1875 = vmul.f32 %v1852, %v1874
      %v1876 = vsub.f32 1.0, %v1875
      %v1877 = vmul.f32 %v1874, %v1876
      %v1878 = vadd.f32 %v1874, %v1877
      %vm1879 = vweird.f32 %v1852
      %vm1880 = vweird.f32 %v1874
      %vm1881 = vmor %vm1879, %vm1880
      %v1882 = vsel %vm1881, %v1874, %v1878
      %v1883 = vand.u32 2147483647, %v1852
      %vm1884 = vcmp.eq.f32.partialorder %v1883, 8.507059e+37
      %v1885 = vand.u32 %v1852, 2147483648
      %v1886 = vor.u32 1.1754944e-38, %v1885
      %v1887 = vsel %vm1884, %v1886, %v1882
      %v1888 = vmul.f32 %v1835, %v1887
      %v1889 = vrcp.pop %v1855
      %v1890 = vmul.f32 %v1855, %v1889
      %v1891 = vsub.f32 1.0, %v1890
      %v1892 = vmul.f32 %v1889, %v1891
      %v1893 = vadd.f32 %v1889, %v1892
      %vm1894 = vweird.f32 %v1855
      %vm1895 = vweird.f32 %v1889
      %vm1896 = vmor %vm1894, %vm1895
      %v1897 = vsel %vm1896, %v1889, %v1893
      %v1898 = vand.u32 2147483647, %v1855
      %vm1899 = vcmp.eq.f32.partialorder %v1898, 8.507059e+37
      %v1900 = vand.u32 %v1855, 2147483648
      %v1901 = vor.u32 1.1754944e-38, %v1900
      %v1902 = vsel %vm1899, %v1901, %v1897
      %v1903 = vmul.f32 %v1837, %v1902
      %v1904 = vrcp.pop %v1858
      %v1905 = vmul.f32 %v1858, %v1904
      %v1906 = vsub.f32 1.0, %v1905
      %v1907 = vmul.f32 %v1904, %v1906
      %v1908 = vadd.f32 %v1904, %v1907
      %vm1909 = vweird.f32 %v1858
      %vm1910 = vweird.f32 %v1904
      %vm1911 = vmor %vm1909, %vm1910
      %v1912 = vsel %vm1911, %v1904, %v1908
      %v1913 = vand.u32 2147483647, %v1858
      %vm1914 = vcmp.eq.f32.partialorder %v1913, 8.507059e+37
      %v1915 = vand.u32 %v1858, 2147483648
      %v1916 = vor.u32 1.1754944e-38, %v1915
      %v1917 = vsel %vm1914, %v1916, %v1912
      %v1918 = vmul.f32 %v1839, %v1917
      %v1919 = vrcp.pop %v1861
      %v1920 = vmul.f32 %v1861, %v1919
      %v1921 = vsub.f32 1.0, %v1920
      %v1922 = vmul.f32 %v1919, %v1921
      %v1923 = vadd.f32 %v1919, %v1922
      %vm1924 = vweird.f32 %v1861
      %vm1925 = vweird.f32 %v1919
      %vm1926 = vmor %vm1924, %vm1925
      %v1927 = vsel %vm1926, %v1919, %v1923
      %v1928 = vand.u32 2147483647, %v1861
      %vm1929 = vcmp.eq.f32.partialorder %v1928, 8.507059e+37
      %v1930 = vand.u32 %v1861, 2147483648
      %v1931 = vor.u32 1.1754944e-38, %v1930
      %v1932 = vsel %vm1929, %v1931, %v1927
      %v1933 = vmul.f32 %v1841, %v1932
      %v1934 = vrcp.pop %v1864
      %v1935 = vmul.f32 %v1864, %v1934
      %v1936 = vsub.f32 1.0, %v1935
      %v1937 = vmul.f32 %v1934, %v1936
      %v1938 = vadd.f32 %v1934, %v1937
      %vm1939 = vweird.f32 %v1864
      %vm1940 = vweird.f32 %v1934
      %vm1941 = vmor %vm1939, %vm1940
      %v1942 = vsel %vm1941, %v1934, %v1938
      %v1943 = vand.u32 2147483647, %v1864
      %vm1944 = vcmp.eq.f32.partialorder %v1943, 8.507059e+37
      %v1945 = vand.u32 %v1864, 2147483648
      %v1946 = vor.u32 1.1754944e-38, %v1945
      %v1947 = vsel %vm1944, %v1946, %v1942
      %v1948 = vmul.f32 %v1843, %v1947
      %v1949 = vrcp.pop %v1867
      %v1950 = vmul.f32 %v1867, %v1949
      %v1951 = vsub.f32 1.0, %v1950
      %v1952 = vmul.f32 %v1949, %v1951
      %v1953 = vadd.f32 %v1949, %v1952
      %vm1954 = vweird.f32 %v1867
      %vm1955 = vweird.f32 %v1949
      %vm1956 = vmor %vm1954, %vm1955
      %v1957 = vsel %vm1956, %v1949, %v1953
      %v1958 = vand.u32 2147483647, %v1867
      %vm1959 = vcmp.eq.f32.partialorder %v1958, 8.507059e+37
      %v1960 = vand.u32 %v1867, 2147483648
      %v1961 = vor.u32 1.1754944e-38, %v1960
      %v1962 = vsel %vm1959, %v1961, %v1957
      %v1963 = vmul.f32 %v1845, %v1962
      %v1964 = vrcp.pop %v1870
      %v1965 = vmul.f32 %v1870, %v1964
      %v1966 = vsub.f32 1.0, %v1965
      %v1967 = vmul.f32 %v1964, %v1966
      %v1968 = vadd.f32 %v1964, %v1967
      %vm1969 = vweird.f32 %v1870
      %vm1970 = vweird.f32 %v1964
      %vm1971 = vmor %vm1969, %vm1970
      %v1972 = vsel %vm1971, %v1964, %v1968
      %v1973 = vand.u32 2147483647, %v1870
      %vm1974 = vcmp.eq.f32.partialorder %v1973, 8.507059e+37
      %v1975 = vand.u32 %v1870, 2147483648
      %v1976 = vor.u32 1.1754944e-38, %v1975
      %v1977 = vsel %vm1974, %v1976, %v1972
      %v1978 = vmul.f32 %v1847, %v1977
      %v1979 = vrcp.pop %v1873
      %v1980 = vmul.f32 %v1873, %v1979
      %v1981 = vsub.f32 1.0, %v1980
      %v1982 = vmul.f32 %v1979, %v1981
      %v1983 = vadd.f32 %v1979, %v1982
      %vm1984 = vweird.f32 %v1873
      %vm1985 = vweird.f32 %v1979
      %vm1986 = vmor %vm1984, %vm1985
      %v1987 = vsel %vm1986, %v1979, %v1983
      %v1988 = vand.u32 2147483647, %v1873
      %vm1989 = vcmp.eq.f32.partialorder %v1988, 8.507059e+37
      %v1990 = vand.u32 %v1873, 2147483648
      %v1991 = vor.u32 1.1754944e-38, %v1990
      %v1992 = vsel %vm1989, %v1991, %v1987
      %v1993 = vmul.f32 %v1849, %v1992
      %1994 = vrot.lane.b32.xlu0 %v144, 106
      %v1995 = vpop.permute.xlu0 %1994
      %1996 = vrot.lane.b32.xlu0 %v145, 106
      %v1997 = vpop.permute.xlu0 %1996
      %1998 = vrot.lane.b32.xlu0 %v146, 106
      %v1999 = vpop.permute.xlu0 %1998
      %2000 = vrot.lane.b32.xlu0 %v147, 106
      %v2001 = vpop.permute.xlu0 %2000
      %2002 = vrot.lane.b32.xlu0 %v148, 106
      %v2003 = vpop.permute.xlu0 %2002
      %2004 = vrot.lane.b32.xlu0 %v149, 106
      %v2005 = vpop.permute.xlu0 %2004
      %2006 = vrot.lane.b32.xlu0 %v150, 106
      %v2007 = vpop.permute.xlu0 %2006
      %2008 = vrot.lane.b32.xlu0 %v151, 106
      %v2009 = vpop.permute.xlu0 %2008
      %2018 = vxpose.xlu0.b32.start [1/16] %v1995, 128
      %2019 = vxpose.xlu0.b32.cont [2/16] %v1997, 128
      %2020 = vxpose.xlu0.b32.cont [3/16] %v1999, 128
      %2021 = vxpose.xlu0.b32.cont [4/16] %v2001, 128
      %2022 = vxpose.xlu0.b32.cont [5/16] %v2003, 128
      %2023 = vxpose.xlu0.b32.cont [6/16] %v2005, 128
      %2024 = vxpose.xlu0.b32.cont [7/16] %v2007, 128
      %2025 = vxpose.xlu0.b32.cont [8/16] %v2009, 128
      %2026 = vxpose.xlu0.b32.cont [9/16] 0.0, 128
      %2027 = vxpose.xlu0.b32.cont [10/16] 0.0, 128
      %2028 = vxpose.xlu0.b32.cont [11/16] 0.0, 128
      %2029 = vxpose.xlu0.b32.cont [12/16] 0.0, 128
      %2030 = vxpose.xlu0.b32.cont [13/16] 0.0, 128
      %2031 = vxpose.xlu0.b32.cont [14/16] 0.0, 128
      %2032 = vxpose.xlu0.b32.cont [15/16] 0.0, 128
      %2033 = vxpose.xlu0.b32.end [16/16] 0.0, 128
      %v2034 = vpop.trf.xlu0
      %v2035 = vpop.trf.xlu0
      %v2036 = vpop.trf.xlu0
      %v2037 = vpop.trf.xlu0
      %v2038 = vpop.trf.xlu0
      %v2039 = vpop.trf.xlu0
      %v2040 = vpop.trf.xlu0
      %v2041 = vpop.trf.xlu0
      %v2042 = vpop.trf.xlu0
      %v2043 = vpop.trf.xlu0
      %v2044 = vpop.trf.xlu0
      %v2045 = vpop.trf.xlu0
      %v2046 = vpop.trf.xlu0
      %v2047 = vpop.trf.xlu0
      %v2048 = vpop.trf.xlu0
      %v2049 = vpop.trf.xlu0
      %v2051 = vsel %vm379, %v2034, 0
      %2053 = vmatpush.msra.mxu0 0.0
      %2054 = vmatpush.msra.mxu0 0.0
      %2055 = vmatpush.msra.mxu0 0.0
      %2056 = vmatpush.msra.mxu0 0.0
      %2057 = vmatpush.msra.mxu0 0.0
      %2058 = vmatpush.msra.mxu0 0.0
      %2059 = vmatpush.msra.mxu0 0.0
      %2060 = vmatpush.msra.mxu0 0.0
      %2061 = vmatpush.msra.mxu0 %v1993
      %2062 = vmatpush.msra.mxu0 %v1978
      %2063 = vmatpush.msra.mxu0 %v1963
      %2064 = vmatpush.msra.mxu0 %v1948
      %2065 = vmatpush.msra.mxu0 %v1933
      %2066 = vmatpush.msra.mxu0 %v1918
      %2067 = vmatpush.msra.mxu0 %v1903
      %2068 = vmatpush.msra.mxu0 %v1888
      %2069 = vmatmul.f32.gmra.mxu0 %v2051
      %v2070 = vpop.f32.mrf.mxu0
      %v2071 = vadd.f32 0.0, %v2070
      %2072 = vdwg.mxu0
      %s2073 = scalar_lea.vmem %s143, 6
      %2074 = vst.msk [vmem:[%s2073] sm:$0x3] %vm651, %v2071
      %p2075 = scmp.lt.s32.totalorder %s13, 1
      %s2076 = scalar_select %p2075, %s13, 1
      %s2077 = smul.addr %s2076, 4
      %s2078 = smul.addr %s2077, 2
      %s2079 = scalar_lea.vmem %s2, %s2078
      // Predicated region
      $region29: #{aa_inverted_bottleneck_forward.4} parent=27 // pred_check
        %p2080 = pneg %p78
      $region30: #{aa_inverted_bottleneck_forward.4} parent=27 // pred_check_branch
        %2082 = sbr.rel (%p2080) target = $region32
      $region31: #{aa_inverted_bottleneck_forward.4} parent=27 // pred_region
        _
      $region32: #{aa_inverted_bottleneck_forward.4} parent=27 // pred_fallthru
        _
    $region28: #{aa_inverted_bottleneck_forward.4} parent=5 // pred_fallthru
      _
    %p2083 = scmp.le.s32.totalorder 2, %s8
    // Predicated region
    $region33: #{aa_inverted_bottleneck_forward.4} parent=5 // pred_check
      %p2084 = pneg %p2083
    $region34: #{aa_inverted_bottleneck_forward.4} parent=5 // pred_check_branch
      %2086 = sbr.rel (%p2084) target = $region36
    $region35: #{aa_inverted_bottleneck_forward.4} parent=5 // pred_region
      %s2087 = ssub.s32 %s8, 2
      // Predicated region
      $region37: #{aa_inverted_bottleneck_forward.4} parent=35 // pred_check
        %p2088 = pneg %p84
      $region38: #{aa_inverted_bottleneck_forward.4} parent=35 // pred_check_branch
        %2090 = sbr.rel (%p2088) target = $region40
      $region39: #{aa_inverted_bottleneck_forward.4} parent=35 // pred_region
        %p2091 = scmp.lt.s32.totalorder %s14, 1
        %s2092 = scalar_select %p2091, %s14, 1
        %s2093 = smul.addr %s2092, 4
        %s2094 = smul.addr %s2093, 2
        %s2095 = scalar_lea.vmem %s2, %s2094
      $region40: #{aa_inverted_bottleneck_forward.4} parent=35 // pred_fallthru
        _
    $region36: #{aa_inverted_bottleneck_forward.4} parent=5 // pred_fallthru
      _
  $region6: #{aa_inverted_bottleneck_forward.4} parent=0 // loop_footer
    %s12 = sadd.s32 1, %s8
  $region7: #{aa_inverted_bottleneck_forward.4} parent=0 // loop_footer_branch
    %7 = sbr.rel target = $region3
  $region8: #{aa_inverted_bottleneck_forward.4} parent=0 // loop_exit
    _

// kernel: aa_inverted_bottleneck_forward.3
$region0: #{aa_inverted_bottleneck_forward.3}
  #allocation0 [shape = 'u32[]', space=smem, size = 0x4, offset = 0x4, fixed_abs, tag = 'smem constant byte address 0x4 - core index']
  #allocation1 [shape = 'u32[72,128]{1,0:T(1,128)}', space=vmem, size = 0x9000, scoped, tag = 'internal scratch']
  #allocation2 [shape = 'f32[10,10,80]{2,1,0:T(8,128)}', space=vmem, size = 0x14000, scoped, tag = 'scratch operand']
  %s0 = inlined_call_operand.vmem [shape: f32[2,64,8], index: 0, kind: input, shape index: {}]
  %s1 = inlined_call_operand.vmem [shape: f32[8,80], index: 1, kind: input, shape index: {}]
  %s2 = inlined_call_operand.vmem [shape: f32[1,80], index: 2, kind: input, shape index: {}]
  %s3 = inlined_call_operand.vmem [shape: f32[1,80], index: 3, kind: input, shape index: {}]
  %s4 = inlined_call_operand.vmem [shape: f32[1,80], index: 4, kind: input, shape index: {}]
  %s5 = inlined_call_operand.vmem [shape: f32[9,80], index: 5, kind: input, shape index: {}]
  %s6 = inlined_call_operand.vmem [shape: f32[1,80], index: 6, kind: input, shape index: {}]
  %s7 = inlined_call_operand.vmem [shape: f32[9,80,72], index: 7, kind: input, shape index: {}]
  %s8 = inlined_call_operand.vmem [shape: f32[1,72], index: 8, kind: input, shape index: {}]
  %s9 = inlined_call_operand.vmem [shape: f32[80,24], index: 9, kind: input, shape index: {}]
  %s10 = inlined_call_operand.vmem [shape: f32[1,24], index: 10, kind: input, shape index: {}]
  %s11 = inlined_call_operand.vmem [shape: f32[2,64,80], index: 11, kind: output, shape index: {0}]
  %s12 = inlined_call_operand.vmem [shape: f32[2,64,72], index: 12, kind: output, shape index: {1}]
  %s13 = inlined_call_operand.vmem [shape: f32[2,64,24], index: 13, kind: output, shape index: {2}]
  %14 = xla_tuple %s11, %s12, %s13
  %s15 = sld [smem:[#allocation0]]
  $region93: #{aa_inverted_bottleneck_forward.3} parent=0
    _
  %s17 = ssub.s32 1, %s15
  %s18 = scalar_select 0, %s17, %s15
  loop: start=0, step=1, limit=4
  $region2: #{aa_inverted_bottleneck_forward.3} parent=0 // loop_pre_header
    _
  $region3: #{aa_inverted_bottleneck_forward.3} parent=0 // loop_header
    %s20 = sphi 0, %s24
    %p21 = scmp.ge.s32.totalorder %s20, 4
    %s30 = sphi 0, %s32
    %s33 = sphi 0, %s30
    %s34 = sphi 0, %s33
    %s50 = sphi 0, %s34
    %s54 = sphi 0, %s54
    %s56 = sphi 0, %s54
    %s57 = sphi 0, %s56
    %s71 = sphi 0, %s57
    %s75 = sphi 0, %s75
    %s77 = sphi 0, %s75
    %s78 = sphi 0, %s77
    %s92 = sphi 0, %s78
    %s96 = sphi 0, %s96
    %s98 = sphi 0, %s96
    %s99 = sphi 0, %s98
    %s113 = sphi 0, %s99
    %s117 = sphi 0, %s117
    %s119 = sphi 0, %s117
    %s120 = sphi 0, %s119
    %s134 = sphi 0, %s120
    %s138 = sphi 0, %s138
    %s140 = sphi 0, %s138
    %s141 = sphi 0, %s140
    %s155 = sphi 0, %s141
    %s159 = sphi 0, %s159
    %s161 = sphi 0, %s159
    %s162 = sphi 0, %s161
    %s176 = sphi 0, %s162
    %s180 = sphi 0, %s180
    %s182 = sphi 0, %s180
    %s183 = sphi 0, %s182
    %s197 = sphi 0, %s183
    %s201 = sphi 0, %s201
    %s203 = sphi 0, %s201
    %s204 = sphi 0, %s203
    %s218 = sphi 0, %s204
    %s222 = sphi 0, %s222
    %s224 = sphi 0, %s222
    %s225 = sphi 0, %s224
    %s239 = sphi 0, %s225
    %s243 = sphi 0, %s243
    %s245 = sphi 0, %s243
    %s246 = sphi 0, %s245
    %s260 = sphi 0, %s246
    %s266 = sphi 0, %s268
    %s269 = sphi 0, %s266
    %s270 = sphi 0, %s269
    %s286 = sphi 0, %s270
    %s292 = sphi 0, %s294
    %s295 = sphi 0, %s292
    %s296 = sphi 0, %s295
    %s312 = sphi 0, %s296
    %s318 = sphi 0, %s320
    %s321 = sphi 0, %s318
    %s322 = sphi 0, %s321
    %s338 = sphi 0, %s322
  $region4: #{aa_inverted_bottleneck_forward.3} parent=0 // loop_header_branch
    %23 = sbr.rel (%p21) target = $region8
  $region5: #{aa_inverted_bottleneck_forward.3} parent=0 // loop_body
    %s25 = ssub.s32 %s20, 1
    %s26 = ssub.s32 %s20, 2
    %s27 = sadd.s32 %s20, 1
    %s28 = ssub.s32 %s20, %s27
    %p29 = scmp.eq.s32.totalorder %s28, 0
    %s31 = sadd.s32 %s30, 1
    %s32 = scalar_select %p29, %s30, %s31
    %p35 = pneg %p29
    %p36 = scmp.eq.s32.totalorder %s20, 1
    %p37 = por %p35, %p36
    %p38 = scmp.ne.s32.totalorder %s30, %s33
    %p39 = scmp.eq.s32.totalorder %s20, 0
    %p40 = por %p38, %p39
    %p41 = scmp.ne.s32.totalorder %s30, %s33
    %p42 = scmp.eq.s32.totalorder %s25, 1
    %p43 = por %p41, %p42
    %p44 = scmp.ne.s32.totalorder %s33, %s34
    %p45 = scmp.eq.s32.totalorder %s25, 0
    %p46 = por %p44, %p45
    %p47 = scmp.ne.s32.totalorder %s33, %s34
    %p48 = scmp.eq.s32.totalorder %s26, 1
    %p49 = por %p47, %p48
    %p51 = scmp.ne.s32.totalorder %s34, %s50
    %p52 = scmp.eq.s32.totalorder %s26, 0
    %p53 = por %p51, %p52
    %s55 = sadd.s32 %s54, 1
    %p58 = scmp.eq.s32.totalorder %s20, 1
    %p59 = scmp.ne.s32.totalorder %s54, %s56
    %p60 = scmp.eq.s32.totalorder %s20, 0
    %p61 = por %p59, %p60
    %p62 = scmp.ne.s32.totalorder %s54, %s56
    %p63 = scmp.eq.s32.totalorder %s25, 1
    %p64 = por %p62, %p63
    %p65 = scmp.ne.s32.totalorder %s56, %s57
    %p66 = scmp.eq.s32.totalorder %s25, 0
    %p67 = por %p65, %p66
    %p68 = scmp.ne.s32.totalorder %s56, %s57
    %p69 = scmp.eq.s32.totalorder %s26, 1
    %p70 = por %p68, %p69
    %p72 = scmp.ne.s32.totalorder %s57, %s71
    %p73 = scmp.eq.s32.totalorder %s26, 0
    %p74 = por %p72, %p73
    %s76 = sadd.s32 %s75, 1
    %p79 = scmp.eq.s32.totalorder %s20, 1
    %p80 = scmp.ne.s32.totalorder %s75, %s77
    %p81 = scmp.eq.s32.totalorder %s20, 0
    %p82 = por %p80, %p81
    %p83 = scmp.ne.s32.totalorder %s75, %s77
    %p84 = scmp.eq.s32.totalorder %s25, 1
    %p85 = por %p83, %p84
    %p86 = scmp.ne.s32.totalorder %s77, %s78
    %p87 = scmp.eq.s32.totalorder %s25, 0
    %p88 = por %p86, %p87
    %p89 = scmp.ne.s32.totalorder %s77, %s78
    %p90 = scmp.eq.s32.totalorder %s26, 1
    %p91 = por %p89, %p90
    %p93 = scmp.ne.s32.totalorder %s78, %s92
    %p94 = scmp.eq.s32.totalorder %s26, 0
    %p95 = por %p93, %p94
    %s97 = sadd.s32 %s96, 1
    %p100 = scmp.eq.s32.totalorder %s20, 1
    %p101 = scmp.ne.s32.totalorder %s96, %s98
    %p102 = scmp.eq.s32.totalorder %s20, 0
    %p103 = por %p101, %p102
    %p104 = scmp.ne.s32.totalorder %s96, %s98
    %p105 = scmp.eq.s32.totalorder %s25, 1
    %p106 = por %p104, %p105
    %p107 = scmp.ne.s32.totalorder %s98, %s99
    %p108 = scmp.eq.s32.totalorder %s25, 0
    %p109 = por %p107, %p108
    %p110 = scmp.ne.s32.totalorder %s98, %s99
    %p111 = scmp.eq.s32.totalorder %s26, 1
    %p112 = por %p110, %p111
    %p114 = scmp.ne.s32.totalorder %s99, %s113
    %p115 = scmp.eq.s32.totalorder %s26, 0
    %p116 = por %p114, %p115
    %s118 = sadd.s32 %s117, 1
    %p121 = scmp.eq.s32.totalorder %s20, 1
    %p122 = scmp.ne.s32.totalorder %s117, %s119
    %p123 = scmp.eq.s32.totalorder %s20, 0
    %p124 = por %p122, %p123
    %p125 = scmp.ne.s32.totalorder %s117, %s119
    %p126 = scmp.eq.s32.totalorder %s25, 1
    %p127 = por %p125, %p126
    %p128 = scmp.ne.s32.totalorder %s119, %s120
    %p129 = scmp.eq.s32.totalorder %s25, 0
    %p130 = por %p128, %p129
    %p131 = scmp.ne.s32.totalorder %s119, %s120
    %p132 = scmp.eq.s32.totalorder %s26, 1
    %p133 = por %p131, %p132
    %p135 = scmp.ne.s32.totalorder %s120, %s134
    %p136 = scmp.eq.s32.totalorder %s26, 0
    %p137 = por %p135, %p136
    %s139 = sadd.s32 %s138, 1
    %p142 = scmp.eq.s32.totalorder %s20, 1
    %p143 = scmp.ne.s32.totalorder %s138, %s140
    %p144 = scmp.eq.s32.totalorder %s20, 0
    %p145 = por %p143, %p144
    %p146 = scmp.ne.s32.totalorder %s138, %s140
    %p147 = scmp.eq.s32.totalorder %s25, 1
    %p148 = por %p146, %p147
    %p149 = scmp.ne.s32.totalorder %s140, %s141
    %p150 = scmp.eq.s32.totalorder %s25, 0
    %p151 = por %p149, %p150
    %p152 = scmp.ne.s32.totalorder %s140, %s141
    %p153 = scmp.eq.s32.totalorder %s26, 1
    %p154 = por %p152, %p153
    %p156 = scmp.ne.s32.totalorder %s141, %s155
    %p157 = scmp.eq.s32.totalorder %s26, 0
    %p158 = por %p156, %p157
    %s160 = sadd.s32 %s159, 1
    %p163 = scmp.eq.s32.totalorder %s20, 1
    %p164 = scmp.ne.s32.totalorder %s159, %s161
    %p165 = scmp.eq.s32.totalorder %s20, 0
    %p166 = por %p164, %p165
    %p167 = scmp.ne.s32.totalorder %s159, %s161
    %p168 = scmp.eq.s32.totalorder %s25, 1
    %p169 = por %p167, %p168
    %p170 = scmp.ne.s32.totalorder %s161, %s162
    %p171 = scmp.eq.s32.totalorder %s25, 0
    %p172 = por %p170, %p171
    %p173 = scmp.ne.s32.totalorder %s161, %s162
    %p174 = scmp.eq.s32.totalorder %s26, 1
    %p175 = por %p173, %p174
    %p177 = scmp.ne.s32.totalorder %s162, %s176
    %p178 = scmp.eq.s32.totalorder %s26, 0
    %p179 = por %p177, %p178
    %s181 = sadd.s32 %s180, 1
    %p184 = scmp.eq.s32.totalorder %s20, 1
    %p185 = scmp.ne.s32.totalorder %s180, %s182
    %p186 = scmp.eq.s32.totalorder %s20, 0
    %p187 = por %p185, %p186
    %p188 = scmp.ne.s32.totalorder %s180, %s182
    %p189 = scmp.eq.s32.totalorder %s25, 1
    %p190 = por %p188, %p189
    %p191 = scmp.ne.s32.totalorder %s182, %s183
    %p192 = scmp.eq.s32.totalorder %s25, 0
    %p193 = por %p191, %p192
    %p194 = scmp.ne.s32.totalorder %s182, %s183
    %p195 = scmp.eq.s32.totalorder %s26, 1
    %p196 = por %p194, %p195
    %p198 = scmp.ne.s32.totalorder %s183, %s197
    %p199 = scmp.eq.s32.totalorder %s26, 0
    %p200 = por %p198, %p199
    %s202 = sadd.s32 %s201, 1
    %p205 = scmp.eq.s32.totalorder %s20, 1
    %p206 = scmp.ne.s32.totalorder %s201, %s203
    %p207 = scmp.eq.s32.totalorder %s20, 0
    %p208 = por %p206, %p207
    %p209 = scmp.ne.s32.totalorder %s201, %s203
    %p210 = scmp.eq.s32.totalorder %s25, 1
    %p211 = por %p209, %p210
    %p212 = scmp.ne.s32.totalorder %s203, %s204
    %p213 = scmp.eq.s32.totalorder %s25, 0
    %p214 = por %p212, %p213
    %p215 = scmp.ne.s32.totalorder %s203, %s204
    %p216 = scmp.eq.s32.totalorder %s26, 1
    %p217 = por %p215, %p216
    %p219 = scmp.ne.s32.totalorder %s204, %s218
    %p220 = scmp.eq.s32.totalorder %s26, 0
    %p221 = por %p219, %p220
    %s223 = sadd.s32 %s222, 1
    %p226 = scmp.eq.s32.totalorder %s20, 1
    %p227 = scmp.ne.s32.totalorder %s222, %s224
    %p228 = scmp.eq.s32.totalorder %s20, 0
    %p229 = por %p227, %p228
    %p230 = scmp.ne.s32.totalorder %s222, %s224
    %p231 = scmp.eq.s32.totalorder %s25, 1
    %p232 = por %p230, %p231
    %p233 = scmp.ne.s32.totalorder %s224, %s225
    %p234 = scmp.eq.s32.totalorder %s25, 0
    %p235 = por %p233, %p234
    %p236 = scmp.ne.s32.totalorder %s224, %s225
    %p237 = scmp.eq.s32.totalorder %s26, 1
    %p238 = por %p236, %p237
    %p240 = scmp.ne.s32.totalorder %s225, %s239
    %p241 = scmp.eq.s32.totalorder %s26, 0
    %p242 = por %p240, %p241
    %s244 = sadd.s32 %s243, 1
    %p247 = scmp.eq.s32.totalorder %s20, 1
    %p248 = scmp.ne.s32.totalorder %s243, %s245
    %p249 = scmp.eq.s32.totalorder %s20, 0
    %p250 = por %p248, %p249
    %p251 = scmp.ne.s32.totalorder %s243, %s245
    %p252 = scmp.eq.s32.totalorder %s25, 1
    %p253 = por %p251, %p252
    %p254 = scmp.ne.s32.totalorder %s245, %s246
    %p255 = scmp.eq.s32.totalorder %s25, 0
    %p256 = por %p254, %p255
    %p257 = scmp.ne.s32.totalorder %s245, %s246
    %p258 = scmp.eq.s32.totalorder %s26, 1
    %p259 = por %p257, %p258
    %p261 = scmp.ne.s32.totalorder %s246, %s260
    %p262 = scmp.eq.s32.totalorder %s26, 0
    %p263 = por %p261, %p262
    %s264 = ssub.s32 %s20, %s27
    %p265 = scmp.eq.s32.totalorder %s264, 0
    %s267 = sadd.s32 %s266, 1
    %s268 = scalar_select %p265, %s266, %s267
    %p271 = pneg %p265
    %p272 = scmp.eq.s32.totalorder %s20, 1
    %p273 = por %p271, %p272
    %p274 = scmp.ne.s32.totalorder %s266, %s269
    %p275 = scmp.eq.s32.totalorder %s20, 0
    %p276 = por %p274, %p275
    %p277 = scmp.ne.s32.totalorder %s266, %s269
    %p278 = scmp.eq.s32.totalorder %s25, 1
    %p279 = por %p277, %p278
    %p280 = scmp.ne.s32.totalorder %s269, %s270
    %p281 = scmp.eq.s32.totalorder %s25, 0
    %p282 = por %p280, %p281
    %p283 = scmp.ne.s32.totalorder %s269, %s270
    %p284 = scmp.eq.s32.totalorder %s26, 1
    %p285 = por %p283, %p284
    %p287 = scmp.ne.s32.totalorder %s270, %s286
    %p288 = scmp.eq.s32.totalorder %s26, 0
    %p289 = por %p287, %p288
    %s290 = ssub.s32 %s20, %s27
    %p291 = scmp.eq.s32.totalorder %s290, 0
    %s293 = sadd.s32 %s292, 1
    %s294 = scalar_select %p291, %s292, %s293
    %p297 = pneg %p291
    %p298 = scmp.eq.s32.totalorder %s20, 1
    %p299 = por %p297, %p298
    %p300 = scmp.ne.s32.totalorder %s292, %s295
    %p301 = scmp.eq.s32.totalorder %s20, 0
    %p302 = por %p300, %p301
    %p303 = scmp.ne.s32.totalorder %s292, %s295
    %p304 = scmp.eq.s32.totalorder %s25, 1
    %p305 = por %p303, %p304
    %p306 = scmp.ne.s32.totalorder %s295, %s296
    %p307 = scmp.eq.s32.totalorder %s25, 0
    %p308 = por %p306, %p307
    %p309 = scmp.ne.s32.totalorder %s295, %s296
    %p310 = scmp.eq.s32.totalorder %s26, 1
    %p311 = por %p309, %p310
    %p313 = scmp.ne.s32.totalorder %s296, %s312
    %p314 = scmp.eq.s32.totalorder %s26, 0
    %p315 = por %p313, %p314
    %s316 = ssub.s32 %s20, %s27
    %p317 = scmp.eq.s32.totalorder %s316, 0
    %s319 = sadd.s32 %s318, 1
    %s320 = scalar_select %p317, %s318, %s319
    %p323 = pneg %p317
    %p324 = scmp.eq.s32.totalorder %s20, 1
    %p325 = por %p323, %p324
    %p326 = scmp.ne.s32.totalorder %s318, %s321
    %p327 = scmp.eq.s32.totalorder %s20, 0
    %p328 = por %p326, %p327
    %p329 = scmp.ne.s32.totalorder %s318, %s321
    %p330 = scmp.eq.s32.totalorder %s25, 1
    %p331 = por %p329, %p330
    %p332 = scmp.ne.s32.totalorder %s321, %s322
    %p333 = scmp.eq.s32.totalorder %s25, 0
    %p334 = por %p332, %p333
    %p335 = scmp.ne.s32.totalorder %s321, %s322
    %p336 = scmp.eq.s32.totalorder %s26, 1
    %p337 = por %p335, %p336
    %p339 = scmp.ne.s32.totalorder %s322, %s338
    %p340 = scmp.eq.s32.totalorder %s26, 0
    %p341 = por %p339, %p340
    %p342 = scmp.le.s32.totalorder 1, %s20
    %p343 = scmp.lt.s32.totalorder %s20, 3
    %p344 = pnand %p342, %p343
    %p345 = pneg %p344
    // Predicated region
    $region9: #{aa_inverted_bottleneck_forward.3} parent=5 // pred_check
      _
    $region10: #{aa_inverted_bottleneck_forward.3} parent=5 // pred_check_branch
      %347 = sbr.rel (%p344) target = $region12
    $region11: #{aa_inverted_bottleneck_forward.3} parent=5 // pred_region
      %s348 = ssub.s32 %s20, 1
      // Predicated region
      $region13: #{aa_inverted_bottleneck_forward.3} parent=11 // pred_check
        %p349 = pneg %p67
      $region14: #{aa_inverted_bottleneck_forward.3} parent=11 // pred_check_branch
        %351 = sbr.rel (%p349) target = $region16
      $region15: #{aa_inverted_bottleneck_forward.3} parent=11 // pred_region
        _
      $region16: #{aa_inverted_bottleneck_forward.3} parent=11 // pred_fallthru
        _
      // Predicated region
      $region17: #{aa_inverted_bottleneck_forward.3} parent=11 // pred_check
        %p352 = pneg %p88
      $region18: #{aa_inverted_bottleneck_forward.3} parent=11 // pred_check_branch
        %354 = sbr.rel (%p352) target = $region20
      $region19: #{aa_inverted_bottleneck_forward.3} parent=11 // pred_region
        _
      $region20: #{aa_inverted_bottleneck_forward.3} parent=11 // pred_fallthru
        _
      // Predicated region
      $region21: #{aa_inverted_bottleneck_forward.3} parent=11 // pred_check
        %p355 = pneg %p109
      $region22: #{aa_inverted_bottleneck_forward.3} parent=11 // pred_check_branch
        %357 = sbr.rel (%p355) target = $region24
      $region23: #{aa_inverted_bottleneck_forward.3} parent=11 // pred_region
        _
      $region24: #{aa_inverted_bottleneck_forward.3} parent=11 // pred_fallthru
        _
      // Predicated region
      $region25: #{aa_inverted_bottleneck_forward.3} parent=11 // pred_check
        %p358 = pneg %p130
      $region26: #{aa_inverted_bottleneck_forward.3} parent=11 // pred_check_branch
        %360 = sbr.rel (%p358) target = $region28
      $region27: #{aa_inverted_bottleneck_forward.3} parent=11 // pred_region
        _
      $region28: #{aa_inverted_bottleneck_forward.3} parent=11 // pred_fallthru
        _
      // Predicated region
      $region29: #{aa_inverted_bottleneck_forward.3} parent=11 // pred_check
        %p361 = pneg %p151
      $region30: #{aa_inverted_bottleneck_forward.3} parent=11 // pred_check_branch
        %363 = sbr.rel (%p361) target = $region32
      $region31: #{aa_inverted_bottleneck_forward.3} parent=11 // pred_region
        _
      $region32: #{aa_inverted_bottleneck_forward.3} parent=11 // pred_fallthru
        _
      // Predicated region
      $region33: #{aa_inverted_bottleneck_forward.3} parent=11 // pred_check
        %p364 = pneg %p172
      $region34: #{aa_inverted_bottleneck_forward.3} parent=11 // pred_check_branch
        %366 = sbr.rel (%p364) target = $region36
      $region35: #{aa_inverted_bottleneck_forward.3} parent=11 // pred_region
        _
      $region36: #{aa_inverted_bottleneck_forward.3} parent=11 // pred_fallthru
        _
      // Predicated region
      $region37: #{aa_inverted_bottleneck_forward.3} parent=11 // pred_check
        %p367 = pneg %p193
      $region38: #{aa_inverted_bottleneck_forward.3} parent=11 // pred_check_branch
        %369 = sbr.rel (%p367) target = $region40
      $region39: #{aa_inverted_bottleneck_forward.3} parent=11 // pred_region
        _
      $region40: #{aa_inverted_bottleneck_forward.3} parent=11 // pred_fallthru
        _
      // Predicated region
      $region41: #{aa_inverted_bottleneck_forward.3} parent=11 // pred_check
        %p370 = pneg %p214
      $region42: #{aa_inverted_bottleneck_forward.3} parent=11 // pred_check_branch
        %372 = sbr.rel (%p370) target = $region44
      $region43: #{aa_inverted_bottleneck_forward.3} parent=11 // pred_region
        _
      $region44: #{aa_inverted_bottleneck_forward.3} parent=11 // pred_fallthru
        _
      // Predicated region
      $region45: #{aa_inverted_bottleneck_forward.3} parent=11 // pred_check
        %p373 = pneg %p235
      $region46: #{aa_inverted_bottleneck_forward.3} parent=11 // pred_check_branch
        %375 = sbr.rel (%p373) target = $region48
      $region47: #{aa_inverted_bottleneck_forward.3} parent=11 // pred_region
        _
      $region48: #{aa_inverted_bottleneck_forward.3} parent=11 // pred_fallthru
        _
      // Predicated region
      $region49: #{aa_inverted_bottleneck_forward.3} parent=11 // pred_check
        %p376 = pneg %p256
      $region50: #{aa_inverted_bottleneck_forward.3} parent=11 // pred_check_branch
        %378 = sbr.rel (%p376) target = $region52
      $region51: #{aa_inverted_bottleneck_forward.3} parent=11 // pred_region
        _
      $region52: #{aa_inverted_bottleneck_forward.3} parent=11 // pred_fallthru
        _
    $region12: #{aa_inverted_bottleneck_forward.3} parent=5 // pred_fallthru
      _
    %p379 = scmp.lt.s32.totalorder %s20, 2
    // Predicated region
    $region53: #{aa_inverted_bottleneck_forward.3} parent=5 // pred_check
      %p380 = pneg %p379
    $region54: #{aa_inverted_bottleneck_forward.3} parent=5 // pred_check_branch
      %382 = sbr.rel (%p380) target = $region56
    $region55: #{aa_inverted_bottleneck_forward.3} parent=5 // pred_region
      // Predicated region
      $region57: #{aa_inverted_bottleneck_forward.3} parent=55 // pred_check
        %p383 = pneg %p40
      $region58: #{aa_inverted_bottleneck_forward.3} parent=55 // pred_check_branch
        %385 = sbr.rel (%p383) target = $region60
      $region59: #{aa_inverted_bottleneck_forward.3} parent=55 // pred_region
        %p386 = scmp.lt.s32.totalorder %s20, 1
        %s387 = scalar_select %p386, %s20, 1
        %s388 = smul.addr %s387, 8
        %s389 = smul.addr %s388, 8
        %s390 = scalar_lea.vmem %s0, %s389
      $region60: #{aa_inverted_bottleneck_forward.3} parent=55 // pred_fallthru
        _
    $region56: #{aa_inverted_bottleneck_forward.3} parent=5 // pred_fallthru
      _
    %p391 = scmp.le.s32.totalorder 1, %s20
    %p392 = scmp.lt.s32.totalorder %s20, 3
    %p393 = pnand %p391, %p392
    %p394 = pneg %p393
    // Predicated region
    $region61: #{aa_inverted_bottleneck_forward.3} parent=5 // pred_check
      _
    $region62: #{aa_inverted_bottleneck_forward.3} parent=5 // pred_check_branch
      %396 = sbr.rel (%p393) target = $region64
    $region63: #{aa_inverted_bottleneck_forward.3} parent=5 // pred_region
      %s397 = ssub.s32 %s20, 1
      %p398 = scmp.lt.s32.totalorder %s25, 1
      %s399 = scalar_select %p398, %s25, 1
      %s400 = smul.addr %s399, 8
      %s401 = smul.addr %s400, 8
      %s402 = scalar_lea.vmem %s0, %s401
      %p403 = pneg %p46
      %p404 = pneg %p43
      %p405 = pneg %p67
      %p406 = pneg %p64
      %p407 = pneg %p88
      %p408 = pneg %p85
      %p409 = pneg %p109
      %p410 = pneg %p106
      %p411 = pneg %p130
      %p412 = pneg %p127
      %p413 = pneg %p151
      %p414 = pneg %p148
      %p415 = pneg %p172
      %p416 = pneg %p169
      %p417 = pneg %p193
      %p418 = pneg %p190
      %p419 = pneg %p214
      %p420 = pneg %p211
      %p421 = pneg %p235
      %p422 = pneg %p232
      %p423 = pneg %p256
      %p424 = pneg %p253
      %p425 = pneg %p282
      %p426 = pneg %p279
      %p427 = scmp.lt.s32.totalorder %s25, 1
      %s428 = scalar_select %p427, %s25, 1
      %s429 = smul.addr %s428, 8
      %s430 = smul.addr %s429, 8
      %s431 = scalar_lea.vmem %s11, %s430
      %p432 = pneg %p308
      %p433 = pneg %p305
      %p434 = scmp.lt.s32.totalorder %s25, 1
      %s435 = scalar_select %p434, %s25, 1
      %s436 = smul.addr %s435, 8
      %s437 = smul.addr %s436, 8
      %s438 = scalar_lea.vmem %s12, %s437
      %p439 = pneg %p334
      %p440 = pneg %p331
      %p441 = scmp.lt.s32.totalorder %s25, 1
      %s442 = scalar_select %p441, %s25, 1
      %s443 = smul.addr %s442, 8
      %s444 = smul.addr %s443, 8
      %s445 = scalar_lea.vmem %s13, %s444
      %p446 = scmp.lt.s32.totalorder %s25, 1
      %s447 = scalar_select %p446, %s25, 1
      %s448 = smul.addr %s447, 8
      %s449 = smul.addr %s448, 8
      %s450 = scalar_lea.vmem %s0, %s449
      %p451 = scmp.lt.s32.totalorder %s25, 1
      %s452 = scalar_select %p451, %s25, 1
      %s453 = smul.addr %s452, 8
      %s454 = smul.addr %s453, 8
      %s455 = scalar_lea.vmem %s11, %s454
      %p456 = scmp.lt.s32.totalorder %s25, 1
      %s457 = scalar_select %p456, %s25, 1
      %s458 = smul.addr %s457, 8
      %s459 = smul.addr %s458, 8
      %s460 = scalar_lea.vmem %s12, %s459
      %p461 = scmp.lt.s32.totalorder %s25, 1
      %s462 = scalar_select %p461, %s25, 1
      %s463 = smul.addr %s462, 8
      %s464 = smul.addr %s463, 8
      %s465 = scalar_lea.vmem %s13, %s464
      %v466 = vld [vmem:[%s3] sm:$0x1]
      %v467 = vld [vmem:[%s4] sm:$0x1]
      %v468 = vld [vmem:[%s450] sm:$0xff]
      %v469 = vld [vmem:[%s450 + $0x8] sm:$0xff]
      %v470 = vld [vmem:[%s450 + $0x10] sm:$0xff]
      %v471 = vld [vmem:[%s450 + $0x18] sm:$0xff]
      %v472 = vld [vmem:[%s450 + $0x20] sm:$0xff]
      %v473 = vld [vmem:[%s450 + $0x28] sm:$0xff]
      %v474 = vld [vmem:[%s450 + $0x30] sm:$0xff]
      %v475 = vld [vmem:[%s450 + $0x38] sm:$0xff]
      %v476 = vld [vmem:[%s1] sm:$0xff]
      %v477 = vld [vmem:[%s2] sm:$0x1]
      %v479 = vperm.slane %v477, 0
      %vm481 = vcmask 64512
      %v483 = vsel %vm481, %v468, 0
      %v486 = vsel %vm481, %v469, 0
      %v489 = vsel %vm481, %v470, 0
      %v492 = vsel %vm481, %v471, 0
      %v495 = vsel %vm481, %v472, 0
      %v498 = vsel %vm481, %v473, 0
      %v501 = vsel %vm481, %v474, 0
      %v504 = vsel %vm481, %v475, 0
      %506 = vmatpush.msra.mxu0 0.0
      %507 = vmatpush.msra.mxu0 0.0
      %508 = vmatpush.msra.mxu0 0.0
      %509 = vmatpush.msra.mxu0 0.0
      %510 = vmatpush.msra.mxu0 0.0
      %511 = vmatpush.msra.mxu0 0.0
      %512 = vmatpush.msra.mxu0 0.0
      %513 = vmatpush.msra.mxu0 0.0
      %514 = vmatpush.msra.mxu0 0.0
      %515 = vmatpush.msra.mxu0 0.0
      %516 = vmatpush.msra.mxu0 0.0
      %517 = vmatpush.msra.mxu0 0.0
      %518 = vmatpush.msra.mxu0 0.0
      %519 = vmatpush.msra.mxu0 0.0
      %520 = vmatpush.msra.mxu0 0.0
      %521 = vmatpush.msra.mxu0 %v476
      %522 = vmatmul.f32.gmra.mxu0 %v483
      %v523 = vpop.f32.mrf.mxu0
      %v524 = vadd.f32 %v479, %v523
      %525 = vmatmul.f32.gmra.mxu0 %v486
      %v526 = vpop.f32.mrf.mxu0
      %v527 = vadd.f32 %v479, %v526
      %528 = vmatmul.f32.gmra.mxu0 %v489
      %v529 = vpop.f32.mrf.mxu0
      %v530 = vadd.f32 %v479, %v529
      %531 = vmatmul.f32.gmra.mxu0 %v492
      %v532 = vpop.f32.mrf.mxu0
      %v533 = vadd.f32 %v479, %v532
      %534 = vmatmul.f32.gmra.mxu0 %v495
      %v535 = vpop.f32.mrf.mxu0
      %v536 = vadd.f32 %v479, %v535
      %537 = vmatmul.f32.gmra.mxu0 %v498
      %v538 = vpop.f32.mrf.mxu0
      %v539 = vadd.f32 %v479, %v538
      %540 = vmatmul.f32.gmra.mxu0 %v501
      %v541 = vpop.f32.mrf.mxu0
      %v542 = vadd.f32 %v479, %v541
      %543 = vmatmul.f32.gmra.mxu0 %v504
      %v544 = vpop.f32.mrf.mxu0
      %v545 = vadd.f32 %v479, %v544
      %546 = vdwg.mxu0
      %v548 = vperm.slane %v466, 0
      %v550 = vmul.f32 %v524, %v548
      %v551 = vmul.f32 %v527, %v548
      %v552 = vmul.f32 %v530, %v548
      %v553 = vmul.f32 %v533, %v548
      %v554 = vmul.f32 %v536, %v548
      %v555 = vmul.f32 %v539, %v548
      %v556 = vmul.f32 %v542, %v548
      %v557 = vmul.f32 %v545, %v548
      %v559 = vperm.slane %v467, 0
      %v561 = vadd.f32 %v550, %v559
      %v562 = vadd.f32 %v551, %v559
      %v563 = vadd.f32 %v552, %v559
      %v564 = vadd.f32 %v553, %v559
      %v565 = vadd.f32 %v554, %v559
      %v566 = vadd.f32 %v555, %v559
      %v567 = vadd.f32 %v556, %v559
      %v568 = vadd.f32 %v557, %v559
      %v569 = vmax.f32 %v561, 0.0
      %v570 = vmax.f32 %v562, 0.0
      %v571 = vmax.f32 %v563, 0.0
      %v572 = vmax.f32 %v564, 0.0
      %v573 = vmax.f32 %v565, 0.0
      %v574 = vmax.f32 %v566, 0.0
      %v575 = vmax.f32 %v567, 0.0
      %v576 = vmax.f32 %v568, 0.0
      %v577 = vand.u32 2147483647, %v561
      %v578 = vand.u32 2147483647, %v562
      %v579 = vand.u32 2147483647, %v563
      %v580 = vand.u32 2147483647, %v564
      %v581 = vand.u32 2147483647, %v565
      %v582 = vand.u32 2147483647, %v566
      %v583 = vand.u32 2147483647, %v567
      %v584 = vand.u32 2147483647, %v568
      %v585 = vsub.f32 0.0, %v577
      %v586 = vsub.f32 0.0, %v578
      %v587 = vsub.f32 0.0, %v579
      %v588 = vsub.f32 0.0, %v580
      %v589 = vsub.f32 0.0, %v581
      %v590 = vsub.f32 0.0, %v582
      %v591 = vsub.f32 0.0, %v583
      %v592 = vsub.f32 0.0, %v584
      %v593 = vmul.f32 %v585, 1.442695
      %v594 = vpow.pop %v593
      %v595 = vmul.f32 %v586, 1.442695
      %v596 = vpow.pop %v595
      %v597 = vmul.f32 %v587, 1.442695
      %v598 = vpow.pop %v597
      %v599 = vmul.f32 %v588, 1.442695
      %v600 = vpow.pop %v599
      %v601 = vmul.f32 %v589, 1.442695
      %v602 = vpow.pop %v601
      %v603 = vmul.f32 %v590, 1.442695
      %v604 = vpow.pop %v603
      %v605 = vmul.f32 %v591, 1.442695
      %v606 = vpow.pop %v605
      %v607 = vmul.f32 %v592, 1.442695
      %v608 = vpow.pop %v607
      %v609 = vadd.f32 %v594, 1.0
      %v610 = vadd.f32 %v596, 1.0
      %v611 = vadd.f32 %v598, 1.0
      %v612 = vadd.f32 %v600, 1.0
      %v613 = vadd.f32 %v602, 1.0
      %v614 = vadd.f32 %v604, 1.0
      %v615 = vadd.f32 %v606, 1.0
      %v616 = vadd.f32 %v608, 1.0
      %v617 = vlog2.pop %v609
      %v618 = vmul.f32 %v617, 0.6931472
      %v619 = vlog2.pop %v610
      %v620 = vmul.f32 %v619, 0.6931472
      %v621 = vlog2.pop %v611
      %v622 = vmul.f32 %v621, 0.6931472
      %v623 = vlog2.pop %v612
      %v624 = vmul.f32 %v623, 0.6931472
      %v625 = vlog2.pop %v613
      %v626 = vmul.f32 %v625, 0.6931472
      %v627 = vlog2.pop %v614
      %v628 = vmul.f32 %v627, 0.6931472
      %v629 = vlog2.pop %v615
      %v630 = vmul.f32 %v629, 0.6931472
      %v631 = vlog2.pop %v616
      %v632 = vmul.f32 %v631, 0.6931472
      %v633 = vadd.f32 %v569, %v618
      %v634 = vadd.f32 %v570, %v620
      %v635 = vadd.f32 %v571, %v622
      %v636 = vadd.f32 %v572, %v624
      %v637 = vadd.f32 %v573, %v626
      %v638 = vadd.f32 %v574, %v628
      %v639 = vadd.f32 %v575, %v630
      %v640 = vadd.f32 %v576, %v632
      %v641 = vtanh.pop %v633
      %v642 = vtanh.pop %v634
      %v643 = vtanh.pop %v635
      %v644 = vtanh.pop %v636
      %v645 = vtanh.pop %v637
      %v646 = vtanh.pop %v638
      %v647 = vtanh.pop %v639
      %v648 = vtanh.pop %v640
      %v649 = vmul.f32 %v561, %v641
      %v650 = vmul.f32 %v562, %v642
      %v651 = vmul.f32 %v563, %v643
      %v652 = vmul.f32 %v564, %v644
      %v653 = vmul.f32 %v565, %v645
      %v654 = vmul.f32 %v566, %v646
      %v655 = vmul.f32 %v567, %v647
      %v656 = vmul.f32 %v568, %v648
      %vm657 = vcmask 654336
      %658 = vst.msk [vmem:[#allocation2] sm:$0xff] %vm657, 0.0
      %vm659 = vcmask 648192
      %660 = vst.msk [vmem:[#allocation2 + $0x8] sm:$0x3] %vm659, 0.0
      %661 = vst.msk [vmem:[#allocation2 + $0x10] sm:$0xff] %vm657, 0.0
      %662 = vst.msk [vmem:[#allocation2 + $0x18] sm:$0x3] %vm659, 0.0
      %663 = vst.msk [vmem:[#allocation2 + $0x20] sm:$0xff] %vm657, 0.0
      %664 = vst.msk [vmem:[#allocation2 + $0x28] sm:$0x3] %vm659, 0.0
      %665 = vst.msk [vmem:[#allocation2 + $0x30] sm:$0xff] %vm657, 0.0
      %666 = vst.msk [vmem:[#allocation2 + $0x38] sm:$0x3] %vm659, 0.0
      %667 = vst.msk [vmem:[#allocation2 + $0x40] sm:$0xff] %vm657, 0.0
      %668 = vst.msk [vmem:[#allocation2 + $0x48] sm:$0x3] %vm659, 0.0
      %669 = vst.msk [vmem:[#allocation2 + $0x50] sm:$0xff] %vm657, 0.0
      %670 = vst.msk [vmem:[#allocation2 + $0x58] sm:$0x3] %vm659, 0.0
      %671 = vst.msk [vmem:[#allocation2 + $0x60] sm:$0xff] %vm657, 0.0
      %672 = vst.msk [vmem:[#allocation2 + $0x68] sm:$0x3] %vm659, 0.0
      %673 = vst.msk [vmem:[#allocation2 + $0x70] sm:$0xff] %vm657, 0.0
      %674 = vst.msk [vmem:[#allocation2 + $0x78] sm:$0x3] %vm659, 0.0
      %675 = vst.msk [vmem:[#allocation2 + $0x80] sm:$0xff] %vm657, 0.0
      %676 = vst.msk [vmem:[#allocation2 + $0x88] sm:$0x3] %vm659, 0.0
      %677 = vst.msk [vmem:[#allocation2 + $0x90] sm:$0xff] %vm657, 0.0
      %678 = vst.msk [vmem:[#allocation2 + $0x98] sm:$0x3] %vm659, 0.0
      %s679 = scalar_lea.vmem [#allocation2], 16
      %680 = vst.msk [vmem:[%s679 + $0x1] sm:$0xff] %vm657, %v649
      %681 = vst.msk [vmem:[%s679 + $0x11] sm:$0xff] %vm657, %v650
      %682 = vst.msk [vmem:[%s679 + $0x21] sm:$0xff] %vm657, %v651
      %683 = vst.msk [vmem:[%s679 + $0x31] sm:$0xff] %vm657, %v652
      %684 = vst.msk [vmem:[%s679 + $0x41] sm:$0xff] %vm657, %v653
      %685 = vst.msk [vmem:[%s679 + $0x51] sm:$0xff] %vm657, %v654
      %686 = vst.msk [vmem:[%s679 + $0x61] sm:$0xff] %vm657, %v655
      %687 = vst.msk [vmem:[%s679 + $0x71] sm:$0xff] %vm657, %v656
      %v688 = vld [vmem:[#allocation2] sm:$0xff]
      %v689 = vld [vmem:[#allocation2 + $0x10] sm:$0xff]
      %v690 = vld [vmem:[#allocation2 + $0x20] sm:$0xff]
      %v691 = vld [vmem:[#allocation2 + $0x30] sm:$0xff]
      %v692 = vld [vmem:[#allocation2 + $0x40] sm:$0xff]
      %v693 = vld [vmem:[#allocation2 + $0x50] sm:$0xff]
      %v694 = vld [vmem:[#allocation2 + $0x60] sm:$0xff]
      %v695 = vld [vmem:[#allocation2 + $0x70] sm:$0xff]
      %v696 = vld [vmem:[%s5] sm:$0x1]
      %v697 = vperm.slane %v696, 0
      %v698 = vmul.f32 %v688, %v697
      %v699 = vmul.f32 %v689, %v697
      %v700 = vmul.f32 %v690, %v697
      %v701 = vmul.f32 %v691, %v697
      %v702 = vmul.f32 %v692, %v697
      %v703 = vmul.f32 %v693, %v697
      %v704 = vmul.f32 %v694, %v697
      %v705 = vmul.f32 %v695, %v697
      %v706 = vadd.f32 %v698, 0.0
      %v707 = vadd.f32 %v699, 0.0
      %v708 = vadd.f32 %v700, 0.0
      %v709 = vadd.f32 %v701, 0.0
      %v710 = vadd.f32 %v702, 0.0
      %v711 = vadd.f32 %v703, 0.0
      %v712 = vadd.f32 %v704, 0.0
      %v713 = vadd.f32 %v705, 0.0
      %v714 = vld [vmem:[#allocation2 + $0x1] sm:$0xff]
      %v715 = vld [vmem:[#allocation2 + $0x11] sm:$0xff]
      %v716 = vld [vmem:[#allocation2 + $0x21] sm:$0xff]
      %v717 = vld [vmem:[#allocation2 + $0x31] sm:$0xff]
      %v718 = vld [vmem:[#allocation2 + $0x41] sm:$0xff]
      %v719 = vld [vmem:[#allocation2 + $0x51] sm:$0xff]
      %v720 = vld [vmem:[#allocation2 + $0x61] sm:$0xff]
      %v721 = vld [vmem:[#allocation2 + $0x71] sm:$0xff]
      %v722 = vld [vmem:[%s5 + $0x1] sm:$0x1]
      %v723 = vperm.slane %v722, 0
      %v724 = vmul.f32 %v714, %v723
      %v725 = vmul.f32 %v715, %v723
      %v726 = vmul.f32 %v716, %v723
      %v727 = vmul.f32 %v717, %v723
      %v728 = vmul.f32 %v718, %v723
      %v729 = vmul.f32 %v719, %v723
      %v730 = vmul.f32 %v720, %v723
      %v731 = vmul.f32 %v721, %v723
      %v732 = vadd.f32 %v706, %v724
      %v733 = vadd.f32 %v707, %v725
      %v734 = vadd.f32 %v708, %v726
      %v735 = vadd.f32 %v709, %v727
      %v736 = vadd.f32 %v710, %v728
      %v737 = vadd.f32 %v711, %v729
      %v738 = vadd.f32 %v712, %v730
      %v739 = vadd.f32 %v713, %v731
      %v740 = vld [vmem:[#allocation2 + $0x2] sm:$0xff]
      %v741 = vld [vmem:[#allocation2 + $0x12] sm:$0xff]
      %v742 = vld [vmem:[#allocation2 + $0x22] sm:$0xff]
      %v743 = vld [vmem:[#allocation2 + $0x32] sm:$0xff]
      %v744 = vld [vmem:[#allocation2 + $0x42] sm:$0xff]
      %v745 = vld [vmem:[#allocation2 + $0x52] sm:$0xff]
      %v746 = vld [vmem:[#allocation2 + $0x62] sm:$0xff]
      %v747 = vld [vmem:[#allocation2 + $0x72] sm:$0xff]
      %v748 = vld [vmem:[%s5 + $0x2] sm:$0x1]
      %v749 = vperm.slane %v748, 0
      %v750 = vmul.f32 %v740, %v749
      %v751 = vmul.f32 %v741, %v749
      %v752 = vmul.f32 %v742, %v749
      %v753 = vmul.f32 %v743, %v749
      %v754 = vmul.f32 %v744, %v749
      %v755 = vmul.f32 %v745, %v749
      %v756 = vmul.f32 %v746, %v749
      %v757 = vmul.f32 %v747, %v749
      %v758 = vadd.f32 %v732, %v750
      %v759 = vadd.f32 %v733, %v751
      %v760 = vadd.f32 %v734, %v752
      %v761 = vadd.f32 %v735, %v753
      %v762 = vadd.f32 %v736, %v754
      %v763 = vadd.f32 %v737, %v755
      %v764 = vadd.f32 %v738, %v756
      %v765 = vadd.f32 %v739, %v757
      %v766 = vld [vmem:[%s679] sm:$0xff]
      %v767 = vld [vmem:[%s679 + $0x10] sm:$0xff]
      %v768 = vld [vmem:[%s679 + $0x20] sm:$0xff]
      %v769 = vld [vmem:[%s679 + $0x30] sm:$0xff]
      %v770 = vld [vmem:[%s679 + $0x40] sm:$0xff]
      %v771 = vld [vmem:[%s679 + $0x50] sm:$0xff]
      %v772 = vld [vmem:[%s679 + $0x60] sm:$0xff]
      %v773 = vld [vmem:[%s679 + $0x70] sm:$0xff]
      %v774 = vld [vmem:[%s5 + $0x3] sm:$0x1]
      %v775 = vperm.slane %v774, 0
      %v776 = vmul.f32 %v766, %v775
      %v777 = vmul.f32 %v767, %v775
      %v778 = vmul.f32 %v768, %v775
      %v779 = vmul.f32 %v769, %v775
      %v780 = vmul.f32 %v770, %v775
      %v781 = vmul.f32 %v771, %v775
      %v782 = vmul.f32 %v772, %v775
      %v783 = vmul.f32 %v773, %v775
      %v784 = vadd.f32 %v758, %v776
      %v785 = vadd.f32 %v759, %v777
      %v786 = vadd.f32 %v760, %v778
      %v787 = vadd.f32 %v761, %v779
      %v788 = vadd.f32 %v762, %v780
      %v789 = vadd.f32 %v763, %v781
      %v790 = vadd.f32 %v764, %v782
      %v791 = vadd.f32 %v765, %v783
      %v792 = vld [vmem:[%s679 + $0x1] sm:$0xff]
      %v793 = vld [vmem:[%s679 + $0x11] sm:$0xff]
      %v794 = vld [vmem:[%s679 + $0x21] sm:$0xff]
      %v795 = vld [vmem:[%s679 + $0x31] sm:$0xff]
      %v796 = vld [vmem:[%s679 + $0x41] sm:$0xff]
      %v797 = vld [vmem:[%s679 + $0x51] sm:$0xff]
      %v798 = vld [vmem:[%s679 + $0x61] sm:$0xff]
      %v799 = vld [vmem:[%s679 + $0x71] sm:$0xff]
      %v800 = vld [vmem:[%s5 + $0x4] sm:$0x1]
      %v801 = vperm.slane %v800, 0
      %v802 = vmul.f32 %v792, %v801
      %v803 = vmul.f32 %v793, %v801
      %v804 = vmul.f32 %v794, %v801
      %v805 = vmul.f32 %v795, %v801
      %v806 = vmul.f32 %v796, %v801
      %v807 = vmul.f32 %v797, %v801
      %v808 = vmul.f32 %v798, %v801
      %v809 = vmul.f32 %v799, %v801
      %v810 = vadd.f32 %v784, %v802
      %v811 = vadd.f32 %v785, %v803
      %v812 = vadd.f32 %v786, %v804
      %v813 = vadd.f32 %v787, %v805
      %v814 = vadd.f32 %v788, %v806
      %v815 = vadd.f32 %v789, %v807
      %v816 = vadd.f32 %v790, %v808
      %v817 = vadd.f32 %v791, %v809
      %v818 = vld [vmem:[%s679 + $0x2] sm:$0xff]
      %v819 = vld [vmem:[%s679 + $0x12] sm:$0xff]
      %v820 = vld [vmem:[%s679 + $0x22] sm:$0xff]
      %v821 = vld [vmem:[%s679 + $0x32] sm:$0xff]
      %v822 = vld [vmem:[%s679 + $0x42] sm:$0xff]
      %v823 = vld [vmem:[%s679 + $0x52] sm:$0xff]
      %v824 = vld [vmem:[%s679 + $0x62] sm:$0xff]
      %v825 = vld [vmem:[%s679 + $0x72] sm:$0xff]
      %v826 = vld [vmem:[%s5 + $0x5] sm:$0x1]
      %v827 = vperm.slane %v826, 0
      %v828 = vmul.f32 %v818, %v827
      %v829 = vmul.f32 %v819, %v827
      %v830 = vmul.f32 %v820, %v827
      %v831 = vmul.f32 %v821, %v827
      %v832 = vmul.f32 %v822, %v827
      %v833 = vmul.f32 %v823, %v827
      %v834 = vmul.f32 %v824, %v827
      %v835 = vmul.f32 %v825, %v827
      %v836 = vadd.f32 %v810, %v828
      %v837 = vadd.f32 %v811, %v829
      %v838 = vadd.f32 %v812, %v830
      %v839 = vadd.f32 %v813, %v831
      %v840 = vadd.f32 %v814, %v832
      %v841 = vadd.f32 %v815, %v833
      %v842 = vadd.f32 %v816, %v834
      %v843 = vadd.f32 %v817, %v835
      %s844 = scalar_lea.vmem [#allocation2], 32
      %v845 = vld [vmem:[%s844] sm:$0xff]
      %v846 = vld [vmem:[%s844 + $0x10] sm:$0xff]
      %v847 = vld [vmem:[%s844 + $0x20] sm:$0xff]
      %v848 = vld [vmem:[%s844 + $0x30] sm:$0xff]
      %v849 = vld [vmem:[%s844 + $0x40] sm:$0xff]
      %v850 = vld [vmem:[%s844 + $0x50] sm:$0xff]
      %v851 = vld [vmem:[%s844 + $0x60] sm:$0xff]
      %v852 = vld [vmem:[%s844 + $0x70] sm:$0xff]
      %v853 = vld [vmem:[%s5 + $0x6] sm:$0x1]
      %v854 = vperm.slane %v853, 0
      %v855 = vmul.f32 %v845, %v854
      %v856 = vmul.f32 %v846, %v854
      %v857 = vmul.f32 %v847, %v854
      %v858 = vmul.f32 %v848, %v854
      %v859 = vmul.f32 %v849, %v854
      %v860 = vmul.f32 %v850, %v854
      %v861 = vmul.f32 %v851, %v854
      %v862 = vmul.f32 %v852, %v854
      %v863 = vadd.f32 %v836, %v855
      %v864 = vadd.f32 %v837, %v856
      %v865 = vadd.f32 %v838, %v857
      %v866 = vadd.f32 %v839, %v858
      %v867 = vadd.f32 %v840, %v859
      %v868 = vadd.f32 %v841, %v860
      %v869 = vadd.f32 %v842, %v861
      %v870 = vadd.f32 %v843, %v862
      %v871 = vld [vmem:[%s844 + $0x1] sm:$0xff]
      %v872 = vld [vmem:[%s844 + $0x11] sm:$0xff]
      %v873 = vld [vmem:[%s844 + $0x21] sm:$0xff]
      %v874 = vld [vmem:[%s844 + $0x31] sm:$0xff]
      %v875 = vld [vmem:[%s844 + $0x41] sm:$0xff]
      %v876 = vld [vmem:[%s844 + $0x51] sm:$0xff]
      %v877 = vld [vmem:[%s844 + $0x61] sm:$0xff]
      %v878 = vld [vmem:[%s844 + $0x71] sm:$0xff]
      %v879 = vld [vmem:[%s5 + $0x7] sm:$0x1]
      %v880 = vperm.slane %v879, 0
      %v881 = vmul.f32 %v871, %v880
      %v882 = vmul.f32 %v872, %v880
      %v883 = vmul.f32 %v873, %v880
      %v884 = vmul.f32 %v874, %v880
      %v885 = vmul.f32 %v875, %v880
      %v886 = vmul.f32 %v876, %v880
      %v887 = vmul.f32 %v877, %v880
      %v888 = vmul.f32 %v878, %v880
      %v889 = vadd.f32 %v863, %v881
      %v890 = vadd.f32 %v864, %v882
      %v891 = vadd.f32 %v865, %v883
      %v892 = vadd.f32 %v866, %v884
      %v893 = vadd.f32 %v867, %v885
      %v894 = vadd.f32 %v868, %v886
      %v895 = vadd.f32 %v869, %v887
      %v896 = vadd.f32 %v870, %v888
      %v897 = vld [vmem:[%s844 + $0x2] sm:$0xff]
      %v898 = vld [vmem:[%s844 + $0x12] sm:$0xff]
      %v899 = vld [vmem:[%s844 + $0x22] sm:$0xff]
      %v900 = vld [vmem:[%s844 + $0x32] sm:$0xff]
      %v901 = vld [vmem:[%s844 + $0x42] sm:$0xff]
      %v902 = vld [vmem:[%s844 + $0x52] sm:$0xff]
      %v903 = vld [vmem:[%s844 + $0x62] sm:$0xff]
      %v904 = vld [vmem:[%s844 + $0x72] sm:$0xff]
      %v905 = vld [vmem:[%s5 + $0x8] sm:$0x1]
      %v906 = vperm.slane %v905, 0
      %v907 = vmul.f32 %v897, %v906
      %v908 = vmul.f32 %v898, %v906
      %v909 = vmul.f32 %v899, %v906
      %v910 = vmul.f32 %v900, %v906
      %v911 = vmul.f32 %v901, %v906
      %v912 = vmul.f32 %v902, %v906
      %v913 = vmul.f32 %v903, %v906
      %v914 = vmul.f32 %v904, %v906
      %v915 = vadd.f32 %v889, %v907
      %v916 = vadd.f32 %v890, %v908
      %v917 = vadd.f32 %v891, %v909
      %v918 = vadd.f32 %v892, %v910
      %v919 = vadd.f32 %v893, %v911
      %v920 = vadd.f32 %v894, %v912
      %v921 = vadd.f32 %v895, %v913
      %v922 = vadd.f32 %v896, %v914
      %v923 = vld [vmem:[%s6] sm:$0x1]
      %v925 = vperm.slane %v923, 0
      %v927 = vadd.f32 %v915, %v925
      %v928 = vadd.f32 %v916, %v925
      %v929 = vadd.f32 %v917, %v925
      %v930 = vadd.f32 %v918, %v925
      %v931 = vadd.f32 %v919, %v925
      %v932 = vadd.f32 %v920, %v925
      %v933 = vadd.f32 %v921, %v925
      %v934 = vadd.f32 %v922, %v925
      %v935 = vmul.f32 %v927, %v548
      %v936 = vmul.f32 %v928, %v548
      %v937 = vmul.f32 %v929, %v548
      %v938 = vmul.f32 %v930, %v548
      %v939 = vmul.f32 %v931, %v548
      %v940 = vmul.f32 %v932, %v548
      %v941 = vmul.f32 %v933, %v548
      %v942 = vmul.f32 %v934, %v548
      %v943 = vadd.f32 %v935, %v559
      %v944 = vadd.f32 %v936, %v559
      %v945 = vadd.f32 %v937, %v559
      %v946 = vadd.f32 %v938, %v559
      %v947 = vadd.f32 %v939, %v559
      %v948 = vadd.f32 %v940, %v559
      %v949 = vadd.f32 %v941, %v559
      %v950 = vadd.f32 %v942, %v559
      %v951 = vmax.f32 %v943, 0.0
      %v952 = vmax.f32 %v944, 0.0
      %v953 = vmax.f32 %v945, 0.0
      %v954 = vmax.f32 %v946, 0.0
      %v955 = vmax.f32 %v947, 0.0
      %v956 = vmax.f32 %v948, 0.0
      %v957 = vmax.f32 %v949, 0.0
      %v958 = vmax.f32 %v950, 0.0
      %v959 = vand.u32 2147483647, %v943
      %v960 = vand.u32 2147483647, %v944
      %v961 = vand.u32 2147483647, %v945
      %v962 = vand.u32 2147483647, %v946
      %v963 = vand.u32 2147483647, %v947
      %v964 = vand.u32 2147483647, %v948
      %v965 = vand.u32 2147483647, %v949
      %v966 = vand.u32 2147483647, %v950
      %v967 = vsub.f32 0.0, %v959
      %v968 = vsub.f32 0.0, %v960
      %v969 = vsub.f32 0.0, %v961
      %v970 = vsub.f32 0.0, %v962
      %v971 = vsub.f32 0.0, %v963
      %v972 = vsub.f32 0.0, %v964
      %v973 = vsub.f32 0.0, %v965
      %v974 = vsub.f32 0.0, %v966
      %v975 = vmul.f32 %v967, 1.442695
      %v976 = vpow.pop %v975
      %v977 = vmul.f32 %v968, 1.442695
      %v978 = vpow.pop %v977
      %v979 = vmul.f32 %v969, 1.442695
      %v980 = vpow.pop %v979
      %v981 = vmul.f32 %v970, 1.442695
      %v982 = vpow.pop %v981
      %v983 = vmul.f32 %v971, 1.442695
      %v984 = vpow.pop %v983
      %v985 = vmul.f32 %v972, 1.442695
      %v986 = vpow.pop %v985
      %v987 = vmul.f32 %v973, 1.442695
      %v988 = vpow.pop %v987
      %v989 = vmul.f32 %v974, 1.442695
      %v990 = vpow.pop %v989
      %v991 = vadd.f32 %v976, 1.0
      %v992 = vadd.f32 %v978, 1.0
      %v993 = vadd.f32 %v980, 1.0
      %v994 = vadd.f32 %v982, 1.0
      %v995 = vadd.f32 %v984, 1.0
      %v996 = vadd.f32 %v986, 1.0
      %v997 = vadd.f32 %v988, 1.0
      %v998 = vadd.f32 %v990, 1.0
      %v999 = vlog2.pop %v991
      %v1000 = vmul.f32 %v999, 0.6931472
      %v1001 = vlog2.pop %v992
      %v1002 = vmul.f32 %v1001, 0.6931472
      %v1003 = vlog2.pop %v993
      %v1004 = vmul.f32 %v1003, 0.6931472
      %v1005 = vlog2.pop %v994
      %v1006 = vmul.f32 %v1005, 0.6931472
      %v1007 = vlog2.pop %v995
      %v1008 = vmul.f32 %v1007, 0.6931472
      %v1009 = vlog2.pop %v996
      %v1010 = vmul.f32 %v1009, 0.6931472
      %v1011 = vlog2.pop %v997
      %v1012 = vmul.f32 %v1011, 0.6931472
      %v1013 = vlog2.pop %v998
      %v1014 = vmul.f32 %v1013, 0.6931472
      %v1015 = vadd.f32 %v951, %v1000
      %v1016 = vadd.f32 %v952, %v1002
      %v1017 = vadd.f32 %v953, %v1004
      %v1018 = vadd.f32 %v954, %v1006
      %v1019 = vadd.f32 %v955, %v1008
      %v1020 = vadd.f32 %v956, %v1010
      %v1021 = vadd.f32 %v957, %v1012
      %v1022 = vadd.f32 %v958, %v1014
      %v1023 = vtanh.pop %v1015
      %v1024 = vtanh.pop %v1016
      %v1025 = vtanh.pop %v1017
      %v1026 = vtanh.pop %v1018
      %v1027 = vtanh.pop %v1019
      %v1028 = vtanh.pop %v1020
      %v1029 = vtanh.pop %v1021
      %v1030 = vtanh.pop %v1022
      %v1031 = vmul.f32 %v943, %v1023
      %v1032 = vmul.f32 %v944, %v1024
      %v1033 = vmul.f32 %v945, %v1025
      %v1034 = vmul.f32 %v946, %v1026
      %v1035 = vmul.f32 %v947, %v1027
      %v1036 = vmul.f32 %v948, %v1028
      %v1037 = vmul.f32 %v949, %v1029
      %v1038 = vmul.f32 %v950, %v1030
      %1039 = vst.msk [vmem:[%s455] sm:$0xff] %vm657, %v1031
      %1040 = vst.msk [vmem:[%s455 + $0x8] sm:$0xff] %vm657, %v1032
      %1041 = vst.msk [vmem:[%s455 + $0x10] sm:$0xff] %vm657, %v1033
      %1042 = vst.msk [vmem:[%s455 + $0x18] sm:$0xff] %vm657, %v1034
      %1043 = vst.msk [vmem:[%s455 + $0x20] sm:$0xff] %vm657, %v1035
      %1044 = vst.msk [vmem:[%s455 + $0x28] sm:$0xff] %vm657, %v1036
      %1045 = vst.msk [vmem:[%s455 + $0x30] sm:$0xff] %vm657, %v1037
      %1046 = vst.msk [vmem:[%s455 + $0x38] sm:$0xff] %vm657, %v1038
      %1047 = vst.msk [vmem:[%s679 + $0x1] sm:$0xff] %vm657, %v1031
      %1048 = vst.msk [vmem:[%s679 + $0x11] sm:$0xff] %vm657, %v1032
      %1049 = vst.msk [vmem:[%s679 + $0x21] sm:$0xff] %vm657, %v1033
      %1050 = vst.msk [vmem:[%s679 + $0x31] sm:$0xff] %vm657, %v1034
      %1051 = vst.msk [vmem:[%s679 + $0x41] sm:$0xff] %vm657, %v1035
      %1052 = vst.msk [vmem:[%s679 + $0x51] sm:$0xff] %vm657, %v1036
      %1053 = vst.msk [vmem:[%s679 + $0x61] sm:$0xff] %vm657, %v1037
      %1054 = vst.msk [vmem:[%s679 + $0x71] sm:$0xff] %vm657, %v1038
      %v1055 = vld [vmem:[%s8] sm:$0x1]
      %v1057 = vperm.slane %v1055, 0
      %v1059 = vld [vmem:[#allocation2] sm:$0xff]
      %v1060 = vld [vmem:[#allocation2 + $0x10] sm:$0xff]
      %v1061 = vld [vmem:[#allocation2 + $0x20] sm:$0xff]
      %v1062 = vld [vmem:[#allocation2 + $0x30] sm:$0xff]
      %v1063 = vld [vmem:[#allocation2 + $0x40] sm:$0xff]
      %v1064 = vld [vmem:[#allocation2 + $0x50] sm:$0xff]
      %v1065 = vld [vmem:[#allocation2 + $0x60] sm:$0xff]
      %v1066 = vld [vmem:[#allocation2 + $0x70] sm:$0xff]
      %v1067 = vld [vmem:[%s7] sm:$0xff]
      %v1068 = vld [vmem:[%s7 + $0x8] sm:$0xff]
      %v1069 = vld [vmem:[%s7 + $0x10] sm:$0xff]
      %v1070 = vld [vmem:[%s7 + $0x18] sm:$0xff]
      %v1071 = vld [vmem:[%s7 + $0x20] sm:$0xff]
      %v1072 = vld [vmem:[%s7 + $0x28] sm:$0xff]
      %v1073 = vld [vmem:[%s7 + $0x30] sm:$0xff]
      %v1074 = vld [vmem:[%s7 + $0x38] sm:$0xff]
      %v1075 = vld [vmem:[%s7 + $0x40] sm:$0xff]
      %v1076 = vld [vmem:[%s7 + $0x48] sm:$0xff]
      %v1078 = vsel %vm657, %v1059, 0
      %v1081 = vsel %vm657, %v1060, 0
      %v1084 = vsel %vm657, %v1061, 0
      %v1087 = vsel %vm657, %v1062, 0
      %v1090 = vsel %vm657, %v1063, 0
      %v1093 = vsel %vm657, %v1064, 0
      %v1096 = vsel %vm657, %v1065, 0
      %v1099 = vsel %vm657, %v1066, 0
      %1101 = vmatpush.msra.mxu0 0.0
      %1102 = vmatpush.msra.mxu0 0.0
      %1103 = vmatpush.msra.mxu0 0.0
      %1104 = vmatpush.msra.mxu0 0.0
      %1105 = vmatpush.msra.mxu0 0.0
      %1106 = vmatpush.msra.mxu0 0.0
      %1107 = vmatpush.msra.mxu0 %v1076
      %1108 = vmatpush.msra.mxu0 %v1075
      %1109 = vmatpush.msra.mxu0 %v1074
      %1110 = vmatpush.msra.mxu0 %v1073
      %1111 = vmatpush.msra.mxu0 %v1072
      %1112 = vmatpush.msra.mxu0 %v1071
      %1113 = vmatpush.msra.mxu0 %v1070
      %1114 = vmatpush.msra.mxu0 %v1069
      %1115 = vmatpush.msra.mxu0 %v1068
      %1116 = vmatpush.msra.mxu0 %v1067
      %1117 = vmatmul.f32.gmra.mxu0 %v1078
      %v1118 = vpop.f32.mrf.mxu0
      %v1119 = vadd.f32 0.0, %v1118
      %1120 = vmatmul.f32.gmra.mxu0 %v1081
      %v1121 = vpop.f32.mrf.mxu0
      %v1122 = vadd.f32 0.0, %v1121
      %1123 = vmatmul.f32.gmra.mxu0 %v1084
      %v1124 = vpop.f32.mrf.mxu0
      %v1125 = vadd.f32 0.0, %v1124
      %1126 = vmatmul.f32.gmra.mxu0 %v1087
      %v1127 = vpop.f32.mrf.mxu0
      %v1128 = vadd.f32 0.0, %v1127
      %1129 = vmatmul.f32.gmra.mxu0 %v1090
      %v1130 = vpop.f32.mrf.mxu0
      %v1131 = vadd.f32 0.0, %v1130
      %1132 = vmatmul.f32.gmra.mxu0 %v1093
      %v1133 = vpop.f32.mrf.mxu0
      %v1134 = vadd.f32 0.0, %v1133
      %1135 = vmatmul.f32.gmra.mxu0 %v1096
      %v1136 = vpop.f32.mrf.mxu0
      %v1137 = vadd.f32 0.0, %v1136
      %1138 = vmatmul.f32.gmra.mxu0 %v1099
      %v1139 = vpop.f32.mrf.mxu0
      %v1140 = vadd.f32 0.0, %v1139
      %1141 = vdwg.mxu0
      %v1142 = vadd.f32 %v1057, %v1119
      %v1143 = vadd.f32 %v1057, %v1122
      %v1144 = vadd.f32 %v1057, %v1125
      %v1145 = vadd.f32 %v1057, %v1128
      %v1146 = vadd.f32 %v1057, %v1131
      %v1147 = vadd.f32 %v1057, %v1134
      %v1148 = vadd.f32 %v1057, %v1137
      %v1149 = vadd.f32 %v1057, %v1140
      %v1150 = vld [vmem:[#allocation2 + $0x1] sm:$0xff]
      %v1151 = vld [vmem:[#allocation2 + $0x11] sm:$0xff]
      %v1152 = vld [vmem:[#allocation2 + $0x21] sm:$0xff]
      %v1153 = vld [vmem:[#allocation2 + $0x31] sm:$0xff]
      %v1154 = vld [vmem:[#allocation2 + $0x41] sm:$0xff]
      %v1155 = vld [vmem:[#allocation2 + $0x51] sm:$0xff]
      %v1156 = vld [vmem:[#allocation2 + $0x61] sm:$0xff]
      %v1157 = vld [vmem:[#allocation2 + $0x71] sm:$0xff]
      %s1158 = scalar_lea.vmem %s7, 80
      %v1159 = vld [vmem:[%s1158] sm:$0xff]
      %v1160 = vld [vmem:[%s1158 + $0x8] sm:$0xff]
      %v1161 = vld [vmem:[%s1158 + $0x10] sm:$0xff]
      %v1162 = vld [vmem:[%s1158 + $0x18] sm:$0xff]
      %v1163 = vld [vmem:[%s1158 + $0x20] sm:$0xff]
      %v1164 = vld [vmem:[%s1158 + $0x28] sm:$0xff]
      %v1165 = vld [vmem:[%s1158 + $0x30] sm:$0xff]
      %v1166 = vld [vmem:[%s1158 + $0x38] sm:$0xff]
      %v1167 = vld [vmem:[%s1158 + $0x40] sm:$0xff]
      %v1168 = vld [vmem:[%s1158 + $0x48] sm:$0xff]
      %v1170 = vsel %vm657, %v1150, 0
      %v1173 = vsel %vm657, %v1151, 0
      %v1176 = vsel %vm657, %v1152, 0
      %v1179 = vsel %vm657, %v1153, 0
      %v1182 = vsel %vm657, %v1154, 0
      %v1185 = vsel %vm657, %v1155, 0
      %v1188 = vsel %vm657, %v1156, 0
      %v1191 = vsel %vm657, %v1157, 0
      %1193 = vmatpush.msra.mxu0 0.0
      %1194 = vmatpush.msra.mxu0 0.0
      %1195 = vmatpush.msra.mxu0 0.0
      %1196 = vmatpush.msra.mxu0 0.0
      %1197 = vmatpush.msra.mxu0 0.0
      %1198 = vmatpush.msra.mxu0 0.0
      %1199 = vmatpush.msra.mxu0 %v1168
      %1200 = vmatpush.msra.mxu0 %v1167
      %1201 = vmatpush.msra.mxu0 %v1166
      %1202 = vmatpush.msra.mxu0 %v1165
      %1203 = vmatpush.msra.mxu0 %v1164
      %1204 = vmatpush.msra.mxu0 %v1163
      %1205 = vmatpush.msra.mxu0 %v1162
      %1206 = vmatpush.msra.mxu0 %v1161
      %1207 = vmatpush.msra.mxu0 %v1160
      %1208 = vmatpush.msra.mxu0 %v1159
      %1209 = vmatmul.f32.gmra.mxu0 %v1170
      %v1210 = vpop.f32.mrf.mxu0
      %v1211 = vadd.f32 0.0, %v1210
      %1212 = vmatmul.f32.gmra.mxu0 %v1173
      %v1213 = vpop.f32.mrf.mxu0
      %v1214 = vadd.f32 0.0, %v1213
      %1215 = vmatmul.f32.gmra.mxu0 %v1176
      %v1216 = vpop.f32.mrf.mxu0
      %v1217 = vadd.f32 0.0, %v1216
      %1218 = vmatmul.f32.gmra.mxu0 %v1179
      %v1219 = vpop.f32.mrf.mxu0
      %v1220 = vadd.f32 0.0, %v1219
      %1221 = vmatmul.f32.gmra.mxu0 %v1182
      %v1222 = vpop.f32.mrf.mxu0
      %v1223 = vadd.f32 0.0, %v1222
      %1224 = vmatmul.f32.gmra.mxu0 %v1185
      %v1225 = vpop.f32.mrf.mxu0
      %v1226 = vadd.f32 0.0, %v1225
      %1227 = vmatmul.f32.gmra.mxu0 %v1188
      %v1228 = vpop.f32.mrf.mxu0
      %v1229 = vadd.f32 0.0, %v1228
      %1230 = vmatmul.f32.gmra.mxu0 %v1191
      %v1231 = vpop.f32.mrf.mxu0
      %v1232 = vadd.f32 0.0, %v1231
      %1233 = vdwg.mxu0
      %v1234 = vadd.f32 %v1142, %v1211
      %v1235 = vadd.f32 %v1143, %v1214
      %v1236 = vadd.f32 %v1144, %v1217
      %v1237 = vadd.f32 %v1145, %v1220
      %v1238 = vadd.f32 %v1146, %v1223
      %v1239 = vadd.f32 %v1147, %v1226
      %v1240 = vadd.f32 %v1148, %v1229
      %v1241 = vadd.f32 %v1149, %v1232
      %v1242 = vld [vmem:[#allocation2 + $0x2] sm:$0xff]
      %v1243 = vld [vmem:[#allocation2 + $0x12] sm:$0xff]
      %v1244 = vld [vmem:[#allocation2 + $0x22] sm:$0xff]
      %v1245 = vld [vmem:[#allocation2 + $0x32] sm:$0xff]
      %v1246 = vld [vmem:[#allocation2 + $0x42] sm:$0xff]
      %v1247 = vld [vmem:[#allocation2 + $0x52] sm:$0xff]
      %v1248 = vld [vmem:[#allocation2 + $0x62] sm:$0xff]
      %v1249 = vld [vmem:[#allocation2 + $0x72] sm:$0xff]
      %s1250 = scalar_lea.vmem %s7, 160
      %v1251 = vld [vmem:[%s1250] sm:$0xff]
      %v1252 = vld [vmem:[%s1250 + $0x8] sm:$0xff]
      %v1253 = vld [vmem:[%s1250 + $0x10] sm:$0xff]
      %v1254 = vld [vmem:[%s1250 + $0x18] sm:$0xff]
      %v1255 = vld [vmem:[%s1250 + $0x20] sm:$0xff]
      %v1256 = vld [vmem:[%s1250 + $0x28] sm:$0xff]
      %v1257 = vld [vmem:[%s1250 + $0x30] sm:$0xff]
      %v1258 = vld [vmem:[%s1250 + $0x38] sm:$0xff]
      %v1259 = vld [vmem:[%s1250 + $0x40] sm:$0xff]
      %v1260 = vld [vmem:[%s1250 + $0x48] sm:$0xff]
      %v1262 = vsel %vm657, %v1242, 0
      %v1265 = vsel %vm657, %v1243, 0
      %v1268 = vsel %vm657, %v1244, 0
      %v1271 = vsel %vm657, %v1245, 0
      %v1274 = vsel %vm657, %v1246, 0
      %v1277 = vsel %vm657, %v1247, 0
      %v1280 = vsel %vm657, %v1248, 0
      %v1283 = vsel %vm657, %v1249, 0
      %1285 = vmatpush.msra.mxu0 0.0
      %1286 = vmatpush.msra.mxu0 0.0
      %1287 = vmatpush.msra.mxu0 0.0
      %1288 = vmatpush.msra.mxu0 0.0
      %1289 = vmatpush.msra.mxu0 0.0
      %1290 = vmatpush.msra.mxu0 0.0
      %1291 = vmatpush.msra.mxu0 %v1260
      %1292 = vmatpush.msra.mxu0 %v1259
      %1293 = vmatpush.msra.mxu0 %v1258
      %1294 = vmatpush.msra.mxu0 %v1257
      %1295 = vmatpush.msra.mxu0 %v1256
      %1296 = vmatpush.msra.mxu0 %v1255
      %1297 = vmatpush.msra.mxu0 %v1254
      %1298 = vmatpush.msra.mxu0 %v1253
      %1299 = vmatpush.msra.mxu0 %v1252
      %1300 = vmatpush.msra.mxu0 %v1251
      %1301 = vmatmul.f32.gmra.mxu0 %v1262
      %v1302 = vpop.f32.mrf.mxu0
      %v1303 = vadd.f32 0.0, %v1302
      %1304 = vmatmul.f32.gmra.mxu0 %v1265
      %v1305 = vpop.f32.mrf.mxu0
      %v1306 = vadd.f32 0.0, %v1305
      %1307 = vmatmul.f32.gmra.mxu0 %v1268
      %v1308 = vpop.f32.mrf.mxu0
      %v1309 = vadd.f32 0.0, %v1308
      %1310 = vmatmul.f32.gmra.mxu0 %v1271
      %v1311 = vpop.f32.mrf.mxu0
      %v1312 = vadd.f32 0.0, %v1311
      %1313 = vmatmul.f32.gmra.mxu0 %v1274
      %v1314 = vpop.f32.mrf.mxu0
      %v1315 = vadd.f32 0.0, %v1314
      %1316 = vmatmul.f32.gmra.mxu0 %v1277
      %v1317 = vpop.f32.mrf.mxu0
      %v1318 = vadd.f32 0.0, %v1317
      %1319 = vmatmul.f32.gmra.mxu0 %v1280
      %v1320 = vpop.f32.mrf.mxu0
      %v1321 = vadd.f32 0.0, %v1320
      %1322 = vmatmul.f32.gmra.mxu0 %v1283
      %v1323 = vpop.f32.mrf.mxu0
      %v1324 = vadd.f32 0.0, %v1323
      %1325 = vdwg.mxu0
      %v1326 = vadd.f32 %v1234, %v1303
      %v1327 = vadd.f32 %v1235, %v1306
      %v1328 = vadd.f32 %v1236, %v1309
      %v1329 = vadd.f32 %v1237, %v1312
      %v1330 = vadd.f32 %v1238, %v1315
      %v1331 = vadd.f32 %v1239, %v1318
      %v1332 = vadd.f32 %v1240, %v1321
      %v1333 = vadd.f32 %v1241, %v1324
      %v1334 = vld [vmem:[%s679] sm:$0xff]
      %v1335 = vld [vmem:[%s679 + $0x10] sm:$0xff]
      %v1336 = vld [vmem:[%s679 + $0x20] sm:$0xff]
      %v1337 = vld [vmem:[%s679 + $0x30] sm:$0xff]
      %v1338 = vld [vmem:[%s679 + $0x40] sm:$0xff]
      %v1339 = vld [vmem:[%s679 + $0x50] sm:$0xff]
      %v1340 = vld [vmem:[%s679 + $0x60] sm:$0xff]
      %v1341 = vld [vmem:[%s679 + $0x70] sm:$0xff]
      %s1342 = scalar_lea.vmem %s7, 240
      %v1343 = vld [vmem:[%s1342] sm:$0xff]
      %v1344 = vld [vmem:[%s1342 + $0x8] sm:$0xff]
      %v1345 = vld [vmem:[%s1342 + $0x10] sm:$0xff]
      %v1346 = vld [vmem:[%s1342 + $0x18] sm:$0xff]
      %v1347 = vld [vmem:[%s1342 + $0x20] sm:$0xff]
      %v1348 = vld [vmem:[%s1342 + $0x28] sm:$0xff]
      %v1349 = vld [vmem:[%s1342 + $0x30] sm:$0xff]
      %v1350 = vld [vmem:[%s1342 + $0x38] sm:$0xff]
      %v1351 = vld [vmem:[%s1342 + $0x40] sm:$0xff]
      %v1352 = vld [vmem:[%s1342 + $0x48] sm:$0xff]
      %v1354 = vsel %vm657, %v1334, 0
      %v1357 = vsel %vm657, %v1335, 0
      %v1360 = vsel %vm657, %v1336, 0
      %v1363 = vsel %vm657, %v1337, 0
      %v1366 = vsel %vm657, %v1338, 0
      %v1369 = vsel %vm657, %v1339, 0
      %v1372 = vsel %vm657, %v1340, 0
      %v1375 = vsel %vm657, %v1341, 0
      %1377 = vmatpush.msra.mxu0 0.0
      %1378 = vmatpush.msra.mxu0 0.0
      %1379 = vmatpush.msra.mxu0 0.0
      %1380 = vmatpush.msra.mxu0 0.0
      %1381 = vmatpush.msra.mxu0 0.0
      %1382 = vmatpush.msra.mxu0 0.0
      %1383 = vmatpush.msra.mxu0 %v1352
      %1384 = vmatpush.msra.mxu0 %v1351
      %1385 = vmatpush.msra.mxu0 %v1350
      %1386 = vmatpush.msra.mxu0 %v1349
      %1387 = vmatpush.msra.mxu0 %v1348
      %1388 = vmatpush.msra.mxu0 %v1347
      %1389 = vmatpush.msra.mxu0 %v1346
      %1390 = vmatpush.msra.mxu0 %v1345
      %1391 = vmatpush.msra.mxu0 %v1344
      %1392 = vmatpush.msra.mxu0 %v1343
      %1393 = vmatmul.f32.gmra.mxu0 %v1354
      %v1394 = vpop.f32.mrf.mxu0
      %v1395 = vadd.f32 0.0, %v1394
      %1396 = vmatmul.f32.gmra.mxu0 %v1357
      %v1397 = vpop.f32.mrf.mxu0
      %v1398 = vadd.f32 0.0, %v1397
      %1399 = vmatmul.f32.gmra.mxu0 %v1360
      %v1400 = vpop.f32.mrf.mxu0
      %v1401 = vadd.f32 0.0, %v1400
      %1402 = vmatmul.f32.gmra.mxu0 %v1363
      %v1403 = vpop.f32.mrf.mxu0
      %v1404 = vadd.f32 0.0, %v1403
      %1405 = vmatmul.f32.gmra.mxu0 %v1366
      %v1406 = vpop.f32.mrf.mxu0
      %v1407 = vadd.f32 0.0, %v1406
      %1408 = vmatmul.f32.gmra.mxu0 %v1369
      %v1409 = vpop.f32.mrf.mxu0
      %v1410 = vadd.f32 0.0, %v1409
      %1411 = vmatmul.f32.gmra.mxu0 %v1372
      %v1412 = vpop.f32.mrf.mxu0
      %v1413 = vadd.f32 0.0, %v1412
      %1414 = vmatmul.f32.gmra.mxu0 %v1375
      %v1415 = vpop.f32.mrf.mxu0
      %v1416 = vadd.f32 0.0, %v1415
      %1417 = vdwg.mxu0
      %v1418 = vadd.f32 %v1326, %v1395
      %v1419 = vadd.f32 %v1327, %v1398
      %v1420 = vadd.f32 %v1328, %v1401
      %v1421 = vadd.f32 %v1329, %v1404
      %v1422 = vadd.f32 %v1330, %v1407
      %v1423 = vadd.f32 %v1331, %v1410
      %v1424 = vadd.f32 %v1332, %v1413
      %v1425 = vadd.f32 %v1333, %v1416
      %v1426 = vld [vmem:[%s679 + $0x1] sm:$0xff]
      %v1427 = vld [vmem:[%s679 + $0x11] sm:$0xff]
      %v1428 = vld [vmem:[%s679 + $0x21] sm:$0xff]
      %v1429 = vld [vmem:[%s679 + $0x31] sm:$0xff]
      %v1430 = vld [vmem:[%s679 + $0x41] sm:$0xff]
      %v1431 = vld [vmem:[%s679 + $0x51] sm:$0xff]
      %v1432 = vld [vmem:[%s679 + $0x61] sm:$0xff]
      %v1433 = vld [vmem:[%s679 + $0x71] sm:$0xff]
      %s1434 = scalar_lea.vmem %s7, 320
      %v1435 = vld [vmem:[%s1434] sm:$0xff]
      %v1436 = vld [vmem:[%s1434 + $0x8] sm:$0xff]
      %v1437 = vld [vmem:[%s1434 + $0x10] sm:$0xff]
      %v1438 = vld [vmem:[%s1434 + $0x18] sm:$0xff]
      %v1439 = vld [vmem:[%s1434 + $0x20] sm:$0xff]
      %v1440 = vld [vmem:[%s1434 + $0x28] sm:$0xff]
      %v1441 = vld [vmem:[%s1434 + $0x30] sm:$0xff]
      %v1442 = vld [vmem:[%s1434 + $0x38] sm:$0xff]
      %v1443 = vld [vmem:[%s1434 + $0x40] sm:$0xff]
      %v1444 = vld [vmem:[%s1434 + $0x48] sm:$0xff]
      %v1446 = vsel %vm657, %v1426, 0
      %v1449 = vsel %vm657, %v1427, 0
      %v1452 = vsel %vm657, %v1428, 0
      %v1455 = vsel %vm657, %v1429, 0
      %v1458 = vsel %vm657, %v1430, 0
      %v1461 = vsel %vm657, %v1431, 0
      %v1464 = vsel %vm657, %v1432, 0
      %v1467 = vsel %vm657, %v1433, 0
      %1469 = vmatpush.msra.mxu0 0.0
      %1470 = vmatpush.msra.mxu0 0.0
      %1471 = vmatpush.msra.mxu0 0.0
      %1472 = vmatpush.msra.mxu0 0.0
      %1473 = vmatpush.msra.mxu0 0.0
      %1474 = vmatpush.msra.mxu0 0.0
      %1475 = vmatpush.msra.mxu0 %v1444
      %1476 = vmatpush.msra.mxu0 %v1443
      %1477 = vmatpush.msra.mxu0 %v1442
      %1478 = vmatpush.msra.mxu0 %v1441
      %1479 = vmatpush.msra.mxu0 %v1440
      %1480 = vmatpush.msra.mxu0 %v1439
      %1481 = vmatpush.msra.mxu0 %v1438
      %1482 = vmatpush.msra.mxu0 %v1437
      %1483 = vmatpush.msra.mxu0 %v1436
      %1484 = vmatpush.msra.mxu0 %v1435
      %1485 = vmatmul.f32.gmra.mxu0 %v1446
      %v1486 = vpop.f32.mrf.mxu0
      %v1487 = vadd.f32 0.0, %v1486
      %1488 = vmatmul.f32.gmra.mxu0 %v1449
      %v1489 = vpop.f32.mrf.mxu0
      %v1490 = vadd.f32 0.0, %v1489
      %1491 = vmatmul.f32.gmra.mxu0 %v1452
      %v1492 = vpop.f32.mrf.mxu0
      %v1493 = vadd.f32 0.0, %v1492
      %1494 = vmatmul.f32.gmra.mxu0 %v1455
      %v1495 = vpop.f32.mrf.mxu0
      %v1496 = vadd.f32 0.0, %v1495
      %1497 = vmatmul.f32.gmra.mxu0 %v1458
      %v1498 = vpop.f32.mrf.mxu0
      %v1499 = vadd.f32 0.0, %v1498
      %1500 = vmatmul.f32.gmra.mxu0 %v1461
      %v1501 = vpop.f32.mrf.mxu0
      %v1502 = vadd.f32 0.0, %v1501
      %1503 = vmatmul.f32.gmra.mxu0 %v1464
      %v1504 = vpop.f32.mrf.mxu0
      %v1505 = vadd.f32 0.0, %v1504
      %1506 = vmatmul.f32.gmra.mxu0 %v1467
      %v1507 = vpop.f32.mrf.mxu0
      %v1508 = vadd.f32 0.0, %v1507
      %1509 = vdwg.mxu0
      %v1510 = vadd.f32 %v1418, %v1487
      %v1511 = vadd.f32 %v1419, %v1490
      %v1512 = vadd.f32 %v1420, %v1493
      %v1513 = vadd.f32 %v1421, %v1496
      %v1514 = vadd.f32 %v1422, %v1499
      %v1515 = vadd.f32 %v1423, %v1502
      %v1516 = vadd.f32 %v1424, %v1505
      %v1517 = vadd.f32 %v1425, %v1508
      %v1518 = vld [vmem:[%s679 + $0x2] sm:$0xff]
      %v1519 = vld [vmem:[%s679 + $0x12] sm:$0xff]
      %v1520 = vld [vmem:[%s679 + $0x22] sm:$0xff]
      %v1521 = vld [vmem:[%s679 + $0x32] sm:$0xff]
      %v1522 = vld [vmem:[%s679 + $0x42] sm:$0xff]
      %v1523 = vld [vmem:[%s679 + $0x52] sm:$0xff]
      %v1524 = vld [vmem:[%s679 + $0x62] sm:$0xff]
      %v1525 = vld [vmem:[%s679 + $0x72] sm:$0xff]
      %s1526 = scalar_lea.vmem %s7, 400
      %v1527 = vld [vmem:[%s1526] sm:$0xff]
      %v1528 = vld [vmem:[%s1526 + $0x8] sm:$0xff]
      %v1529 = vld [vmem:[%s1526 + $0x10] sm:$0xff]
      %v1530 = vld [vmem:[%s1526 + $0x18] sm:$0xff]
      %v1531 = vld [vmem:[%s1526 + $0x20] sm:$0xff]
      %v1532 = vld [vmem:[%s1526 + $0x28] sm:$0xff]
      %v1533 = vld [vmem:[%s1526 + $0x30] sm:$0xff]
      %v1534 = vld [vmem:[%s1526 + $0x38] sm:$0xff]
      %v1535 = vld [vmem:[%s1526 + $0x40] sm:$0xff]
      %v1536 = vld [vmem:[%s1526 + $0x48] sm:$0xff]
      %v1538 = vsel %vm657, %v1518, 0
      %v1541 = vsel %vm657, %v1519, 0
      %v1544 = vsel %vm657, %v1520, 0
      %v1547 = vsel %vm657, %v1521, 0
      %v1550 = vsel %vm657, %v1522, 0
      %v1553 = vsel %vm657, %v1523, 0
      %v1556 = vsel %vm657, %v1524, 0
      %v1559 = vsel %vm657, %v1525, 0
      %1561 = vmatpush.msra.mxu0 0.0
      %1562 = vmatpush.msra.mxu0 0.0
      %1563 = vmatpush.msra.mxu0 0.0
      %1564 = vmatpush.msra.mxu0 0.0
      %1565 = vmatpush.msra.mxu0 0.0
      %1566 = vmatpush.msra.mxu0 0.0
      %1567 = vmatpush.msra.mxu0 %v1536
      %1568 = vmatpush.msra.mxu0 %v1535
      %1569 = vmatpush.msra.mxu0 %v1534
      %1570 = vmatpush.msra.mxu0 %v1533
      %1571 = vmatpush.msra.mxu0 %v1532
      %1572 = vmatpush.msra.mxu0 %v1531
      %1573 = vmatpush.msra.mxu0 %v1530
      %1574 = vmatpush.msra.mxu0 %v1529
      %1575 = vmatpush.msra.mxu0 %v1528
      %1576 = vmatpush.msra.mxu0 %v1527
      %1577 = vmatmul.f32.gmra.mxu0 %v1538
      %v1578 = vpop.f32.mrf.mxu0
      %v1579 = vadd.f32 0.0, %v1578
      %1580 = vmatmul.f32.gmra.mxu0 %v1541
      %v1581 = vpop.f32.mrf.mxu0
      %v1582 = vadd.f32 0.0, %v1581
      %1583 = vmatmul.f32.gmra.mxu0 %v1544
      %v1584 = vpop.f32.mrf.mxu0
      %v1585 = vadd.f32 0.0, %v1584
      %1586 = vmatmul.f32.gmra.mxu0 %v1547
      %v1587 = vpop.f32.mrf.mxu0
      %v1588 = vadd.f32 0.0, %v1587
      %1589 = vmatmul.f32.gmra.mxu0 %v1550
      %v1590 = vpop.f32.mrf.mxu0
      %v1591 = vadd.f32 0.0, %v1590
      %1592 = vmatmul.f32.gmra.mxu0 %v1553
      %v1593 = vpop.f32.mrf.mxu0
      %v1594 = vadd.f32 0.0, %v1593
      %1595 = vmatmul.f32.gmra.mxu0 %v1556
      %v1596 = vpop.f32.mrf.mxu0
      %v1597 = vadd.f32 0.0, %v1596
      %1598 = vmatmul.f32.gmra.mxu0 %v1559
      %v1599 = vpop.f32.mrf.mxu0
      %v1600 = vadd.f32 0.0, %v1599
      %1601 = vdwg.mxu0
      %v1602 = vadd.f32 %v1510, %v1579
      %v1603 = vadd.f32 %v1511, %v1582
      %v1604 = vadd.f32 %v1512, %v1585
      %v1605 = vadd.f32 %v1513, %v1588
      %v1606 = vadd.f32 %v1514, %v1591
      %v1607 = vadd.f32 %v1515, %v1594
      %v1608 = vadd.f32 %v1516, %v1597
      %v1609 = vadd.f32 %v1517, %v1600
      %v1610 = vld [vmem:[%s844] sm:$0xff]
      %v1611 = vld [vmem:[%s844 + $0x10] sm:$0xff]
      %v1612 = vld [vmem:[%s844 + $0x20] sm:$0xff]
      %v1613 = vld [vmem:[%s844 + $0x30] sm:$0xff]
      %v1614 = vld [vmem:[%s844 + $0x40] sm:$0xff]
      %v1615 = vld [vmem:[%s844 + $0x50] sm:$0xff]
      %v1616 = vld [vmem:[%s844 + $0x60] sm:$0xff]
      %v1617 = vld [vmem:[%s844 + $0x70] sm:$0xff]
      %s1618 = scalar_lea.vmem %s7, 480
      %v1619 = vld [vmem:[%s1618] sm:$0xff]
      %v1620 = vld [vmem:[%s1618 + $0x8] sm:$0xff]
      %v1621 = vld [vmem:[%s1618 + $0x10] sm:$0xff]
      %v1622 = vld [vmem:[%s1618 + $0x18] sm:$0xff]
      %v1623 = vld [vmem:[%s1618 + $0x20] sm:$0xff]
      %v1624 = vld [vmem:[%s1618 + $0x28] sm:$0xff]
      %v1625 = vld [vmem:[%s1618 + $0x30] sm:$0xff]
      %v1626 = vld [vmem:[%s1618 + $0x38] sm:$0xff]
      %v1627 = vld [vmem:[%s1618 + $0x40] sm:$0xff]
      %v1628 = vld [vmem:[%s1618 + $0x48] sm:$0xff]
      %v1630 = vsel %vm657, %v1610, 0
      %v1633 = vsel %vm657, %v1611, 0
      %v1636 = vsel %vm657, %v1612, 0
      %v1639 = vsel %vm657, %v1613, 0
      %v1642 = vsel %vm657, %v1614, 0
      %v1645 = vsel %vm657, %v1615, 0
      %v1648 = vsel %vm657, %v1616, 0
      %v1651 = vsel %vm657, %v1617, 0
      %1653 = vmatpush.msra.mxu0 0.0
      %1654 = vmatpush.msra.mxu0 0.0
      %1655 = vmatpush.msra.mxu0 0.0
      %1656 = vmatpush.msra.mxu0 0.0
      %1657 = vmatpush.msra.mxu0 0.0
      %1658 = vmatpush.msra.mxu0 0.0
      %1659 = vmatpush.msra.mxu0 %v1628
      %1660 = vmatpush.msra.mxu0 %v1627
      %1661 = vmatpush.msra.mxu0 %v1626
      %1662 = vmatpush.msra.mxu0 %v1625
      %1663 = vmatpush.msra.mxu0 %v1624
      %1664 = vmatpush.msra.mxu0 %v1623
      %1665 = vmatpush.msra.mxu0 %v1622
      %1666 = vmatpush.msra.mxu0 %v1621
      %1667 = vmatpush.msra.mxu0 %v1620
      %1668 = vmatpush.msra.mxu0 %v1619
      %1669 = vmatmul.f32.gmra.mxu0 %v1630
      %v1670 = vpop.f32.mrf.mxu0
      %v1671 = vadd.f32 0.0, %v1670
      %1672 = vmatmul.f32.gmra.mxu0 %v1633
      %v1673 = vpop.f32.mrf.mxu0
      %v1674 = vadd.f32 0.0, %v1673
      %1675 = vmatmul.f32.gmra.mxu0 %v1636
      %v1676 = vpop.f32.mrf.mxu0
      %v1677 = vadd.f32 0.0, %v1676
      %1678 = vmatmul.f32.gmra.mxu0 %v1639
      %v1679 = vpop.f32.mrf.mxu0
      %v1680 = vadd.f32 0.0, %v1679
      %1681 = vmatmul.f32.gmra.mxu0 %v1642
      %v1682 = vpop.f32.mrf.mxu0
      %v1683 = vadd.f32 0.0, %v1682
      %1684 = vmatmul.f32.gmra.mxu0 %v1645
      %v1685 = vpop.f32.mrf.mxu0
      %v1686 = vadd.f32 0.0, %v1685
      %1687 = vmatmul.f32.gmra.mxu0 %v1648
      %v1688 = vpop.f32.mrf.mxu0
      %v1689 = vadd.f32 0.0, %v1688
      %1690 = vmatmul.f32.gmra.mxu0 %v1651
      %v1691 = vpop.f32.mrf.mxu0
      %v1692 = vadd.f32 0.0, %v1691
      %1693 = vdwg.mxu0
      %v1694 = vadd.f32 %v1602, %v1671
      %v1695 = vadd.f32 %v1603, %v1674
      %v1696 = vadd.f32 %v1604, %v1677
      %v1697 = vadd.f32 %v1605, %v1680
      %v1698 = vadd.f32 %v1606, %v1683
      %v1699 = vadd.f32 %v1607, %v1686
      %v1700 = vadd.f32 %v1608, %v1689
      %v1701 = vadd.f32 %v1609, %v1692
      %v1702 = vld [vmem:[%s844 + $0x1] sm:$0xff]
      %v1703 = vld [vmem:[%s844 + $0x11] sm:$0xff]
      %v1704 = vld [vmem:[%s844 + $0x21] sm:$0xff]
      %v1705 = vld [vmem:[%s844 + $0x31] sm:$0xff]
      %v1706 = vld [vmem:[%s844 + $0x41] sm:$0xff]
      %v1707 = vld [vmem:[%s844 + $0x51] sm:$0xff]
      %v1708 = vld [vmem:[%s844 + $0x61] sm:$0xff]
      %v1709 = vld [vmem:[%s844 + $0x71] sm:$0xff]
      %s1710 = scalar_lea.vmem %s7, 560
      %v1711 = vld [vmem:[%s1710] sm:$0xff]
      %v1712 = vld [vmem:[%s1710 + $0x8] sm:$0xff]
      %v1713 = vld [vmem:[%s1710 + $0x10] sm:$0xff]
      %v1714 = vld [vmem:[%s1710 + $0x18] sm:$0xff]
      %v1715 = vld [vmem:[%s1710 + $0x20] sm:$0xff]
      %v1716 = vld [vmem:[%s1710 + $0x28] sm:$0xff]
      %v1717 = vld [vmem:[%s1710 + $0x30] sm:$0xff]
      %v1718 = vld [vmem:[%s1710 + $0x38] sm:$0xff]
      %v1719 = vld [vmem:[%s1710 + $0x40] sm:$0xff]
      %v1720 = vld [vmem:[%s1710 + $0x48] sm:$0xff]
      %v1722 = vsel %vm657, %v1702, 0
      %v1725 = vsel %vm657, %v1703, 0
      %v1728 = vsel %vm657, %v1704, 0
      %v1731 = vsel %vm657, %v1705, 0
      %v1734 = vsel %vm657, %v1706, 0
      %v1737 = vsel %vm657, %v1707, 0
      %v1740 = vsel %vm657, %v1708, 0
      %v1743 = vsel %vm657, %v1709, 0
      %1745 = vmatpush.msra.mxu0 0.0
      %1746 = vmatpush.msra.mxu0 0.0
      %1747 = vmatpush.msra.mxu0 0.0
      %1748 = vmatpush.msra.mxu0 0.0
      %1749 = vmatpush.msra.mxu0 0.0
      %1750 = vmatpush.msra.mxu0 0.0
      %1751 = vmatpush.msra.mxu0 %v1720
      %1752 = vmatpush.msra.mxu0 %v1719
      %1753 = vmatpush.msra.mxu0 %v1718
      %1754 = vmatpush.msra.mxu0 %v1717
      %1755 = vmatpush.msra.mxu0 %v1716
      %1756 = vmatpush.msra.mxu0 %v1715
      %1757 = vmatpush.msra.mxu0 %v1714
      %1758 = vmatpush.msra.mxu0 %v1713
      %1759 = vmatpush.msra.mxu0 %v1712
      %1760 = vmatpush.msra.mxu0 %v1711
      %1761 = vmatmul.f32.gmra.mxu0 %v1722
      %v1762 = vpop.f32.mrf.mxu0
      %v1763 = vadd.f32 0.0, %v1762
      %1764 = vmatmul.f32.gmra.mxu0 %v1725
      %v1765 = vpop.f32.mrf.mxu0
      %v1766 = vadd.f32 0.0, %v1765
      %1767 = vmatmul.f32.gmra.mxu0 %v1728
      %v1768 = vpop.f32.mrf.mxu0
      %v1769 = vadd.f32 0.0, %v1768
      %1770 = vmatmul.f32.gmra.mxu0 %v1731
      %v1771 = vpop.f32.mrf.mxu0
      %v1772 = vadd.f32 0.0, %v1771
      %1773 = vmatmul.f32.gmra.mxu0 %v1734
      %v1774 = vpop.f32.mrf.mxu0
      %v1775 = vadd.f32 0.0, %v1774
      %1776 = vmatmul.f32.gmra.mxu0 %v1737
      %v1777 = vpop.f32.mrf.mxu0
      %v1778 = vadd.f32 0.0, %v1777
      %1779 = vmatmul.f32.gmra.mxu0 %v1740
      %v1780 = vpop.f32.mrf.mxu0
      %v1781 = vadd.f32 0.0, %v1780
      %1782 = vmatmul.f32.gmra.mxu0 %v1743
      %v1783 = vpop.f32.mrf.mxu0
      %v1784 = vadd.f32 0.0, %v1783
      %1785 = vdwg.mxu0
      %v1786 = vadd.f32 %v1694, %v1763
      %v1787 = vadd.f32 %v1695, %v1766
      %v1788 = vadd.f32 %v1696, %v1769
      %v1789 = vadd.f32 %v1697, %v1772
      %v1790 = vadd.f32 %v1698, %v1775
      %v1791 = vadd.f32 %v1699, %v1778
      %v1792 = vadd.f32 %v1700, %v1781
      %v1793 = vadd.f32 %v1701, %v1784
      %v1794 = vld [vmem:[%s844 + $0x2] sm:$0xff]
      %v1795 = vld [vmem:[%s844 + $0x12] sm:$0xff]
      %v1796 = vld [vmem:[%s844 + $0x22] sm:$0xff]
      %v1797 = vld [vmem:[%s844 + $0x32] sm:$0xff]
      %v1798 = vld [vmem:[%s844 + $0x42] sm:$0xff]
      %v1799 = vld [vmem:[%s844 + $0x52] sm:$0xff]
      %v1800 = vld [vmem:[%s844 + $0x62] sm:$0xff]
      %v1801 = vld [vmem:[%s844 + $0x72] sm:$0xff]
      %s1802 = scalar_lea.vmem %s7, 640
      %v1803 = vld [vmem:[%s1802] sm:$0xff]
      %v1804 = vld [vmem:[%s1802 + $0x8] sm:$0xff]
      %v1805 = vld [vmem:[%s1802 + $0x10] sm:$0xff]
      %v1806 = vld [vmem:[%s1802 + $0x18] sm:$0xff]
      %v1807 = vld [vmem:[%s1802 + $0x20] sm:$0xff]
      %v1808 = vld [vmem:[%s1802 + $0x28] sm:$0xff]
      %v1809 = vld [vmem:[%s1802 + $0x30] sm:$0xff]
      %v1810 = vld [vmem:[%s1802 + $0x38] sm:$0xff]
      %v1811 = vld [vmem:[%s1802 + $0x40] sm:$0xff]
      %v1812 = vld [vmem:[%s1802 + $0x48] sm:$0xff]
      %v1814 = vsel %vm657, %v1794, 0
      %v1817 = vsel %vm657, %v1795, 0
      %v1820 = vsel %vm657, %v1796, 0
      %v1823 = vsel %vm657, %v1797, 0
      %v1826 = vsel %vm657, %v1798, 0
      %v1829 = vsel %vm657, %v1799, 0
      %v1832 = vsel %vm657, %v1800, 0
      %v1835 = vsel %vm657, %v1801, 0
      %1837 = vmatpush.msra.mxu0 0.0
      %1838 = vmatpush.msra.mxu0 0.0
      %1839 = vmatpush.msra.mxu0 0.0
      %1840 = vmatpush.msra.mxu0 0.0
      %1841 = vmatpush.msra.mxu0 0.0
      %1842 = vmatpush.msra.mxu0 0.0
      %1843 = vmatpush.msra.mxu0 %v1812
      %1844 = vmatpush.msra.mxu0 %v1811
      %1845 = vmatpush.msra.mxu0 %v1810
      %1846 = vmatpush.msra.mxu0 %v1809
      %1847 = vmatpush.msra.mxu0 %v1808
      %1848 = vmatpush.msra.mxu0 %v1807
      %1849 = vmatpush.msra.mxu0 %v1806
      %1850 = vmatpush.msra.mxu0 %v1805
      %1851 = vmatpush.msra.mxu0 %v1804
      %1852 = vmatpush.msra.mxu0 %v1803
      %1853 = vmatmul.f32.gmra.mxu0 %v1814
      %v1854 = vpop.f32.mrf.mxu0
      %v1855 = vadd.f32 0.0, %v1854
      %1856 = vmatmul.f32.gmra.mxu0 %v1817
      %v1857 = vpop.f32.mrf.mxu0
      %v1858 = vadd.f32 0.0, %v1857
      %1859 = vmatmul.f32.gmra.mxu0 %v1820
      %v1860 = vpop.f32.mrf.mxu0
      %v1861 = vadd.f32 0.0, %v1860
      %1862 = vmatmul.f32.gmra.mxu0 %v1823
      %v1863 = vpop.f32.mrf.mxu0
      %v1864 = vadd.f32 0.0, %v1863
      %1865 = vmatmul.f32.gmra.mxu0 %v1826
      %v1866 = vpop.f32.mrf.mxu0
      %v1867 = vadd.f32 0.0, %v1866
      %1868 = vmatmul.f32.gmra.mxu0 %v1829
      %v1869 = vpop.f32.mrf.mxu0
      %v1870 = vadd.f32 0.0, %v1869
      %1871 = vmatmul.f32.gmra.mxu0 %v1832
      %v1872 = vpop.f32.mrf.mxu0
      %v1873 = vadd.f32 0.0, %v1872
      %1874 = vmatmul.f32.gmra.mxu0 %v1835
      %v1875 = vpop.f32.mrf.mxu0
      %v1876 = vadd.f32 0.0, %v1875
      %1877 = vdwg.mxu0
      %v1878 = vadd.f32 %v1786, %v1855
      %v1879 = vadd.f32 %v1787, %v1858
      %v1880 = vadd.f32 %v1788, %v1861
      %v1881 = vadd.f32 %v1789, %v1864
      %v1882 = vadd.f32 %v1790, %v1867
      %v1883 = vadd.f32 %v1791, %v1870
      %v1884 = vadd.f32 %v1792, %v1873
      %v1885 = vadd.f32 %v1793, %v1876
      %vm1886 = vcmask 588800
      %1887 = vst.msk [vmem:[%s460] sm:$0xff] %vm1886, %v1878
      %1888 = vst.msk [vmem:[%s460 + $0x8] sm:$0xff] %vm1886, %v1879
      %1889 = vst.msk [vmem:[%s460 + $0x10] sm:$0xff] %vm1886, %v1880
      %1890 = vst.msk [vmem:[%s460 + $0x18] sm:$0xff] %vm1886, %v1881
      %1891 = vst.msk [vmem:[%s460 + $0x20] sm:$0xff] %vm1886, %v1882
      %1892 = vst.msk [vmem:[%s460 + $0x28] sm:$0xff] %vm1886, %v1883
      %1893 = vst.msk [vmem:[%s460 + $0x30] sm:$0xff] %vm1886, %v1884
      %1894 = vst.msk [vmem:[%s460 + $0x38] sm:$0xff] %vm1886, %v1885
      %v1895 = vld [vmem:[%s9] sm:$0xff]
      %v1896 = vld [vmem:[%s9 + $0x8] sm:$0xff]
      %v1897 = vld [vmem:[%s9 + $0x10] sm:$0xff]
      %v1898 = vld [vmem:[%s9 + $0x18] sm:$0xff]
      %v1899 = vld [vmem:[%s9 + $0x20] sm:$0xff]
      %v1900 = vld [vmem:[%s9 + $0x28] sm:$0xff]
      %v1901 = vld [vmem:[%s9 + $0x30] sm:$0xff]
      %v1902 = vld [vmem:[%s9 + $0x38] sm:$0xff]
      %v1903 = vld [vmem:[%s9 + $0x40] sm:$0xff]
      %v1904 = vld [vmem:[%s9 + $0x48] sm:$0xff]
      %v1905 = vld [vmem:[%s10] sm:$0x1]
      %v1907 = vperm.slane %v1905, 0
      %v1910 = vsel %vm657, %v1031, 0
      %v1913 = vsel %vm657, %v1032, 0
      %v1916 = vsel %vm657, %v1033, 0
      %v1919 = vsel %vm657, %v1034, 0
      %v1922 = vsel %vm657, %v1035, 0
      %v1925 = vsel %vm657, %v1036, 0
      %v1928 = vsel %vm657, %v1037, 0
      %v1931 = vsel %vm657, %v1038, 0
      %1933 = vmatpush.msra.mxu0 0.0
      %1934 = vmatpush.msra.mxu0 0.0
      %1935 = vmatpush.msra.mxu0 0.0
      %1936 = vmatpush.msra.mxu0 0.0
      %1937 = vmatpush.msra.mxu0 0.0
      %1938 = vmatpush.msra.mxu0 0.0
      %1939 = vmatpush.msra.mxu0 %v1904
      %1940 = vmatpush.msra.mxu0 %v1903
      %1941 = vmatpush.msra.mxu0 %v1902
      %1942 = vmatpush.msra.mxu0 %v1901
      %1943 = vmatpush.msra.mxu0 %v1900
      %1944 = vmatpush.msra.mxu0 %v1899
      %1945 = vmatpush.msra.mxu0 %v1898
      %1946 = vmatpush.msra.mxu0 %v1897
      %1947 = vmatpush.msra.mxu0 %v1896
      %1948 = vmatpush.msra.mxu0 %v1895
      %1949 = vmatmul.f32.gmra.mxu0 %v1910
      %v1950 = vpop.f32.mrf.mxu0
      %v1951 = vadd.f32 %v1907, %v1950
      %1952 = vmatmul.f32.gmra.mxu0 %v1913
      %v1953 = vpop.f32.mrf.mxu0
      %v1954 = vadd.f32 %v1907, %v1953
      %1955 = vmatmul.f32.gmra.mxu0 %v1916
      %v1956 = vpop.f32.mrf.mxu0
      %v1957 = vadd.f32 %v1907, %v1956
      %1958 = vmatmul.f32.gmra.mxu0 %v1919
      %v1959 = vpop.f32.mrf.mxu0
      %v1960 = vadd.f32 %v1907, %v1959
      %1961 = vmatmul.f32.gmra.mxu0 %v1922
      %v1962 = vpop.f32.mrf.mxu0
      %v1963 = vadd.f32 %v1907, %v1962
      %1964 = vmatmul.f32.gmra.mxu0 %v1925
      %v1965 = vpop.f32.mrf.mxu0
      %v1966 = vadd.f32 %v1907, %v1965
      %1967 = vmatmul.f32.gmra.mxu0 %v1928
      %v1968 = vpop.f32.mrf.mxu0
      %v1969 = vadd.f32 %v1907, %v1968
      %1970 = vmatmul.f32.gmra.mxu0 %v1931
      %v1971 = vpop.f32.mrf.mxu0
      %v1972 = vadd.f32 %v1907, %v1971
      %1973 = vdwg.mxu0
      %vm1974 = vcmask 195584
      %1975 = vst.msk [vmem:[%s465] sm:$0xff] %vm1974, %v1951
      %1976 = vst.msk [vmem:[%s465 + $0x8] sm:$0xff] %vm1974, %v1954
      %1977 = vst.msk [vmem:[%s465 + $0x10] sm:$0xff] %vm1974, %v1957
      %1978 = vst.msk [vmem:[%s465 + $0x18] sm:$0xff] %vm1974, %v1960
      %1979 = vst.msk [vmem:[%s465 + $0x20] sm:$0xff] %vm1974, %v1963
      %1980 = vst.msk [vmem:[%s465 + $0x28] sm:$0xff] %vm1974, %v1966
      %1981 = vst.msk [vmem:[%s465 + $0x30] sm:$0xff] %vm1974, %v1969
      %1982 = vst.msk [vmem:[%s465 + $0x38] sm:$0xff] %vm1974, %v1972
      %p1983 = scmp.lt.s32.totalorder %s25, 1
      %s1984 = scalar_select %p1983, %s25, 1
      %s1985 = smul.addr %s1984, 8
      %s1986 = smul.addr %s1985, 8
      %s1987 = scalar_lea.vmem %s11, %s1986
      %p1988 = scmp.lt.s32.totalorder %s25, 1
      %s1989 = scalar_select %p1988, %s25, 1
      %s1990 = smul.addr %s1989, 8
      %s1991 = smul.addr %s1990, 8
      %s1992 = scalar_lea.vmem %s12, %s1991
      %p1993 = scmp.lt.s32.totalorder %s25, 1
      %s1994 = scalar_select %p1993, %s25, 1
      %s1995 = smul.addr %s1994, 8
      %s1996 = smul.addr %s1995, 8
      %s1997 = scalar_lea.vmem %s13, %s1996
      // Predicated region
      $region65: #{aa_inverted_bottleneck_forward.3} parent=63 // pred_check
        %p1998 = pneg %p279
      $region66: #{aa_inverted_bottleneck_forward.3} parent=63 // pred_check_branch
        %2000 = sbr.rel (%p1998) target = $region68
      $region67: #{aa_inverted_bottleneck_forward.3} parent=63 // pred_region
        _
      $region68: #{aa_inverted_bottleneck_forward.3} parent=63 // pred_fallthru
        _
      // Predicated region
      $region69: #{aa_inverted_bottleneck_forward.3} parent=63 // pred_check
        %p2001 = pneg %p305
      $region70: #{aa_inverted_bottleneck_forward.3} parent=63 // pred_check_branch
        %2003 = sbr.rel (%p2001) target = $region72
      $region71: #{aa_inverted_bottleneck_forward.3} parent=63 // pred_region
        _
      $region72: #{aa_inverted_bottleneck_forward.3} parent=63 // pred_fallthru
        _
      // Predicated region
      $region73: #{aa_inverted_bottleneck_forward.3} parent=63 // pred_check
        %p2004 = pneg %p331
      $region74: #{aa_inverted_bottleneck_forward.3} parent=63 // pred_check_branch
        %2006 = sbr.rel (%p2004) target = $region76
      $region75: #{aa_inverted_bottleneck_forward.3} parent=63 // pred_region
        _
      $region76: #{aa_inverted_bottleneck_forward.3} parent=63 // pred_fallthru
        _
    $region64: #{aa_inverted_bottleneck_forward.3} parent=5 // pred_fallthru
      _
    %p2007 = scmp.le.s32.totalorder 2, %s20
    // Predicated region
    $region77: #{aa_inverted_bottleneck_forward.3} parent=5 // pred_check
      %p2008 = pneg %p2007
    $region78: #{aa_inverted_bottleneck_forward.3} parent=5 // pred_check_branch
      %2010 = sbr.rel (%p2008) target = $region80
    $region79: #{aa_inverted_bottleneck_forward.3} parent=5 // pred_region
      %s2011 = ssub.s32 %s20, 2
      // Predicated region
      $region81: #{aa_inverted_bottleneck_forward.3} parent=79 // pred_check
        %p2012 = pneg %p285
      $region82: #{aa_inverted_bottleneck_forward.3} parent=79 // pred_check_branch
        %2014 = sbr.rel (%p2012) target = $region84
      $region83: #{aa_inverted_bottleneck_forward.3} parent=79 // pred_region
        %p2015 = scmp.lt.s32.totalorder %s26, 1
        %s2016 = scalar_select %p2015, %s26, 1
        %s2017 = smul.addr %s2016, 8
        %s2018 = smul.addr %s2017, 8
        %s2019 = scalar_lea.vmem %s11, %s2018
      $region84: #{aa_inverted_bottleneck_forward.3} parent=79 // pred_fallthru
        _
      // Predicated region
      $region85: #{aa_inverted_bottleneck_forward.3} parent=79 // pred_check
        %p2020 = pneg %p311
      $region86: #{aa_inverted_bottleneck_forward.3} parent=79 // pred_check_branch
        %2022 = sbr.rel (%p2020) target = $region88
      $region87: #{aa_inverted_bottleneck_forward.3} parent=79 // pred_region
        %p2023 = scmp.lt.s32.totalorder %s26, 1
        %s2024 = scalar_select %p2023, %s26, 1
        %s2025 = smul.addr %s2024, 8
        %s2026 = smul.addr %s2025, 8
        %s2027 = scalar_lea.vmem %s12, %s2026
      $region88: #{aa_inverted_bottleneck_forward.3} parent=79 // pred_fallthru
        _
      // Predicated region
      $region89: #{aa_inverted_bottleneck_forward.3} parent=79 // pred_check
        %p2028 = pneg %p337
      $region90: #{aa_inverted_bottleneck_forward.3} parent=79 // pred_check_branch
        %2030 = sbr.rel (%p2028) target = $region92
      $region91: #{aa_inverted_bottleneck_forward.3} parent=79 // pred_region
        %p2031 = scmp.lt.s32.totalorder %s26, 1
        %s2032 = scalar_select %p2031, %s26, 1
        %s2033 = smul.addr %s2032, 8
        %s2034 = smul.addr %s2033, 8
        %s2035 = scalar_lea.vmem %s13, %s2034
      $region92: #{aa_inverted_bottleneck_forward.3} parent=79 // pred_fallthru
        _
    $region80: #{aa_inverted_bottleneck_forward.3} parent=5 // pred_fallthru
      _
  $region6: #{aa_inverted_bottleneck_forward.3} parent=0 // loop_footer
    %s24 = sadd.s32 1, %s20
  $region7: #{aa_inverted_bottleneck_forward.3} parent=0 // loop_footer_branch
    %19 = sbr.rel target = $region3
  $region8: #{aa_inverted_bottleneck_forward.3} parent=0 // loop_exit
    _

// kernel: aa_inverted_bottleneck_forward.5
$region0: #{aa_inverted_bottleneck_forward.5}
  #allocation0 [shape = 'u32[]', space=smem, size = 0x4, offset = 0x4, fixed_abs, tag = 'smem constant byte address 0x4 - core index']
  #allocation1 [shape = 'u32[72,128]{1,0:T(1,128)}', space=vmem, size = 0x9000, scoped, tag = 'internal scratch']
  %s0 = inlined_call_operand.vmem [shape: f32[2,64,80], index: 0, kind: input, shape index: {}]
  %s1 = inlined_call_operand.vmem [shape: f32[2,64,72], index: 1, kind: input, shape index: {}]
  %s2 = inlined_call_operand.vmem [shape: f32[2,64,8], index: 2, kind: input, shape index: {}]
  %s3 = inlined_call_operand.vmem [shape: f32[8,8], index: 3, kind: input, shape index: {}]
  %s4 = inlined_call_operand.vmem [shape: f32[1,8], index: 4, kind: input, shape index: {}]
  %s5 = inlined_call_operand.vmem [shape: f32[1,80], index: 5, kind: input, shape index: {}]
  %s6 = inlined_call_operand.vmem [shape: f32[1,80], index: 6, kind: input, shape index: {}]
  %s7 = inlined_call_operand.vmem [shape: f32[80,20], index: 7, kind: input, shape index: {}]
  %s8 = inlined_call_operand.vmem [shape: f32[1,20], index: 8, kind: input, shape index: {}]
  %s9 = inlined_call_operand.vmem [shape: f32[1,20], index: 9, kind: input, shape index: {}]
  %s10 = inlined_call_operand.vmem [shape: f32[1,20], index: 10, kind: input, shape index: {}]
  %s11 = inlined_call_operand.hbm [shape: f32[2,64,20], index: 11, kind: output, shape index: {}]
  %s12 = sld [smem:[#allocation0]]
  $region77: #{aa_inverted_bottleneck_forward.5} parent=0
    _
  %s14 = ssub.s32 1, %s12
  %s15 = scalar_select 0, %s14, %s12
  $region1: #{aa_inverted_bottleneck_forward.5} parent=0
    #allocation2 [shape = 'u8[65536]{0}', space=vmem, size = 0x10000, scoped, tag = 'output window, operand 0']
    #allocation3 [shape = 's32[2]{0}', space=sflag, size = 0x8, scoped, tag = 'scoped memory for aa_inverted_bottleneck_forward.5']
    %16 = vsyncpa [#allocation3], 0
    %s17 = scalar_lea.sflag [#allocation3], 1
    %18 = vsyncpa %s17, 0
    loop: start=0, step=1, limit=4
    $region2: #{aa_inverted_bottleneck_forward.5} parent=1 // loop_pre_header
      _
    $region3: #{aa_inverted_bottleneck_forward.5} parent=1 // loop_header
      %s20 = sphi 0, %s24
      %p21 = scmp.ge.s32.totalorder %s20, 4
      %s30 = sphi 0, %s32
      %s33 = sphi 0, %s30
      %s34 = sphi 0, %s33
      %s50 = sphi 0, %s34
      %s56 = sphi 0, %s58
      %s59 = sphi 0, %s56
      %s60 = sphi 0, %s59
      %s76 = sphi 0, %s60
      %s82 = sphi 0, %s84
      %s85 = sphi 0, %s82
      %s86 = sphi 0, %s85
      %s102 = sphi 0, %s86
      %s106 = sphi 0, %s106
      %s108 = sphi 0, %s106
      %s109 = sphi 0, %s108
      %s123 = sphi 0, %s109
      %s127 = sphi 0, %s127
      %s129 = sphi 0, %s127
      %s130 = sphi 0, %s129
      %s144 = sphi 0, %s130
      %s148 = sphi 0, %s148
      %s150 = sphi 0, %s148
      %s151 = sphi 0, %s150
      %s165 = sphi 0, %s151
      %s169 = sphi 0, %s169
      %s171 = sphi 0, %s169
      %s172 = sphi 0, %s171
      %s186 = sphi 0, %s172
      %s190 = sphi 0, %s190
      %s192 = sphi 0, %s190
      %s193 = sphi 0, %s192
      %s207 = sphi 0, %s193
      %s211 = sphi 0, %s211
      %s213 = sphi 0, %s211
      %s214 = sphi 0, %s213
      %s228 = sphi 0, %s214
      %s232 = sphi 0, %s232
      %s234 = sphi 0, %s232
      %s235 = sphi 0, %s234
      %s249 = sphi 0, %s235
      %s253 = sphi 0, %s253
      %s255 = sphi 0, %s253
      %s256 = sphi 0, %s255
      %s270 = sphi 0, %s256
      %s276 = sphi 0, %s278
      %s279 = sphi 0, %s276
      %s280 = sphi 0, %s279
      %s296 = sphi 0, %s280
    $region4: #{aa_inverted_bottleneck_forward.5} parent=1 // loop_header_branch
      %23 = sbr.rel (%p21) target = $region8
    $region5: #{aa_inverted_bottleneck_forward.5} parent=1 // loop_body
      %s25 = ssub.s32 %s20, 1
      %s26 = ssub.s32 %s20, 2
      %s27 = sadd.s32 %s20, 1
      %s28 = ssub.s32 %s20, %s27
      %p29 = scmp.eq.s32.totalorder %s28, 0
      %s31 = sadd.s32 %s30, 1
      %s32 = scalar_select %p29, %s30, %s31
      %p35 = pneg %p29
      %p36 = scmp.eq.s32.totalorder %s20, 1
      %p37 = por %p35, %p36
      %p38 = scmp.ne.s32.totalorder %s30, %s33
      %p39 = scmp.eq.s32.totalorder %s20, 0
      %p40 = por %p38, %p39
      %p41 = scmp.ne.s32.totalorder %s30, %s33
      %p42 = scmp.eq.s32.totalorder %s25, 1
      %p43 = por %p41, %p42
      %p44 = scmp.ne.s32.totalorder %s33, %s34
      %p45 = scmp.eq.s32.totalorder %s25, 0
      %p46 = por %p44, %p45
      %p47 = scmp.ne.s32.totalorder %s33, %s34
      %p48 = scmp.eq.s32.totalorder %s26, 1
      %p49 = por %p47, %p48
      %p51 = scmp.ne.s32.totalorder %s34, %s50
      %p52 = scmp.eq.s32.totalorder %s26, 0
      %p53 = por %p51, %p52
      %s54 = ssub.s32 %s20, %s27
      %p55 = scmp.eq.s32.totalorder %s54, 0
      %s57 = sadd.s32 %s56, 1
      %s58 = scalar_select %p55, %s56, %s57
      %p61 = pneg %p55
      %p62 = scmp.eq.s32.totalorder %s20, 1
      %p63 = por %p61, %p62
      %p64 = scmp.ne.s32.totalorder %s56, %s59
      %p65 = scmp.eq.s32.totalorder %s20, 0
      %p66 = por %p64, %p65
      %p67 = scmp.ne.s32.totalorder %s56, %s59
      %p68 = scmp.eq.s32.totalorder %s25, 1
      %p69 = por %p67, %p68
      %p70 = scmp.ne.s32.totalorder %s59, %s60
      %p71 = scmp.eq.s32.totalorder %s25, 0
      %p72 = por %p70, %p71
      %p73 = scmp.ne.s32.totalorder %s59, %s60
      %p74 = scmp.eq.s32.totalorder %s26, 1
      %p75 = por %p73, %p74
      %p77 = scmp.ne.s32.totalorder %s60, %s76
      %p78 = scmp.eq.s32.totalorder %s26, 0
      %p79 = por %p77, %p78
      %s80 = ssub.s32 %s20, %s27
      %p81 = scmp.eq.s32.totalorder %s80, 0
      %s83 = sadd.s32 %s82, 1
      %s84 = scalar_select %p81, %s82, %s83
      %p87 = pneg %p81
      %p88 = scmp.eq.s32.totalorder %s20, 1
      %p89 = por %p87, %p88
      %p90 = scmp.ne.s32.totalorder %s82, %s85
      %p91 = scmp.eq.s32.totalorder %s20, 0
      %p92 = por %p90, %p91
      %p93 = scmp.ne.s32.totalorder %s82, %s85
      %p94 = scmp.eq.s32.totalorder %s25, 1
      %p95 = por %p93, %p94
      %p96 = scmp.ne.s32.totalorder %s85, %s86
      %p97 = scmp.eq.s32.totalorder %s25, 0
      %p98 = por %p96, %p97
      %p99 = scmp.ne.s32.totalorder %s85, %s86
      %p100 = scmp.eq.s32.totalorder %s26, 1
      %p101 = por %p99, %p100
      %p103 = scmp.ne.s32.totalorder %s86, %s102
      %p104 = scmp.eq.s32.totalorder %s26, 0
      %p105 = por %p103, %p104
      %s107 = sadd.s32 %s106, 1
      %p110 = scmp.eq.s32.totalorder %s20, 1
      %p111 = scmp.ne.s32.totalorder %s106, %s108
      %p112 = scmp.eq.s32.totalorder %s20, 0
      %p113 = por %p111, %p112
      %p114 = scmp.ne.s32.totalorder %s106, %s108
      %p115 = scmp.eq.s32.totalorder %s25, 1
      %p116 = por %p114, %p115
      %p117 = scmp.ne.s32.totalorder %s108, %s109
      %p118 = scmp.eq.s32.totalorder %s25, 0
      %p119 = por %p117, %p118
      %p120 = scmp.ne.s32.totalorder %s108, %s109
      %p121 = scmp.eq.s32.totalorder %s26, 1
      %p122 = por %p120, %p121
      %p124 = scmp.ne.s32.totalorder %s109, %s123
      %p125 = scmp.eq.s32.totalorder %s26, 0
      %p126 = por %p124, %p125
      %s128 = sadd.s32 %s127, 1
      %p131 = scmp.eq.s32.totalorder %s20, 1
      %p132 = scmp.ne.s32.totalorder %s127, %s129
      %p133 = scmp.eq.s32.totalorder %s20, 0
      %p134 = por %p132, %p133
      %p135 = scmp.ne.s32.totalorder %s127, %s129
      %p136 = scmp.eq.s32.totalorder %s25, 1
      %p137 = por %p135, %p136
      %p138 = scmp.ne.s32.totalorder %s129, %s130
      %p139 = scmp.eq.s32.totalorder %s25, 0
      %p140 = por %p138, %p139
      %p141 = scmp.ne.s32.totalorder %s129, %s130
      %p142 = scmp.eq.s32.totalorder %s26, 1
      %p143 = por %p141, %p142
      %p145 = scmp.ne.s32.totalorder %s130, %s144
      %p146 = scmp.eq.s32.totalorder %s26, 0
      %p147 = por %p145, %p146
      %s149 = sadd.s32 %s148, 1
      %p152 = scmp.eq.s32.totalorder %s20, 1
      %p153 = scmp.ne.s32.totalorder %s148, %s150
      %p154 = scmp.eq.s32.totalorder %s20, 0
      %p155 = por %p153, %p154
      %p156 = scmp.ne.s32.totalorder %s148, %s150
      %p157 = scmp.eq.s32.totalorder %s25, 1
      %p158 = por %p156, %p157
      %p159 = scmp.ne.s32.totalorder %s150, %s151
      %p160 = scmp.eq.s32.totalorder %s25, 0
      %p161 = por %p159, %p160
      %p162 = scmp.ne.s32.totalorder %s150, %s151
      %p163 = scmp.eq.s32.totalorder %s26, 1
      %p164 = por %p162, %p163
      %p166 = scmp.ne.s32.totalorder %s151, %s165
      %p167 = scmp.eq.s32.totalorder %s26, 0
      %p168 = por %p166, %p167
      %s170 = sadd.s32 %s169, 1
      %p173 = scmp.eq.s32.totalorder %s20, 1
      %p174 = scmp.ne.s32.totalorder %s169, %s171
      %p175 = scmp.eq.s32.totalorder %s20, 0
      %p176 = por %p174, %p175
      %p177 = scmp.ne.s32.totalorder %s169, %s171
      %p178 = scmp.eq.s32.totalorder %s25, 1
      %p179 = por %p177, %p178
      %p180 = scmp.ne.s32.totalorder %s171, %s172
      %p181 = scmp.eq.s32.totalorder %s25, 0
      %p182 = por %p180, %p181
      %p183 = scmp.ne.s32.totalorder %s171, %s172
      %p184 = scmp.eq.s32.totalorder %s26, 1
      %p185 = por %p183, %p184
      %p187 = scmp.ne.s32.totalorder %s172, %s186
      %p188 = scmp.eq.s32.totalorder %s26, 0
      %p189 = por %p187, %p188
      %s191 = sadd.s32 %s190, 1
      %p194 = scmp.eq.s32.totalorder %s20, 1
      %p195 = scmp.ne.s32.totalorder %s190, %s192
      %p196 = scmp.eq.s32.totalorder %s20, 0
      %p197 = por %p195, %p196
      %p198 = scmp.ne.s32.totalorder %s190, %s192
      %p199 = scmp.eq.s32.totalorder %s25, 1
      %p200 = por %p198, %p199
      %p201 = scmp.ne.s32.totalorder %s192, %s193
      %p202 = scmp.eq.s32.totalorder %s25, 0
      %p203 = por %p201, %p202
      %p204 = scmp.ne.s32.totalorder %s192, %s193
      %p205 = scmp.eq.s32.totalorder %s26, 1
      %p206 = por %p204, %p205
      %p208 = scmp.ne.s32.totalorder %s193, %s207
      %p209 = scmp.eq.s32.totalorder %s26, 0
      %p210 = por %p208, %p209
      %s212 = sadd.s32 %s211, 1
      %p215 = scmp.eq.s32.totalorder %s20, 1
      %p216 = scmp.ne.s32.totalorder %s211, %s213
      %p217 = scmp.eq.s32.totalorder %s20, 0
      %p218 = por %p216, %p217
      %p219 = scmp.ne.s32.totalorder %s211, %s213
      %p220 = scmp.eq.s32.totalorder %s25, 1
      %p221 = por %p219, %p220
      %p222 = scmp.ne.s32.totalorder %s213, %s214
      %p223 = scmp.eq.s32.totalorder %s25, 0
      %p224 = por %p222, %p223
      %p225 = scmp.ne.s32.totalorder %s213, %s214
      %p226 = scmp.eq.s32.totalorder %s26, 1
      %p227 = por %p225, %p226
      %p229 = scmp.ne.s32.totalorder %s214, %s228
      %p230 = scmp.eq.s32.totalorder %s26, 0
      %p231 = por %p229, %p230
      %s233 = sadd.s32 %s232, 1
      %p236 = scmp.eq.s32.totalorder %s20, 1
      %p237 = scmp.ne.s32.totalorder %s232, %s234
      %p238 = scmp.eq.s32.totalorder %s20, 0
      %p239 = por %p237, %p238
      %p240 = scmp.ne.s32.totalorder %s232, %s234
      %p241 = scmp.eq.s32.totalorder %s25, 1
      %p242 = por %p240, %p241
      %p243 = scmp.ne.s32.totalorder %s234, %s235
      %p244 = scmp.eq.s32.totalorder %s25, 0
      %p245 = por %p243, %p244
      %p246 = scmp.ne.s32.totalorder %s234, %s235
      %p247 = scmp.eq.s32.totalorder %s26, 1
      %p248 = por %p246, %p247
      %p250 = scmp.ne.s32.totalorder %s235, %s249
      %p251 = scmp.eq.s32.totalorder %s26, 0
      %p252 = por %p250, %p251
      %s254 = sadd.s32 %s253, 1
      %p257 = scmp.eq.s32.totalorder %s20, 1
      %p258 = scmp.ne.s32.totalorder %s253, %s255
      %p259 = scmp.eq.s32.totalorder %s20, 0
      %p260 = por %p258, %p259
      %p261 = scmp.ne.s32.totalorder %s253, %s255
      %p262 = scmp.eq.s32.totalorder %s25, 1
      %p263 = por %p261, %p262
      %p264 = scmp.ne.s32.totalorder %s255, %s256
      %p265 = scmp.eq.s32.totalorder %s25, 0
      %p266 = por %p264, %p265
      %p267 = scmp.ne.s32.totalorder %s255, %s256
      %p268 = scmp.eq.s32.totalorder %s26, 1
      %p269 = por %p267, %p268
      %p271 = scmp.ne.s32.totalorder %s256, %s270
      %p272 = scmp.eq.s32.totalorder %s26, 0
      %p273 = por %p271, %p272
      %s274 = ssub.s32 %s20, %s27
      %p275 = scmp.eq.s32.totalorder %s274, 0
      %s277 = sadd.s32 %s276, 1
      %s278 = scalar_select %p275, %s276, %s277
      %p281 = pneg %p275
      %p282 = scmp.eq.s32.totalorder %s20, 1
      %p283 = por %p281, %p282
      %p284 = scmp.ne.s32.totalorder %s276, %s279
      %p285 = scmp.eq.s32.totalorder %s20, 0
      %p286 = por %p284, %p285
      %p287 = scmp.ne.s32.totalorder %s276, %s279
      %p288 = scmp.eq.s32.totalorder %s25, 1
      %p289 = por %p287, %p288
      %p290 = scmp.ne.s32.totalorder %s279, %s280
      %p291 = scmp.eq.s32.totalorder %s25, 0
      %p292 = por %p290, %p291
      %p293 = scmp.ne.s32.totalorder %s279, %s280
      %p294 = scmp.eq.s32.totalorder %s26, 1
      %p295 = por %p293, %p294
      %p297 = scmp.ne.s32.totalorder %s280, %s296
      %p298 = scmp.eq.s32.totalorder %s26, 0
      %p299 = por %p297, %p298
      %p300 = scmp.le.s32.totalorder 1, %s20
      %p301 = scmp.lt.s32.totalorder %s20, 3
      %p302 = pnand %p300, %p301
      %p303 = pneg %p302
      // Predicated region
      $region9: #{aa_inverted_bottleneck_forward.5} parent=5 // pred_check
        _
      $region10: #{aa_inverted_bottleneck_forward.5} parent=5 // pred_check_branch
        %305 = sbr.rel (%p302) target = $region12
      $region11: #{aa_inverted_bottleneck_forward.5} parent=5 // pred_region
        %s306 = ssub.s32 %s20, 1
        // Predicated region
        $region13: #{aa_inverted_bottleneck_forward.5} parent=11 // pred_check
          %p307 = pneg %p119
        $region14: #{aa_inverted_bottleneck_forward.5} parent=11 // pred_check_branch
          %309 = sbr.rel (%p307) target = $region16
        $region15: #{aa_inverted_bottleneck_forward.5} parent=11 // pred_region
          _
        $region16: #{aa_inverted_bottleneck_forward.5} parent=11 // pred_fallthru
          _
        // Predicated region
        $region17: #{aa_inverted_bottleneck_forward.5} parent=11 // pred_check
          %p310 = pneg %p140
        $region18: #{aa_inverted_bottleneck_forward.5} parent=11 // pred_check_branch
          %312 = sbr.rel (%p310) target = $region20
        $region19: #{aa_inverted_bottleneck_forward.5} parent=11 // pred_region
          _
        $region20: #{aa_inverted_bottleneck_forward.5} parent=11 // pred_fallthru
          _
        // Predicated region
        $region21: #{aa_inverted_bottleneck_forward.5} parent=11 // pred_check
          %p313 = pneg %p161
        $region22: #{aa_inverted_bottleneck_forward.5} parent=11 // pred_check_branch
          %315 = sbr.rel (%p313) target = $region24
        $region23: #{aa_inverted_bottleneck_forward.5} parent=11 // pred_region
          _
        $region24: #{aa_inverted_bottleneck_forward.5} parent=11 // pred_fallthru
          _
        // Predicated region
        $region25: #{aa_inverted_bottleneck_forward.5} parent=11 // pred_check
          %p316 = pneg %p182
        $region26: #{aa_inverted_bottleneck_forward.5} parent=11 // pred_check_branch
          %318 = sbr.rel (%p316) target = $region28
        $region27: #{aa_inverted_bottleneck_forward.5} parent=11 // pred_region
          _
        $region28: #{aa_inverted_bottleneck_forward.5} parent=11 // pred_fallthru
          _
        // Predicated region
        $region29: #{aa_inverted_bottleneck_forward.5} parent=11 // pred_check
          %p319 = pneg %p203
        $region30: #{aa_inverted_bottleneck_forward.5} parent=11 // pred_check_branch
          %321 = sbr.rel (%p319) target = $region32
        $region31: #{aa_inverted_bottleneck_forward.5} parent=11 // pred_region
          _
        $region32: #{aa_inverted_bottleneck_forward.5} parent=11 // pred_fallthru
          _
        // Predicated region
        $region33: #{aa_inverted_bottleneck_forward.5} parent=11 // pred_check
          %p322 = pneg %p224
        $region34: #{aa_inverted_bottleneck_forward.5} parent=11 // pred_check_branch
          %324 = sbr.rel (%p322) target = $region36
        $region35: #{aa_inverted_bottleneck_forward.5} parent=11 // pred_region
          _
        $region36: #{aa_inverted_bottleneck_forward.5} parent=11 // pred_fallthru
          _
        // Predicated region
        $region37: #{aa_inverted_bottleneck_forward.5} parent=11 // pred_check
          %p325 = pneg %p245
        $region38: #{aa_inverted_bottleneck_forward.5} parent=11 // pred_check_branch
          %327 = sbr.rel (%p325) target = $region40
        $region39: #{aa_inverted_bottleneck_forward.5} parent=11 // pred_region
          _
        $region40: #{aa_inverted_bottleneck_forward.5} parent=11 // pred_fallthru
          _
        // Predicated region
        $region41: #{aa_inverted_bottleneck_forward.5} parent=11 // pred_check
          %p328 = pneg %p266
        $region42: #{aa_inverted_bottleneck_forward.5} parent=11 // pred_check_branch
          %330 = sbr.rel (%p328) target = $region44
        $region43: #{aa_inverted_bottleneck_forward.5} parent=11 // pred_region
          _
        $region44: #{aa_inverted_bottleneck_forward.5} parent=11 // pred_fallthru
          _
      $region12: #{aa_inverted_bottleneck_forward.5} parent=5 // pred_fallthru
        _
      %p331 = scmp.lt.s32.totalorder %s20, 2
      // Predicated region
      $region45: #{aa_inverted_bottleneck_forward.5} parent=5 // pred_check
        %p332 = pneg %p331
      $region46: #{aa_inverted_bottleneck_forward.5} parent=5 // pred_check_branch
        %334 = sbr.rel (%p332) target = $region48
      $region47: #{aa_inverted_bottleneck_forward.5} parent=5 // pred_region
        // Predicated region
        $region49: #{aa_inverted_bottleneck_forward.5} parent=47 // pred_check
          %p335 = pneg %p40
        $region50: #{aa_inverted_bottleneck_forward.5} parent=47 // pred_check_branch
          %337 = sbr.rel (%p335) target = $region52
        $region51: #{aa_inverted_bottleneck_forward.5} parent=47 // pred_region
          %p338 = scmp.lt.s32.totalorder %s20, 1
          %s339 = scalar_select %p338, %s20, 1
          %s340 = smul.addr %s339, 8
          %s341 = smul.addr %s340, 8
          %s342 = scalar_lea.vmem %s0, %s341
        $region52: #{aa_inverted_bottleneck_forward.5} parent=47 // pred_fallthru
          _
        // Predicated region
        $region53: #{aa_inverted_bottleneck_forward.5} parent=47 // pred_check
          %p343 = pneg %p66
        $region54: #{aa_inverted_bottleneck_forward.5} parent=47 // pred_check_branch
          %345 = sbr.rel (%p343) target = $region56
        $region55: #{aa_inverted_bottleneck_forward.5} parent=47 // pred_region
          %p346 = scmp.lt.s32.totalorder %s20, 1
          %s347 = scalar_select %p346, %s20, 1
          %s348 = smul.addr %s347, 8
          %s349 = smul.addr %s348, 8
          %s350 = scalar_lea.vmem %s1, %s349
        $region56: #{aa_inverted_bottleneck_forward.5} parent=47 // pred_fallthru
          _
        // Predicated region
        $region57: #{aa_inverted_bottleneck_forward.5} parent=47 // pred_check
          %p351 = pneg %p92
        $region58: #{aa_inverted_bottleneck_forward.5} parent=47 // pred_check_branch
          %353 = sbr.rel (%p351) target = $region60
        $region59: #{aa_inverted_bottleneck_forward.5} parent=47 // pred_region
          %p354 = scmp.lt.s32.totalorder %s20, 1
          %s355 = scalar_select %p354, %s20, 1
          %s356 = smul.addr %s355, 8
          %s357 = smul.addr %s356, 8
          %s358 = scalar_lea.vmem %s2, %s357
        $region60: #{aa_inverted_bottleneck_forward.5} parent=47 // pred_fallthru
          _
      $region48: #{aa_inverted_bottleneck_forward.5} parent=5 // pred_fallthru
        _
      %p359 = scmp.le.s32.totalorder 1, %s20
      %p360 = scmp.lt.s32.totalorder %s20, 3
      %p361 = pnand %p359, %p360
      %p362 = pneg %p361
      // Predicated region
      $region61: #{aa_inverted_bottleneck_forward.5} parent=5 // pred_check
        _
      $region62: #{aa_inverted_bottleneck_forward.5} parent=5 // pred_check_branch
        %364 = sbr.rel (%p361) target = $region64
      $region63: #{aa_inverted_bottleneck_forward.5} parent=5 // pred_region
        %s365 = ssub.s32 %s20, 1
        %p366 = scmp.lt.s32.totalorder %s25, 1
        %s367 = scalar_select %p366, %s25, 1
        %s368 = smul.addr %s367, 8
        %s369 = smul.addr %s368, 8
        %s370 = scalar_lea.vmem %s0, %s369
        %p371 = pneg %p46
        %p372 = pneg %p43
        %p373 = scmp.lt.s32.totalorder %s25, 1
        %s374 = scalar_select %p373, %s25, 1
        %s375 = smul.addr %s374, 8
        %s376 = smul.addr %s375, 8
        %s377 = scalar_lea.vmem %s1, %s376
        %p378 = pneg %p72
        %p379 = pneg %p69
        %p380 = scmp.lt.s32.totalorder %s25, 1
        %s381 = scalar_select %p380, %s25, 1
        %s382 = smul.addr %s381, 8
        %s383 = smul.addr %s382, 8
        %s384 = scalar_lea.vmem %s2, %s383
        %p385 = pneg %p98
        %p386 = pneg %p95
        %p387 = pneg %p119
        %p388 = pneg %p116
        %p389 = pneg %p140
        %p390 = pneg %p137
        %p391 = pneg %p161
        %p392 = pneg %p158
        %p393 = pneg %p182
        %p394 = pneg %p179
        %p395 = pneg %p203
        %p396 = pneg %p200
        %p397 = pneg %p224
        %p398 = pneg %p221
        %p399 = pneg %p245
        %p400 = pneg %p242
        %p401 = pneg %p266
        %p402 = pneg %p263
        %p403 = pneg %p292
        %p404 = pneg %p289
        %s405 = sand.u32 %s279, 1
        %s406 = scalar_lea.sflag [#allocation3], %s405
        %s407 = sand.u32 %s279, 1
        %s408 = smul.addr %s407, 64
        %s409 = scalar_lea.vmem [#allocation2], %s408
        %p410 = scmp.lt.s32.totalorder %s25, 1
        %s411 = scalar_select %p410, %s25, 1
        %s412 = smul.addr %s411, 8
        %s413 = smul.addr %s412, 8
        %s414 = scalar_lea.vmem %s0, %s413
        %p415 = scmp.lt.s32.totalorder %s25, 1
        %s416 = scalar_select %p415, %s25, 1
        %s417 = smul.addr %s416, 8
        %s418 = smul.addr %s417, 8
        %s419 = scalar_lea.vmem %s1, %s418
        %p420 = scmp.lt.s32.totalorder %s25, 1
        %s421 = scalar_select %p420, %s25, 1
        %s422 = smul.addr %s421, 8
        %s423 = smul.addr %s422, 8
        %s424 = scalar_lea.vmem %s2, %s423
        %v425 = vld [vmem:[%s5] sm:$0x1]
        %v426 = vld [vmem:[%s6] sm:$0x1]
        %v427 = vld [vmem:[%s424] sm:$0xff]
        %v428 = vld [vmem:[%s424 + $0x8] sm:$0xff]
        %v429 = vld [vmem:[%s424 + $0x10] sm:$0xff]
        %v430 = vld [vmem:[%s424 + $0x18] sm:$0xff]
        %v431 = vld [vmem:[%s424 + $0x20] sm:$0xff]
        %v432 = vld [vmem:[%s424 + $0x28] sm:$0xff]
        %v433 = vld [vmem:[%s424 + $0x30] sm:$0xff]
        %v434 = vld [vmem:[%s424 + $0x38] sm:$0xff]
        %v435 = vld [vmem:[%s3] sm:$0xff]
        %v436 = vld [vmem:[%s4] sm:$0x1]
        %v438 = vperm.slane %v436, 0
        %vm440 = vcmask 64512
        %v442 = vsel %vm440, %v427, 0
        %v445 = vsel %vm440, %v428, 0
        %v448 = vsel %vm440, %v429, 0
        %v451 = vsel %vm440, %v430, 0
        %v454 = vsel %vm440, %v431, 0
        %v457 = vsel %vm440, %v432, 0
        %v460 = vsel %vm440, %v433, 0
        %v463 = vsel %vm440, %v434, 0
        %465 = vmatpush.msra.mxu0 0.0
        %466 = vmatpush.msra.mxu0 0.0
        %467 = vmatpush.msra.mxu0 0.0
        %468 = vmatpush.msra.mxu0 0.0
        %469 = vmatpush.msra.mxu0 0.0
        %470 = vmatpush.msra.mxu0 0.0
        %471 = vmatpush.msra.mxu0 0.0
        %472 = vmatpush.msra.mxu0 0.0
        %473 = vmatpush.msra.mxu0 0.0
        %474 = vmatpush.msra.mxu0 0.0
        %475 = vmatpush.msra.mxu0 0.0
        %476 = vmatpush.msra.mxu0 0.0
        %477 = vmatpush.msra.mxu0 0.0
        %478 = vmatpush.msra.mxu0 0.0
        %479 = vmatpush.msra.mxu0 0.0
        %480 = vmatpush.msra.mxu0 %v435
        %481 = vmatmul.f32.gmra.mxu0 %v442
        %v482 = vpop.f32.mrf.mxu0
        %v483 = vadd.f32 %v438, %v482
        %484 = vmatmul.f32.gmra.mxu0 %v445
        %v485 = vpop.f32.mrf.mxu0
        %v486 = vadd.f32 %v438, %v485
        %487 = vmatmul.f32.gmra.mxu0 %v448
        %v488 = vpop.f32.mrf.mxu0
        %v489 = vadd.f32 %v438, %v488
        %490 = vmatmul.f32.gmra.mxu0 %v451
        %v491 = vpop.f32.mrf.mxu0
        %v492 = vadd.f32 %v438, %v491
        %493 = vmatmul.f32.gmra.mxu0 %v454
        %v494 = vpop.f32.mrf.mxu0
        %v495 = vadd.f32 %v438, %v494
        %496 = vmatmul.f32.gmra.mxu0 %v457
        %v497 = vpop.f32.mrf.mxu0
        %v498 = vadd.f32 %v438, %v497
        %499 = vmatmul.f32.gmra.mxu0 %v460
        %v500 = vpop.f32.mrf.mxu0
        %v501 = vadd.f32 %v438, %v500
        %502 = vmatmul.f32.gmra.mxu0 %v463
        %v503 = vpop.f32.mrf.mxu0
        %v504 = vadd.f32 %v438, %v503
        %505 = vdwg.mxu0
        %v506 = vld [vmem:[%s414] sm:$0xff]
        %v507 = vld [vmem:[%s414 + $0x8] sm:$0xff]
        %v508 = vld [vmem:[%s414 + $0x10] sm:$0xff]
        %v509 = vld [vmem:[%s414 + $0x18] sm:$0xff]
        %v510 = vld [vmem:[%s414 + $0x20] sm:$0xff]
        %v511 = vld [vmem:[%s414 + $0x28] sm:$0xff]
        %v512 = vld [vmem:[%s414 + $0x30] sm:$0xff]
        %v513 = vld [vmem:[%s414 + $0x38] sm:$0xff]
        %v514 = vld [vmem:[%s419] sm:$0xff]
        %v515 = vld [vmem:[%s419 + $0x8] sm:$0xff]
        %v516 = vld [vmem:[%s419 + $0x10] sm:$0xff]
        %v517 = vld [vmem:[%s419 + $0x18] sm:$0xff]
        %v518 = vld [vmem:[%s419 + $0x20] sm:$0xff]
        %v519 = vld [vmem:[%s419 + $0x28] sm:$0xff]
        %v520 = vld [vmem:[%s419 + $0x30] sm:$0xff]
        %v521 = vld [vmem:[%s419 + $0x38] sm:$0xff]
        %v523 = vperm.slane %v425, 0
        %v525 = vmul.f32 %v514, %v523
        %v526 = vmul.f32 %v515, %v523
        %v527 = vmul.f32 %v516, %v523
        %v528 = vmul.f32 %v517, %v523
        %v529 = vmul.f32 %v518, %v523
        %v530 = vmul.f32 %v519, %v523
        %v531 = vmul.f32 %v520, %v523
        %v532 = vmul.f32 %v521, %v523
        %v534 = vperm.slane %v426, 0
        %v536 = vadd.f32 %v525, %v534
        %v537 = vadd.f32 %v526, %v534
        %v538 = vadd.f32 %v527, %v534
        %v539 = vadd.f32 %v528, %v534
        %v540 = vadd.f32 %v529, %v534
        %v541 = vadd.f32 %v530, %v534
        %v542 = vadd.f32 %v531, %v534
        %v543 = vadd.f32 %v532, %v534
        %v544 = vmax.f32 %v536, 0.0
        %v545 = vmax.f32 %v537, 0.0
        %v546 = vmax.f32 %v538, 0.0
        %v547 = vmax.f32 %v539, 0.0
        %v548 = vmax.f32 %v540, 0.0
        %v549 = vmax.f32 %v541, 0.0
        %v550 = vmax.f32 %v542, 0.0
        %v551 = vmax.f32 %v543, 0.0
        %v552 = vand.u32 2147483647, %v536
        %v553 = vand.u32 2147483647, %v537
        %v554 = vand.u32 2147483647, %v538
        %v555 = vand.u32 2147483647, %v539
        %v556 = vand.u32 2147483647, %v540
        %v557 = vand.u32 2147483647, %v541
        %v558 = vand.u32 2147483647, %v542
        %v559 = vand.u32 2147483647, %v543
        %v560 = vsub.f32 0.0, %v552
        %v561 = vsub.f32 0.0, %v553
        %v562 = vsub.f32 0.0, %v554
        %v563 = vsub.f32 0.0, %v555
        %v564 = vsub.f32 0.0, %v556
        %v565 = vsub.f32 0.0, %v557
        %v566 = vsub.f32 0.0, %v558
        %v567 = vsub.f32 0.0, %v559
        %v568 = vmul.f32 %v560, 1.442695
        %v569 = vpow.pop %v568
        %v570 = vmul.f32 %v561, 1.442695
        %v571 = vpow.pop %v570
        %v572 = vmul.f32 %v562, 1.442695
        %v573 = vpow.pop %v572
        %v574 = vmul.f32 %v563, 1.442695
        %v575 = vpow.pop %v574
        %v576 = vmul.f32 %v564, 1.442695
        %v577 = vpow.pop %v576
        %v578 = vmul.f32 %v565, 1.442695
        %v579 = vpow.pop %v578
        %v580 = vmul.f32 %v566, 1.442695
        %v581 = vpow.pop %v580
        %v582 = vmul.f32 %v567, 1.442695
        %v583 = vpow.pop %v582
        %v584 = vadd.f32 %v569, 1.0
        %v585 = vadd.f32 %v571, 1.0
        %v586 = vadd.f32 %v573, 1.0
        %v587 = vadd.f32 %v575, 1.0
        %v588 = vadd.f32 %v577, 1.0
        %v589 = vadd.f32 %v579, 1.0
        %v590 = vadd.f32 %v581, 1.0
        %v591 = vadd.f32 %v583, 1.0
        %v592 = vlog2.pop %v584
        %v593 = vmul.f32 %v592, 0.6931472
        %v594 = vlog2.pop %v585
        %v595 = vmul.f32 %v594, 0.6931472
        %v596 = vlog2.pop %v586
        %v597 = vmul.f32 %v596, 0.6931472
        %v598 = vlog2.pop %v587
        %v599 = vmul.f32 %v598, 0.6931472
        %v600 = vlog2.pop %v588
        %v601 = vmul.f32 %v600, 0.6931472
        %v602 = vlog2.pop %v589
        %v603 = vmul.f32 %v602, 0.6931472
        %v604 = vlog2.pop %v590
        %v605 = vmul.f32 %v604, 0.6931472
        %v606 = vlog2.pop %v591
        %v607 = vmul.f32 %v606, 0.6931472
        %v608 = vadd.f32 %v544, %v593
        %v609 = vadd.f32 %v545, %v595
        %v610 = vadd.f32 %v546, %v597
        %v611 = vadd.f32 %v547, %v599
        %v612 = vadd.f32 %v548, %v601
        %v613 = vadd.f32 %v549, %v603
        %v614 = vadd.f32 %v550, %v605
        %v615 = vadd.f32 %v551, %v607
        %v616 = vtanh.pop %v608
        %v617 = vtanh.pop %v609
        %v618 = vtanh.pop %v610
        %v619 = vtanh.pop %v611
        %v620 = vtanh.pop %v612
        %v621 = vtanh.pop %v613
        %v622 = vtanh.pop %v614
        %v623 = vtanh.pop %v615
        %v624 = vmul.f32 %v536, %v616
        %v625 = vmul.f32 %v537, %v617
        %v626 = vmul.f32 %v538, %v618
        %v627 = vmul.f32 %v539, %v619
        %v628 = vmul.f32 %v540, %v620
        %v629 = vmul.f32 %v541, %v621
        %v630 = vmul.f32 %v542, %v622
        %v631 = vmul.f32 %v543, %v623
        %632 = vrot.lane.b32.xlu0 %v523, 56
        %v633 = vpop.permute.xlu0 %632
        %v635 = vmul.f32 %v483, %v633
        %v636 = vmul.f32 %v486, %v633
        %v637 = vmul.f32 %v489, %v633
        %v638 = vmul.f32 %v492, %v633
        %v639 = vmul.f32 %v495, %v633
        %v640 = vmul.f32 %v498, %v633
        %v641 = vmul.f32 %v501, %v633
        %v642 = vmul.f32 %v504, %v633
        %643 = vrot.lane.b32.xlu0 %v534, 56
        %v644 = vpop.permute.xlu0 %643
        %v646 = vadd.f32 %v635, %v644
        %v647 = vadd.f32 %v636, %v644
        %v648 = vadd.f32 %v637, %v644
        %v649 = vadd.f32 %v638, %v644
        %v650 = vadd.f32 %v639, %v644
        %v651 = vadd.f32 %v640, %v644
        %v652 = vadd.f32 %v641, %v644
        %v653 = vadd.f32 %v642, %v644
        %v654 = vmax.f32 %v646, 0.0
        %v655 = vmax.f32 %v647, 0.0
        %v656 = vmax.f32 %v648, 0.0
        %v657 = vmax.f32 %v649, 0.0
        %v658 = vmax.f32 %v650, 0.0
        %v659 = vmax.f32 %v651, 0.0
        %v660 = vmax.f32 %v652, 0.0
        %v661 = vmax.f32 %v653, 0.0
        %v662 = vand.u32 2147483647, %v646
        %v663 = vand.u32 2147483647, %v647
        %v664 = vand.u32 2147483647, %v648
        %v665 = vand.u32 2147483647, %v649
        %v666 = vand.u32 2147483647, %v650
        %v667 = vand.u32 2147483647, %v651
        %v668 = vand.u32 2147483647, %v652
        %v669 = vand.u32 2147483647, %v653
        %v670 = vsub.f32 0.0, %v662
        %v671 = vsub.f32 0.0, %v663
        %v672 = vsub.f32 0.0, %v664
        %v673 = vsub.f32 0.0, %v665
        %v674 = vsub.f32 0.0, %v666
        %v675 = vsub.f32 0.0, %v667
        %v676 = vsub.f32 0.0, %v668
        %v677 = vsub.f32 0.0, %v669
        %v678 = vmul.f32 %v670, 1.442695
        %v679 = vpow.pop %v678
        %v680 = vmul.f32 %v671, 1.442695
        %v681 = vpow.pop %v680
        %v682 = vmul.f32 %v672, 1.442695
        %v683 = vpow.pop %v682
        %v684 = vmul.f32 %v673, 1.442695
        %v685 = vpow.pop %v684
        %v686 = vmul.f32 %v674, 1.442695
        %v687 = vpow.pop %v686
        %v688 = vmul.f32 %v675, 1.442695
        %v689 = vpow.pop %v688
        %v690 = vmul.f32 %v676, 1.442695
        %v691 = vpow.pop %v690
        %v692 = vmul.f32 %v677, 1.442695
        %v693 = vpow.pop %v692
        %v694 = vadd.f32 %v679, 1.0
        %v695 = vadd.f32 %v681, 1.0
        %v696 = vadd.f32 %v683, 1.0
        %v697 = vadd.f32 %v685, 1.0
        %v698 = vadd.f32 %v687, 1.0
        %v699 = vadd.f32 %v689, 1.0
        %v700 = vadd.f32 %v691, 1.0
        %v701 = vadd.f32 %v693, 1.0
        %v702 = vlog2.pop %v694
        %v703 = vmul.f32 %v702, 0.6931472
        %v704 = vlog2.pop %v695
        %v705 = vmul.f32 %v704, 0.6931472
        %v706 = vlog2.pop %v696
        %v707 = vmul.f32 %v706, 0.6931472
        %v708 = vlog2.pop %v697
        %v709 = vmul.f32 %v708, 0.6931472
        %v710 = vlog2.pop %v698
        %v711 = vmul.f32 %v710, 0.6931472
        %v712 = vlog2.pop %v699
        %v713 = vmul.f32 %v712, 0.6931472
        %v714 = vlog2.pop %v700
        %v715 = vmul.f32 %v714, 0.6931472
        %v716 = vlog2.pop %v701
        %v717 = vmul.f32 %v716, 0.6931472
        %v718 = vadd.f32 %v654, %v703
        %v719 = vadd.f32 %v655, %v705
        %v720 = vadd.f32 %v656, %v707
        %v721 = vadd.f32 %v657, %v709
        %v722 = vadd.f32 %v658, %v711
        %v723 = vadd.f32 %v659, %v713
        %v724 = vadd.f32 %v660, %v715
        %v725 = vadd.f32 %v661, %v717
        %v726 = vtanh.pop %v718
        %v727 = vtanh.pop %v719
        %v728 = vtanh.pop %v720
        %v729 = vtanh.pop %v721
        %v730 = vtanh.pop %v722
        %v731 = vtanh.pop %v723
        %v732 = vtanh.pop %v724
        %v733 = vtanh.pop %v725
        %v734 = vmul.f32 %v646, %v726
        %v735 = vmul.f32 %v647, %v727
        %v736 = vmul.f32 %v648, %v728
        %v737 = vmul.f32 %v649, %v729
        %v738 = vmul.f32 %v650, %v730
        %v739 = vmul.f32 %v651, %v731
        %v740 = vmul.f32 %v652, %v732
        %v741 = vmul.f32 %v653, %v733
        %v742 = vadd.f32 %v506, %v624
        %v743 = vadd.f32 %v507, %v625
        %v744 = vadd.f32 %v508, %v626
        %v745 = vadd.f32 %v509, %v627
        %v746 = vadd.f32 %v510, %v628
        %v747 = vadd.f32 %v511, %v629
        %v748 = vadd.f32 %v512, %v630
        %v749 = vadd.f32 %v513, %v631
        %758 = vrot.lane.b32.xlu0 %v734, 72
        %v759 = vpop.permute.xlu0 %758
        %760 = vrot.lane.b32.xlu0 %v735, 72
        %v761 = vpop.permute.xlu0 %760
        %762 = vrot.lane.b32.xlu0 %v736, 72
        %v763 = vpop.permute.xlu0 %762
        %764 = vrot.lane.b32.xlu0 %v737, 72
        %v765 = vpop.permute.xlu0 %764
        %766 = vrot.lane.b32.xlu0 %v738, 72
        %v767 = vpop.permute.xlu0 %766
        %768 = vrot.lane.b32.xlu0 %v739, 72
        %v769 = vpop.permute.xlu0 %768
        %770 = vrot.lane.b32.xlu0 %v740, 72
        %v771 = vpop.permute.xlu0 %770
        %772 = vrot.lane.b32.xlu0 %v741, 72
        %v773 = vpop.permute.xlu0 %772
        %v782 = vadd.f32 %v506, %v759
        %v783 = vadd.f32 %v507, %v761
        %v784 = vadd.f32 %v508, %v763
        %v785 = vadd.f32 %v509, %v765
        %v786 = vadd.f32 %v510, %v767
        %v787 = vadd.f32 %v511, %v769
        %v788 = vadd.f32 %v512, %v771
        %v789 = vadd.f32 %v513, %v773
        %v790 = vld [vmem:[%s7] sm:$0xff]
        %v791 = vld [vmem:[%s7 + $0x8] sm:$0xff]
        %v792 = vld [vmem:[%s7 + $0x10] sm:$0xff]
        %v793 = vld [vmem:[%s7 + $0x18] sm:$0xff]
        %v794 = vld [vmem:[%s7 + $0x20] sm:$0xff]
        %v795 = vld [vmem:[%s7 + $0x28] sm:$0xff]
        %v796 = vld [vmem:[%s7 + $0x30] sm:$0xff]
        %v797 = vld [vmem:[%s7 + $0x38] sm:$0xff]
        %v798 = vld [vmem:[%s7 + $0x40] sm:$0xff]
        %v799 = vld [vmem:[%s7 + $0x48] sm:$0xff]
        %808 = vrot.lane.b32.xlu0 %v782, 56
        %v809 = vpop.permute.xlu0 %808
        %810 = vrot.lane.b32.xlu0 %v783, 56
        %v811 = vpop.permute.xlu0 %810
        %812 = vrot.lane.b32.xlu0 %v784, 56
        %v813 = vpop.permute.xlu0 %812
        %814 = vrot.lane.b32.xlu0 %v785, 56
        %v815 = vpop.permute.xlu0 %814
        %816 = vrot.lane.b32.xlu0 %v786, 56
        %v817 = vpop.permute.xlu0 %816
        %818 = vrot.lane.b32.xlu0 %v787, 56
        %v819 = vpop.permute.xlu0 %818
        %820 = vrot.lane.b32.xlu0 %v788, 56
        %v821 = vpop.permute.xlu0 %820
        %822 = vrot.lane.b32.xlu0 %v789, 56
        %v823 = vpop.permute.xlu0 %822
        %v824 = vsel %vm440, %v809, 0
        %v826 = vsel %vm440, %v811, 0
        %v828 = vsel %vm440, %v813, 0
        %v830 = vsel %vm440, %v815, 0
        %v832 = vsel %vm440, %v817, 0
        %v834 = vsel %vm440, %v819, 0
        %v836 = vsel %vm440, %v821, 0
        %v838 = vsel %vm440, %v823, 0
        %840 = vmatpush.msra.mxu0 0.0
        %841 = vmatpush.msra.mxu0 0.0
        %842 = vmatpush.msra.mxu0 0.0
        %843 = vmatpush.msra.mxu0 0.0
        %844 = vmatpush.msra.mxu0 0.0
        %845 = vmatpush.msra.mxu0 0.0
        %846 = vmatpush.msra.mxu0 0.0
        %847 = vmatpush.msra.mxu0 0.0
        %848 = vmatpush.msra.mxu0 0.0
        %849 = vmatpush.msra.mxu0 0.0
        %850 = vmatpush.msra.mxu0 0.0
        %851 = vmatpush.msra.mxu0 0.0
        %852 = vmatpush.msra.mxu0 0.0
        %853 = vmatpush.msra.mxu0 0.0
        %854 = vmatpush.msra.mxu0 0.0
        %855 = vmatpush.msra.mxu0 %v799
        %856 = vmatmul.f32.gmra.mxu0 %v824
        %v857 = vpop.f32.mrf.mxu0
        %v858 = vadd.f32 0.0, %v857
        %859 = vmatmul.f32.gmra.mxu0 %v826
        %v860 = vpop.f32.mrf.mxu0
        %v861 = vadd.f32 0.0, %v860
        %862 = vmatmul.f32.gmra.mxu0 %v828
        %v863 = vpop.f32.mrf.mxu0
        %v864 = vadd.f32 0.0, %v863
        %865 = vmatmul.f32.gmra.mxu0 %v830
        %v866 = vpop.f32.mrf.mxu0
        %v867 = vadd.f32 0.0, %v866
        %868 = vmatmul.f32.gmra.mxu0 %v832
        %v869 = vpop.f32.mrf.mxu0
        %v870 = vadd.f32 0.0, %v869
        %871 = vmatmul.f32.gmra.mxu0 %v834
        %v872 = vpop.f32.mrf.mxu0
        %v873 = vadd.f32 0.0, %v872
        %874 = vmatmul.f32.gmra.mxu0 %v836
        %v875 = vpop.f32.mrf.mxu0
        %v876 = vadd.f32 0.0, %v875
        %877 = vmatmul.f32.gmra.mxu0 %v838
        %v878 = vpop.f32.mrf.mxu0
        %v879 = vadd.f32 0.0, %v878
        %880 = vdwg.mxu0
        %vm881 = vcmask 588800
        %v883 = vsel %vm881, %v742, 0
        %v886 = vsel %vm881, %v743, 0
        %v889 = vsel %vm881, %v744, 0
        %v892 = vsel %vm881, %v745, 0
        %v895 = vsel %vm881, %v746, 0
        %v898 = vsel %vm881, %v747, 0
        %v901 = vsel %vm881, %v748, 0
        %v904 = vsel %vm881, %v749, 0
        %906 = vmatpush.msra.mxu0 0.0
        %907 = vmatpush.msra.mxu0 0.0
        %908 = vmatpush.msra.mxu0 0.0
        %909 = vmatpush.msra.mxu0 0.0
        %910 = vmatpush.msra.mxu0 0.0
        %911 = vmatpush.msra.mxu0 0.0
        %912 = vmatpush.msra.mxu0 0.0
        %913 = vmatpush.msra.mxu0 %v798
        %914 = vmatpush.msra.mxu0 %v797
        %915 = vmatpush.msra.mxu0 %v796
        %916 = vmatpush.msra.mxu0 %v795
        %917 = vmatpush.msra.mxu0 %v794
        %918 = vmatpush.msra.mxu0 %v793
        %919 = vmatpush.msra.mxu0 %v792
        %920 = vmatpush.msra.mxu0 %v791
        %921 = vmatpush.msra.mxu0 %v790
        %922 = vmatmul.f32.gmra.mxu0 %v883
        %v923 = vpop.f32.mrf.mxu0
        %v924 = vadd.f32 %v858, %v923
        %925 = vmatmul.f32.gmra.mxu0 %v886
        %v926 = vpop.f32.mrf.mxu0
        %v927 = vadd.f32 %v861, %v926
        %928 = vmatmul.f32.gmra.mxu0 %v889
        %v929 = vpop.f32.mrf.mxu0
        %v930 = vadd.f32 %v864, %v929
        %931 = vmatmul.f32.gmra.mxu0 %v892
        %v932 = vpop.f32.mrf.mxu0
        %v933 = vadd.f32 %v867, %v932
        %934 = vmatmul.f32.gmra.mxu0 %v895
        %v935 = vpop.f32.mrf.mxu0
        %v936 = vadd.f32 %v870, %v935
        %937 = vmatmul.f32.gmra.mxu0 %v898
        %v938 = vpop.f32.mrf.mxu0
        %v939 = vadd.f32 %v873, %v938
        %940 = vmatmul.f32.gmra.mxu0 %v901
        %v941 = vpop.f32.mrf.mxu0
        %v942 = vadd.f32 %v876, %v941
        %943 = vmatmul.f32.gmra.mxu0 %v904
        %v944 = vpop.f32.mrf.mxu0
        %v945 = vadd.f32 %v879, %v944
        %946 = vdwg.mxu0
        %v947 = vld [vmem:[%s8] sm:$0x1]
        %v949 = vperm.slane %v947, 0
        %v951 = vadd.f32 %v924, %v949
        %v952 = vadd.f32 %v927, %v949
        %v953 = vadd.f32 %v930, %v949
        %v954 = vadd.f32 %v933, %v949
        %v955 = vadd.f32 %v936, %v949
        %v956 = vadd.f32 %v939, %v949
        %v957 = vadd.f32 %v942, %v949
        %v958 = vadd.f32 %v945, %v949
        %v959 = vld [vmem:[%s9] sm:$0x1]
        %v961 = vperm.slane %v959, 0
        %v963 = vmul.f32 %v951, %v961
        %v964 = vmul.f32 %v952, %v961
        %v965 = vmul.f32 %v953, %v961
        %v966 = vmul.f32 %v954, %v961
        %v967 = vmul.f32 %v955, %v961
        %v968 = vmul.f32 %v956, %v961
        %v969 = vmul.f32 %v957, %v961
        %v970 = vmul.f32 %v958, %v961
        %v971 = vld [vmem:[%s10] sm:$0x1]
        %v973 = vperm.slane %v971, 0
        %v975 = vadd.f32 %v963, %v973
        %v976 = vadd.f32 %v964, %v973
        %v977 = vadd.f32 %v965, %v973
        %v978 = vadd.f32 %v966, %v973
        %v979 = vadd.f32 %v967, %v973
        %v980 = vadd.f32 %v968, %v973
        %v981 = vadd.f32 %v969, %v973
        %v982 = vadd.f32 %v970, %v973
        %v983 = vmax.f32 %v975, 0.0
        %v984 = vmax.f32 %v976, 0.0
        %v985 = vmax.f32 %v977, 0.0
        %v986 = vmax.f32 %v978, 0.0
        %v987 = vmax.f32 %v979, 0.0
        %v988 = vmax.f32 %v980, 0.0
        %v989 = vmax.f32 %v981, 0.0
        %v990 = vmax.f32 %v982, 0.0
        %v991 = vand.u32 2147483647, %v975
        %v992 = vand.u32 2147483647, %v976
        %v993 = vand.u32 2147483647, %v977
        %v994 = vand.u32 2147483647, %v978
        %v995 = vand.u32 2147483647, %v979
        %v996 = vand.u32 2147483647, %v980
        %v997 = vand.u32 2147483647, %v981
        %v998 = vand.u32 2147483647, %v982
        %v999 = vsub.f32 0.0, %v991
        %v1000 = vsub.f32 0.0, %v992
        %v1001 = vsub.f32 0.0, %v993
        %v1002 = vsub.f32 0.0, %v994
        %v1003 = vsub.f32 0.0, %v995
        %v1004 = vsub.f32 0.0, %v996
        %v1005 = vsub.f32 0.0, %v997
        %v1006 = vsub.f32 0.0, %v998
        %v1007 = vmul.f32 %v999, 1.442695
        %v1008 = vpow.pop %v1007
        %v1009 = vmul.f32 %v1000, 1.442695
        %v1010 = vpow.pop %v1009
        %v1011 = vmul.f32 %v1001, 1.442695
        %v1012 = vpow.pop %v1011
        %v1013 = vmul.f32 %v1002, 1.442695
        %v1014 = vpow.pop %v1013
        %v1015 = vmul.f32 %v1003, 1.442695
        %v1016 = vpow.pop %v1015
        %v1017 = vmul.f32 %v1004, 1.442695
        %v1018 = vpow.pop %v1017
        %v1019 = vmul.f32 %v1005, 1.442695
        %v1020 = vpow.pop %v1019
        %v1021 = vmul.f32 %v1006, 1.442695
        %v1022 = vpow.pop %v1021
        %v1023 = vadd.f32 %v1008, 1.0
        %v1024 = vadd.f32 %v1010, 1.0
        %v1025 = vadd.f32 %v1012, 1.0
        %v1026 = vadd.f32 %v1014, 1.0
        %v1027 = vadd.f32 %v1016, 1.0
        %v1028 = vadd.f32 %v1018, 1.0
        %v1029 = vadd.f32 %v1020, 1.0
        %v1030 = vadd.f32 %v1022, 1.0
        %v1031 = vlog2.pop %v1023
        %v1032 = vmul.f32 %v1031, 0.6931472
        %v1033 = vlog2.pop %v1024
        %v1034 = vmul.f32 %v1033, 0.6931472
        %v1035 = vlog2.pop %v1025
        %v1036 = vmul.f32 %v1035, 0.6931472
        %v1037 = vlog2.pop %v1026
        %v1038 = vmul.f32 %v1037, 0.6931472
        %v1039 = vlog2.pop %v1027
        %v1040 = vmul.f32 %v1039, 0.6931472
        %v1041 = vlog2.pop %v1028
        %v1042 = vmul.f32 %v1041, 0.6931472
        %v1043 = vlog2.pop %v1029
        %v1044 = vmul.f32 %v1043, 0.6931472
        %v1045 = vlog2.pop %v1030
        %v1046 = vmul.f32 %v1045, 0.6931472
        %v1047 = vadd.f32 %v983, %v1032
        %v1048 = vadd.f32 %v984, %v1034
        %v1049 = vadd.f32 %v985, %v1036
        %v1050 = vadd.f32 %v986, %v1038
        %v1051 = vadd.f32 %v987, %v1040
        %v1052 = vadd.f32 %v988, %v1042
        %v1053 = vadd.f32 %v989, %v1044
        %v1054 = vadd.f32 %v990, %v1046
        %v1055 = vtanh.pop %v1047
        %v1056 = vtanh.pop %v1048
        %v1057 = vtanh.pop %v1049
        %v1058 = vtanh.pop %v1050
        %v1059 = vtanh.pop %v1051
        %v1060 = vtanh.pop %v1052
        %v1061 = vtanh.pop %v1053
        %v1062 = vtanh.pop %v1054
        %v1063 = vmul.f32 %v975, %v1055
        %v1064 = vmul.f32 %v976, %v1056
        %v1065 = vmul.f32 %v977, %v1057
        %v1066 = vmul.f32 %v978, %v1058
        %v1067 = vmul.f32 %v979, %v1059
        %v1068 = vmul.f32 %v980, %v1060
        %v1069 = vmul.f32 %v981, %v1061
        %v1070 = vmul.f32 %v982, %v1062
        %vm1071 = vcmask 162816
        %1072 = vst.msk [vmem:[%s409] sm:$0xff] %vm1071, %v1063
        %1073 = vst.msk [vmem:[%s409 + $0x8] sm:$0xff] %vm1071, %v1064
        %1074 = vst.msk [vmem:[%s409 + $0x10] sm:$0xff] %vm1071, %v1065
        %1075 = vst.msk [vmem:[%s409 + $0x18] sm:$0xff] %vm1071, %v1066
        %1076 = vst.msk [vmem:[%s409 + $0x20] sm:$0xff] %vm1071, %v1067
        %1077 = vst.msk [vmem:[%s409 + $0x28] sm:$0xff] %vm1071, %v1068
        %1078 = vst.msk [vmem:[%s409 + $0x30] sm:$0xff] %vm1071, %v1069
        %1079 = vst.msk [vmem:[%s409 + $0x38] sm:$0xff] %vm1071, %v1070
        %s1080 = sand.u32 %s279, 1
        %s1081 = scalar_lea.sflag [#allocation3], %s1080
        %s1082 = sand.u32 %s279, 1
        %s1083 = smul.addr %s1082, 64
        %s1084 = scalar_lea.vmem [#allocation2], %s1083
        // Predicated region
        $region65: #{aa_inverted_bottleneck_forward.5} parent=63 // pred_check
          %p1085 = pneg %p289
        $region66: #{aa_inverted_bottleneck_forward.5} parent=63 // pred_check_branch
          %1087 = sbr.rel (%p1085) target = $region68
        $region67: #{aa_inverted_bottleneck_forward.5} parent=63 // pred_region
          %1089 = vsyncadd %s1081, 0
          %s1090 = smul.addr %s25, 8
          %s1091 = smul.addr %s1090, 8
          %s1092 = scalar_lea.hbm %s11, %s1091
          %s1093 = sshll.u32 %s1084, 4
          %s1094 = int_to_ptr.vmem [resolvable:$true] %s1093
          %s1095 = sshll.u32 %s1092, 4
          %s1096 = int_to_ptr.hbm [resolvable:$true] %s1095
          %1101 = dma.vmem_to_hbm [thread:$0]  %s1094, 1024, %s1096, %s1081, 128, 128, 8
        $region68: #{aa_inverted_bottleneck_forward.5} parent=63 // pred_fallthru
          _
      $region64: #{aa_inverted_bottleneck_forward.5} parent=5 // pred_fallthru
        _
      %p1102 = scmp.le.s32.totalorder 2, %s20
      // Predicated region
      $region69: #{aa_inverted_bottleneck_forward.5} parent=5 // pred_check
        %p1103 = pneg %p1102
      $region70: #{aa_inverted_bottleneck_forward.5} parent=5 // pred_check_branch
        %1105 = sbr.rel (%p1103) target = $region72
      $region71: #{aa_inverted_bottleneck_forward.5} parent=5 // pred_region
        %s1106 = ssub.s32 %s20, 2
        // Predicated region
        $region73: #{aa_inverted_bottleneck_forward.5} parent=71 // pred_check
          %p1107 = pneg %p295
        $region74: #{aa_inverted_bottleneck_forward.5} parent=71 // pred_check_branch
          %1109 = sbr.rel (%p1107) target = $region76
        $region75: #{aa_inverted_bottleneck_forward.5} parent=71 // pred_region
          %s1110 = sand.u32 %s280, 1
          %s1111 = scalar_lea.sflag [#allocation3], %s1110
          %s1112 = sand.u32 %s280, 1
          %s1113 = smul.addr %s1112, 64
          %s1114 = scalar_lea.vmem [#allocation2], %s1113
          %1116 = dma.done %s1111, 1024
        $region76: #{aa_inverted_bottleneck_forward.5} parent=71 // pred_fallthru
          _
      $region72: #{aa_inverted_bottleneck_forward.5} parent=5 // pred_fallthru
        _
    $region6: #{aa_inverted_bottleneck_forward.5} parent=1 // loop_footer
      %s24 = sadd.s32 1, %s20
    $region7: #{aa_inverted_bottleneck_forward.5} parent=1 // loop_footer_branch
      %19 = sbr.rel target = $region3
    $region8: #{aa_inverted_bottleneck_forward.5} parent=1 // loop_exit
      _
    %1117 = vsyncpa [#allocation3], 1
    %s1118 = scalar_lea.sflag [#allocation3], 1
    %1119 = vsyncpa %s1118, 1

</llo_original>
